<compile_context>
chip_gen: v7x
topology: tpu7x:2x2x1
jax: 0.10.0
libtpu: 0.0.40
codegen_flags: <defaults>
</compile_context>

<pallas_src>
import jax
import jax.numpy as jnp
from jax.experimental import pallas as pl
from jax.experimental.pallas import tpu as pltpu

KSIZE = 7
PAD = KSIZE // 2


def _round_up(v, m):
    return (v + m - 1) // m * m


def spatial_attention_kernel(w_ref, b_ref, x_ref, o_ref, pad_ref):
    """One grid step over a (TB, C, H, W) input block.

    w_ref  : (2*KSIZE*KSIZE,) f32 SMEM  -- conv weights, flattened OIHW
    b_ref  : (1,) f32 SMEM              -- conv bias
    x_ref  : (TB, C, H, W) VMEM
    o_ref  : (TB, 1, H, W) VMEM
    pad_ref: (TB, 2, H+2*PAD, W+2*PAD) f32 VMEM scratch (zero-padded feature)
    """
    x = x_ref[...].astype(jnp.float32)                 # (TB, C, H, W)
    TB, _, H, W = x.shape

    # Channel-wise mean and max (PyTorch dim=1).  Pure VPU work.
    avg = jnp.mean(x, axis=1)                          # (TB, H, W)
    mx = jnp.max(x, axis=1)                            # (TB, H, W)

    # Zero-padded feature lives in VMEM scratch: clear, then write interior.
    pad_ref[...] = jnp.zeros_like(pad_ref)
    pad_ref[:, 0, PAD:PAD + H, PAD:PAD + W] = avg
    pad_ref[:, 1, PAD:PAD + H, PAD:PAD + W] = mx

    # 7x7 conv (2 in -> 1 out).  Hoist the lane (kw) shift: a single
    # lane-offset load per (channel, kw) pair; the 7 kh taps are then static
    # sublane slices of that slab.  Live values per iteration: col + acc.
    acc = jnp.full((TB, H, W), b_ref[0], dtype=jnp.float32)
    for c in range(2):
        for kw in range(KSIZE):
            col = pad_ref[:, c, :, kw:kw + W]          # (TB, H+2*PAD, W)
            for kh in range(KSIZE):
                wval = w_ref[c * KSIZE * KSIZE + kh * KSIZE + kw]
                acc = acc + wval * col[:, kh:kh + H, :]

    out = jax.nn.sigmoid(acc).astype(o_ref.dtype)
    o_ref[...] = out.reshape(o_ref.shape)


def spatial_attention(x, w, b, *, batch_block=None):
    """x: (B, C, H, W); w: (1, 2, 7, 7); b: (1,) -> (B, 1, H, W) (x.dtype)."""
    B, C, H, W = x.shape
    in_item = jnp.dtype(x.dtype).itemsize
    out_dtype = x.dtype
    out_item = jnp.dtype(out_dtype).itemsize

    # Size TB (batch elements per grid step) from an explicit VMEM budget so
    # the double-buffered input/output blocks plus the padded scratch fit
    # comfortably on every generation (v7x: 64 MiB VMEM per TensorCore).
    lane, sub = 128, 8
    per_b = (
        2 * C * _round_up(H, sub) * _round_up(W, lane) * in_item            # input x2 bufs
        + 2 * _round_up(H, sub) * _round_up(W, lane) * out_item             # output x2 bufs
        + 2 * _round_up(H + 2 * PAD, sub) * _round_up(W + 2 * PAD, lane) * 4  # scratch
    )
    budget = 12 * 1024 * 1024
    if batch_block is None:
        batch_block = max(1, min(B, budget // max(per_b, 1)))
    tb = int(batch_block)
    while B % tb:            # keep blocks full (avoid partial last block)
        tb -= 1
    grid = (pl.cdiv(B, tb),)

    w_flat = w.reshape(-1).astype(jnp.float32)          # (2*7*7,) SMEM scalars
    b_flat = b.reshape(-1).astype(jnp.float32)          # (1,) SMEM scalar

    cost = pl.CostEstimate(
        flops=int(B * H * W * (2 * C + 2 * KSIZE * KSIZE)),
        transcendentals=int(B * H * W),
        bytes_accessed=int(B * C * H * W * in_item + B * H * W * out_item),
    )

    return pl.pallas_call(
        spatial_attention_kernel,
        out_shape=jax.ShapeDtypeStruct((B, 1, H, W), out_dtype),
        grid=grid,
        in_specs=[
            pl.BlockSpec(memory_space=pltpu.MemorySpace.SMEM),   # conv weights
            pl.BlockSpec(memory_space=pltpu.MemorySpace.SMEM),   # conv bias
            pl.BlockSpec((tb, C, H, W), lambda i: (i, 0, 0, 0)),
        ],
        out_specs=pl.BlockSpec((tb, 1, H, W), lambda i: (i, 0, 0, 0)),
        scratch_shapes=[
            pltpu.VMEM((tb, 2, H + 2 * PAD, W + 2 * PAD), jnp.float32),
        ],
        compiler_params=pltpu.CompilerParams(
            dimension_semantics=("parallel",),   # batch axis has no carried state
            vmem_limit_bytes=32 * 1024 * 1024,
        ),
        cost_estimate=cost,
    )(w_flat, b_flat, x)


def spatial_attention_ref(x, w, b):
    avg = jnp.mean(x, axis=1, keepdims=True)
    mx = jnp.max(x, axis=1, keepdims=True)
    feat = jnp.concatenate([avg, mx], axis=1)
    y = jax.lax.conv_general_dilated(
        feat, w, window_strides=(1, 1), padding=[(PAD, PAD), (PAD, PAD)],
        dimension_numbers=("NCHW", "OIHW", "NCHW"))
    return jax.nn.sigmoid(y + b.reshape(1, 1, 1, 1))


if __name__ == "__main__":
    key = jax.random.PRNGKey(0)
    kx, kw, kb = jax.random.split(key, 3)

    B, C, H, W = 2, 4, 16, 16
    x = jax.random.normal(kx, (B, C, H, W), jnp.float32)

    # Deterministic Conv2d(2, 1, 7) params (kaiming-uniform-like bounds).
    fan_in = 2 * KSIZE * KSIZE
    bound = 1.0 / (fan_in ** 0.5)
    w = jax.random.uniform(kw, (1, 2, KSIZE, KSIZE), jnp.float32, -bound, bound)
    b = jax.random.uniform(kb, (1,), jnp.float32, -bound, bound)

    out = spatial_attention(x, w, b)
    jax.block_until_ready(out)

    ref = spatial_attention_ref(x, w, b)
    assert out.shape == (B, 1, H, W)
    assert jnp.allclose(out, ref, atol=1e-5, rtol=1e-5)

    print("KERNEL_OK")
</pallas_src>

<mosaic_0001>
module attributes {stable_mosaic.version = 11 : i64} {
  func.func @spatial_attention_kernel(%arg0: i32, %arg1: memref<98xf32, #tpu.memory_space<smem>>, %arg2: memref<1xf32, #tpu.memory_space<smem>>, %arg3: memref<2x4x16x16xf32, #tpu.memory_space<vmem>>, %arg4: memref<2x1x16x16xf32, #tpu.memory_space<vmem>>, %arg5: memref<2x2x22x22xf32, #tpu.memory_space<vmem>>) attributes {dimension_semantics = [#tpu.dimension_semantics<parallel>], iteration_bounds = array<i64: 1>, scalar_prefetch = 0 : i64, scratch_operands = 1 : i64, tpu.core_type = #tpu.core_type<tc>, window_params = [{transform_indices = @transform_0, window_bounds = array<i64: 98>}, {transform_indices = @transform_1, window_bounds = array<i64: 1>}, {transform_indices = @transform_2, window_bounds = array<i64: 2, 4, 16, 16>}, {transform_indices = @transform_3, window_bounds = array<i64: 2, 1, 16, 16>}]} {
    %c0 = arith.constant 0 : index
    %c0_0 = arith.constant 0 : index
    %c0_1 = arith.constant 0 : index
    %c0_2 = arith.constant 0 : index
    %0 = vector.load %arg3[%c0, %c0_0, %c0_1, %c0_2] : memref<2x4x16x16xf32, #tpu.memory_space<vmem>>, vector<2x4x16x16xf32>
    %cst = arith.constant dense<0.000000e+00> : vector<2x16x16xf32>
    %1 = vector.multi_reduction <add>, %0, %cst [1] : vector<2x4x16x16xf32> to vector<2x16x16xf32>
    %cst_3 = arith.constant 4.000000e+00 : f32
    %2 = vector.broadcast %cst_3 : f32 to vector<2x16x16xf32>
    %3 = arith.divf %1, %2 : vector<2x16x16xf32>
    %cst_4 = arith.constant dense<0xFF800000> : vector<2x16x16xf32>
    %4 = vector.multi_reduction <maximumf>, %0, %cst_4 [1] : vector<2x4x16x16xf32> to vector<2x16x16xf32>
    %cst_5 = arith.constant 0.000000e+00 : f32
    %5 = vector.broadcast %cst_5 : f32 to vector<2x2x22x22xf32>
    %c0_6 = arith.constant 0 : index
    %c0_7 = arith.constant 0 : index
    %c0_8 = arith.constant 0 : index
    %c0_9 = arith.constant 0 : index
    %6 = vector.load %arg5[%c0_6, %c0_7, %c0_8, %c0_9] : memref<2x2x22x22xf32, #tpu.memory_space<vmem>>, vector<2x2x22x22xf32>
    tpu.vector_store %arg5[%c0_6, %c0_7, %c0_8, %c0_9], %5 {strides = array<i32>} : memref<2x2x22x22xf32, #tpu.memory_space<vmem>>, vector<2x2x22x22xf32>,
    %c0_10 = arith.constant 0 : index
    %c0_11 = arith.constant 0 : index
    %c3 = arith.constant 3 : index
    %c3_12 = arith.constant 3 : index
    %7 = vector.load %arg5[%c0_10, %c0_11, %c3, %c3_12] : memref<2x2x22x22xf32, #tpu.memory_space<vmem>>, vector<2x1x16x16xf32>
    %8 = vector.shape_cast %7 : vector<2x1x16x16xf32> to vector<2x16x16xf32>
    %9 = vector.shape_cast %3 : vector<2x16x16xf32> to vector<2x1x16x16xf32>
    tpu.vector_store %arg5[%c0_10, %c0_11, %c3, %c3_12], %9 {strides = array<i32>} : memref<2x2x22x22xf32, #tpu.memory_space<vmem>>, vector<2x1x16x16xf32>,
    %c0_13 = arith.constant 0 : index
    %c1 = arith.constant 1 : index
    %c3_14 = arith.constant 3 : index
    %c3_15 = arith.constant 3 : index
    %10 = vector.load %arg5[%c0_13, %c1, %c3_14, %c3_15] : memref<2x2x22x22xf32, #tpu.memory_space<vmem>>, vector<2x1x16x16xf32>
    %11 = vector.shape_cast %10 : vector<2x1x16x16xf32> to vector<2x16x16xf32>
    %12 = vector.shape_cast %4 : vector<2x16x16xf32> to vector<2x1x16x16xf32>
    tpu.vector_store %arg5[%c0_13, %c1, %c3_14, %c3_15], %12 {strides = array<i32>} : memref<2x2x22x22xf32, #tpu.memory_space<vmem>>, vector<2x1x16x16xf32>,
    %c0_16 = arith.constant 0 : index
    %13 = memref.load %arg2[%c0_16] : memref<1xf32, #tpu.memory_space<smem>>
    %14 = vector.broadcast %13 : f32 to vector<2x16x16xf32>
    %c0_17 = arith.constant 0 : index
    %c0_18 = arith.constant 0 : index
    %c0_19 = arith.constant 0 : index
    %c0_20 = arith.constant 0 : index
    %15 = vector.load %arg5[%c0_17, %c0_18, %c0_19, %c0_20] : memref<2x2x22x22xf32, #tpu.memory_space<vmem>>, vector<2x1x22x16xf32>
    %16 = vector.shape_cast %15 : vector<2x1x22x16xf32> to vector<2x22x16xf32>
    %c0_21 = arith.constant 0 : index
    %17 = memref.load %arg1[%c0_21] : memref<98xf32, #tpu.memory_space<smem>>
    %18 = vector.extract_strided_slice %16 {offsets = [0, 0, 0], sizes = [2, 16, 16], strides = [1, 1, 1]} : vector<2x22x16xf32> to vector<2x16x16xf32>
    %19 = vector.broadcast %17 : f32 to vector<2x16x16xf32>
    %20 = arith.mulf %19, %18 : vector<2x16x16xf32>
    %21 = arith.addf %14, %20 : vector<2x16x16xf32>
    %c7 = arith.constant 7 : index
    %22 = memref.load %arg1[%c7] : memref<98xf32, #tpu.memory_space<smem>>
    %23 = vector.extract_strided_slice %16 {offsets = [0, 1, 0], sizes = [2, 16, 16], strides = [1, 1, 1]} : vector<2x22x16xf32> to vector<2x16x16xf32>
    %24 = vector.broadcast %22 : f32 to vector<2x16x16xf32>
    %25 = arith.mulf %24, %23 : vector<2x16x16xf32>
    %26 = arith.addf %21, %25 : vector<2x16x16xf32>
    %c14 = arith.constant 14 : index
    %27 = memref.load %arg1[%c14] : memref<98xf32, #tpu.memory_space<smem>>
    %28 = vector.extract_strided_slice %16 {offsets = [0, 2, 0], sizes = [2, 16, 16], strides = [1, 1, 1]} : vector<2x22x16xf32> to vector<2x16x16xf32>
    %29 = vector.broadcast %27 : f32 to vector<2x16x16xf32>
    %30 = arith.mulf %29, %28 : vector<2x16x16xf32>
    %31 = arith.addf %26, %30 : vector<2x16x16xf32>
    %c21 = arith.constant 21 : index
    %32 = memref.load %arg1[%c21] : memref<98xf32, #tpu.memory_space<smem>>
    %33 = vector.extract_strided_slice %16 {offsets = [0, 3, 0], sizes = [2, 16, 16], strides = [1, 1, 1]} : vector<2x22x16xf32> to vector<2x16x16xf32>
    %34 = vector.broadcast %32 : f32 to vector<2x16x16xf32>
    %35 = arith.mulf %34, %33 : vector<2x16x16xf32>
    %36 = arith.addf %31, %35 : vector<2x16x16xf32>
    %c28 = arith.constant 28 : index
    %37 = memref.load %arg1[%c28] : memref<98xf32, #tpu.memory_space<smem>>
    %38 = vector.extract_strided_slice %16 {offsets = [0, 4, 0], sizes = [2, 16, 16], strides = [1, 1, 1]} : vector<2x22x16xf32> to vector<2x16x16xf32>
    %39 = vector.broadcast %37 : f32 to vector<2x16x16xf32>
    %40 = arith.mulf %39, %38 : vector<2x16x16xf32>
    %41 = arith.addf %36, %40 : vector<2x16x16xf32>
    %c35 = arith.constant 35 : index
    %42 = memref.load %arg1[%c35] : memref<98xf32, #tpu.memory_space<smem>>
    %43 = vector.extract_strided_slice %16 {offsets = [0, 5, 0], sizes = [2, 16, 16], strides = [1, 1, 1]} : vector<2x22x16xf32> to vector<2x16x16xf32>
    %44 = vector.broadcast %42 : f32 to vector<2x16x16xf32>
    %45 = arith.mulf %44, %43 : vector<2x16x16xf32>
    %46 = arith.addf %41, %45 : vector<2x16x16xf32>
    %c42 = arith.constant 42 : index
    %47 = memref.load %arg1[%c42] : memref<98xf32, #tpu.memory_space<smem>>
    %48 = vector.extract_strided_slice %16 {offsets = [0, 6, 0], sizes = [2, 16, 16], strides = [1, 1, 1]} : vector<2x22x16xf32> to vector<2x16x16xf32>
    %49 = vector.broadcast %47 : f32 to vector<2x16x16xf32>
    %50 = arith.mulf %49, %48 : vector<2x16x16xf32>
    %51 = arith.addf %46, %50 : vector<2x16x16xf32>
    %c0_22 = arith.constant 0 : index
    %c0_23 = arith.constant 0 : index
    %c0_24 = arith.constant 0 : index
    %c1_25 = arith.constant 1 : index
    %52 = vector.load %arg5[%c0_22, %c0_23, %c0_24, %c1_25] : memref<2x2x22x22xf32, #tpu.memory_space<vmem>>, vector<2x1x22x16xf32>
    %53 = vector.shape_cast %52 : vector<2x1x22x16xf32> to vector<2x22x16xf32>
    %c1_26 = arith.constant 1 : index
    %54 = memref.load %arg1[%c1_26] : memref<98xf32, #tpu.memory_space<smem>>
    %55 = vector.extract_strided_slice %53 {offsets = [0, 0, 0], sizes = [2, 16, 16], strides = [1, 1, 1]} : vector<2x22x16xf32> to vector<2x16x16xf32>
    %56 = vector.broadcast %54 : f32 to vector<2x16x16xf32>
    %57 = arith.mulf %56, %55 : vector<2x16x16xf32>
    %58 = arith.addf %51, %57 : vector<2x16x16xf32>
    %c8 = arith.constant 8 : index
    %59 = memref.load %arg1[%c8] : memref<98xf32, #tpu.memory_space<smem>>
    %60 = vector.extract_strided_slice %53 {offsets = [0, 1, 0], sizes = [2, 16, 16], strides = [1, 1, 1]} : vector<2x22x16xf32> to vector<2x16x16xf32>
    %61 = vector.broadcast %59 : f32 to vector<2x16x16xf32>
    %62 = arith.mulf %61, %60 : vector<2x16x16xf32>
    %63 = arith.addf %58, %62 : vector<2x16x16xf32>
    %c15 = arith.constant 15 : index
    %64 = memref.load %arg1[%c15] : memref<98xf32, #tpu.memory_space<smem>>
    %65 = vector.extract_strided_slice %53 {offsets = [0, 2, 0], sizes = [2, 16, 16], strides = [1, 1, 1]} : vector<2x22x16xf32> to vector<2x16x16xf32>
    %66 = vector.broadcast %64 : f32 to vector<2x16x16xf32>
    %67 = arith.mulf %66, %65 : vector<2x16x16xf32>
    %68 = arith.addf %63, %67 : vector<2x16x16xf32>
    %c22 = arith.constant 22 : index
    %69 = memref.load %arg1[%c22] : memref<98xf32, #tpu.memory_space<smem>>
    %70 = vector.extract_strided_slice %53 {offsets = [0, 3, 0], sizes = [2, 16, 16], strides = [1, 1, 1]} : vector<2x22x16xf32> to vector<2x16x16xf32>
    %71 = vector.broadcast %69 : f32 to vector<2x16x16xf32>
    %72 = arith.mulf %71, %70 : vector<2x16x16xf32>
    %73 = arith.addf %68, %72 : vector<2x16x16xf32>
    %c29 = arith.constant 29 : index
    %74 = memref.load %arg1[%c29] : memref<98xf32, #tpu.memory_space<smem>>
    %75 = vector.extract_strided_slice %53 {offsets = [0, 4, 0], sizes = [2, 16, 16], strides = [1, 1, 1]} : vector<2x22x16xf32> to vector<2x16x16xf32>
    %76 = vector.broadcast %74 : f32 to vector<2x16x16xf32>
    %77 = arith.mulf %76, %75 : vector<2x16x16xf32>
    %78 = arith.addf %73, %77 : vector<2x16x16xf32>
    %c36 = arith.constant 36 : index
    %79 = memref.load %arg1[%c36] : memref<98xf32, #tpu.memory_space<smem>>
    %80 = vector.extract_strided_slice %53 {offsets = [0, 5, 0], sizes = [2, 16, 16], strides = [1, 1, 1]} : vector<2x22x16xf32> to vector<2x16x16xf32>
    %81 = vector.broadcast %79 : f32 to vector<2x16x16xf32>
    %82 = arith.mulf %81, %80 : vector<2x16x16xf32>
    %83 = arith.addf %78, %82 : vector<2x16x16xf32>
    %c43 = arith.constant 43 : index
    %84 = memref.load %arg1[%c43] : memref<98xf32, #tpu.memory_space<smem>>
    %85 = vector.extract_strided_slice %53 {offsets = [0, 6, 0], sizes = [2, 16, 16], strides = [1, 1, 1]} : vector<2x22x16xf32> to vector<2x16x16xf32>
    %86 = vector.broadcast %84 : f32 to vector<2x16x16xf32>
    %87 = arith.mulf %86, %85 : vector<2x16x16xf32>
    %88 = arith.addf %83, %87 : vector<2x16x16xf32>
    %c0_27 = arith.constant 0 : index
    %c0_28 = arith.constant 0 : index
    %c0_29 = arith.constant 0 : index
    %c2 = arith.constant 2 : index
    %89 = vector.load %arg5[%c0_27, %c0_28, %c0_29, %c2] : memref<2x2x22x22xf32, #tpu.memory_space<vmem>>, vector<2x1x22x16xf32>
    %90 = vector.shape_cast %89 : vector<2x1x22x16xf32> to vector<2x22x16xf32>
    %c2_30 = arith.constant 2 : index
    %91 = memref.load %arg1[%c2_30] : memref<98xf32, #tpu.memory_space<smem>>
    %92 = vector.extract_strided_slice %90 {offsets = [0, 0, 0], sizes = [2, 16, 16], strides = [1, 1, 1]} : vector<2x22x16xf32> to vector<2x16x16xf32>
    %93 = vector.broadcast %91 : f32 to vector<2x16x16xf32>
    %94 = arith.mulf %93, %92 : vector<2x16x16xf32>
    %95 = arith.addf %88, %94 : vector<2x16x16xf32>
    %c9 = arith.constant 9 : index
    %96 = memref.load %arg1[%c9] : memref<98xf32, #tpu.memory_space<smem>>
    %97 = vector.extract_strided_slice %90 {offsets = [0, 1, 0], sizes = [2, 16, 16], strides = [1, 1, 1]} : vector<2x22x16xf32> to vector<2x16x16xf32>
    %98 = vector.broadcast %96 : f32 to vector<2x16x16xf32>
    %99 = arith.mulf %98, %97 : vector<2x16x16xf32>
    %100 = arith.addf %95, %99 : vector<2x16x16xf32>
    %c16 = arith.constant 16 : index
    %101 = memref.load %arg1[%c16] : memref<98xf32, #tpu.memory_space<smem>>
    %102 = vector.extract_strided_slice %90 {offsets = [0, 2, 0], sizes = [2, 16, 16], strides = [1, 1, 1]} : vector<2x22x16xf32> to vector<2x16x16xf32>
    %103 = vector.broadcast %101 : f32 to vector<2x16x16xf32>
    %104 = arith.mulf %103, %102 : vector<2x16x16xf32>
    %105 = arith.addf %100, %104 : vector<2x16x16xf32>
    %c23 = arith.constant 23 : index
    %106 = memref.load %arg1[%c23] : memref<98xf32, #tpu.memory_space<smem>>
    %107 = vector.extract_strided_slice %90 {offsets = [0, 3, 0], sizes = [2, 16, 16], strides = [1, 1, 1]} : vector<2x22x16xf32> to vector<2x16x16xf32>
    %108 = vector.broadcast %106 : f32 to vector<2x16x16xf32>
    %109 = arith.mulf %108, %107 : vector<2x16x16xf32>
    %110 = arith.addf %105, %109 : vector<2x16x16xf32>
    %c30 = arith.constant 30 : index
    %111 = memref.load %arg1[%c30] : memref<98xf32, #tpu.memory_space<smem>>
    %112 = vector.extract_strided_slice %90 {offsets = [0, 4, 0], sizes = [2, 16, 16], strides = [1, 1, 1]} : vector<2x22x16xf32> to vector<2x16x16xf32>
    %113 = vector.broadcast %111 : f32 to vector<2x16x16xf32>
    %114 = arith.mulf %113, %112 : vector<2x16x16xf32>
    %115 = arith.addf %110, %114 : vector<2x16x16xf32>
    %c37 = arith.constant 37 : index
    %116 = memref.load %arg1[%c37] : memref<98xf32, #tpu.memory_space<smem>>
    %117 = vector.extract_strided_slice %90 {offsets = [0, 5, 0], sizes = [2, 16, 16], strides = [1, 1, 1]} : vector<2x22x16xf32> to vector<2x16x16xf32>
    %118 = vector.broadcast %116 : f32 to vector<2x16x16xf32>
    %119 = arith.mulf %118, %117 : vector<2x16x16xf32>
    %120 = arith.addf %115, %119 : vector<2x16x16xf32>
    %c44 = arith.constant 44 : index
    %121 = memref.load %arg1[%c44] : memref<98xf32, #tpu.memory_space<smem>>
    %122 = vector.extract_strided_slice %90 {offsets = [0, 6, 0], sizes = [2, 16, 16], strides = [1, 1, 1]} : vector<2x22x16xf32> to vector<2x16x16xf32>
    %123 = vector.broadcast %121 : f32 to vector<2x16x16xf32>
    %124 = arith.mulf %123, %122 : vector<2x16x16xf32>
    %125 = arith.addf %120, %124 : vector<2x16x16xf32>
    %c0_31 = arith.constant 0 : index
    %c0_32 = arith.constant 0 : index
    %c0_33 = arith.constant 0 : index
    %c3_34 = arith.constant 3 : index
    %126 = vector.load %arg5[%c0_31, %c0_32, %c0_33, %c3_34] : memref<2x2x22x22xf32, #tpu.memory_space<vmem>>, vector<2x1x22x16xf32>
    %127 = vector.shape_cast %126 : vector<2x1x22x16xf32> to vector<2x22x16xf32>
    %c3_35 = arith.constant 3 : index
    %128 = memref.load %arg1[%c3_35] : memref<98xf32, #tpu.memory_space<smem>>
    %129 = vector.extract_strided_slice %127 {offsets = [0, 0, 0], sizes = [2, 16, 16], strides = [1, 1, 1]} : vector<2x22x16xf32> to vector<2x16x16xf32>
    %130 = vector.broadcast %128 : f32 to vector<2x16x16xf32>
    %131 = arith.mulf %130, %129 : vector<2x16x16xf32>
    %132 = arith.addf %125, %131 : vector<2x16x16xf32>
    %c10 = arith.constant 10 : index
    %133 = memref.load %arg1[%c10] : memref<98xf32, #tpu.memory_space<smem>>
    %134 = vector.extract_strided_slice %127 {offsets = [0, 1, 0], sizes = [2, 16, 16], strides = [1, 1, 1]} : vector<2x22x16xf32> to vector<2x16x16xf32>
    %135 = vector.broadcast %133 : f32 to vector<2x16x16xf32>
    %136 = arith.mulf %135, %134 : vector<2x16x16xf32>
    %137 = arith.addf %132, %136 : vector<2x16x16xf32>
    %c17 = arith.constant 17 : index
    %138 = memref.load %arg1[%c17] : memref<98xf32, #tpu.memory_space<smem>>
    %139 = vector.extract_strided_slice %127 {offsets = [0, 2, 0], sizes = [2, 16, 16], strides = [1, 1, 1]} : vector<2x22x16xf32> to vector<2x16x16xf32>
    %140 = vector.broadcast %138 : f32 to vector<2x16x16xf32>
    %141 = arith.mulf %140, %139 : vector<2x16x16xf32>
    %142 = arith.addf %137, %141 : vector<2x16x16xf32>
    %c24 = arith.constant 24 : index
    %143 = memref.load %arg1[%c24] : memref<98xf32, #tpu.memory_space<smem>>
    %144 = vector.extract_strided_slice %127 {offsets = [0, 3, 0], sizes = [2, 16, 16], strides = [1, 1, 1]} : vector<2x22x16xf32> to vector<2x16x16xf32>
    %145 = vector.broadcast %143 : f32 to vector<2x16x16xf32>
    %146 = arith.mulf %145, %144 : vector<2x16x16xf32>
    %147 = arith.addf %142, %146 : vector<2x16x16xf32>
    %c31 = arith.constant 31 : index
    %148 = memref.load %arg1[%c31] : memref<98xf32, #tpu.memory_space<smem>>
    %149 = vector.extract_strided_slice %127 {offsets = [0, 4, 0], sizes = [2, 16, 16], strides = [1, 1, 1]} : vector<2x22x16xf32> to vector<2x16x16xf32>
    %150 = vector.broadcast %148 : f32 to vector<2x16x16xf32>
    %151 = arith.mulf %150, %149 : vector<2x16x16xf32>
    %152 = arith.addf %147, %151 : vector<2x16x16xf32>
    %c38 = arith.constant 38 : index
    %153 = memref.load %arg1[%c38] : memref<98xf32, #tpu.memory_space<smem>>
    %154 = vector.extract_strided_slice %127 {offsets = [0, 5, 0], sizes = [2, 16, 16], strides = [1, 1, 1]} : vector<2x22x16xf32> to vector<2x16x16xf32>
    %155 = vector.broadcast %153 : f32 to vector<2x16x16xf32>
    %156 = arith.mulf %155, %154 : vector<2x16x16xf32>
    %157 = arith.addf %152, %156 : vector<2x16x16xf32>
    %c45 = arith.constant 45 : index
    %158 = memref.load %arg1[%c45] : memref<98xf32, #tpu.memory_space<smem>>
    %159 = vector.extract_strided_slice %127 {offsets = [0, 6, 0], sizes = [2, 16, 16], strides = [1, 1, 1]} : vector<2x22x16xf32> to vector<2x16x16xf32>
    %160 = vector.broadcast %158 : f32 to vector<2x16x16xf32>
    %161 = arith.mulf %160, %159 : vector<2x16x16xf32>
    %162 = arith.addf %157, %161 : vector<2x16x16xf32>
    %c0_36 = arith.constant 0 : index
    %c0_37 = arith.constant 0 : index
    %c0_38 = arith.constant 0 : index
    %c4 = arith.constant 4 : index
    %163 = vector.load %arg5[%c0_36, %c0_37, %c0_38, %c4] : memref<2x2x22x22xf32, #tpu.memory_space<vmem>>, vector<2x1x22x16xf32>
    %164 = vector.shape_cast %163 : vector<2x1x22x16xf32> to vector<2x22x16xf32>
    %c4_39 = arith.constant 4 : index
    %165 = memref.load %arg1[%c4_39] : memref<98xf32, #tpu.memory_space<smem>>
    %166 = vector.extract_strided_slice %164 {offsets = [0, 0, 0], sizes = [2, 16, 16], strides = [1, 1, 1]} : vector<2x22x16xf32> to vector<2x16x16xf32>
    %167 = vector.broadcast %165 : f32 to vector<2x16x16xf32>
    %168 = arith.mulf %167, %166 : vector<2x16x16xf32>
    %169 = arith.addf %162, %168 : vector<2x16x16xf32>
    %c11 = arith.constant 11 : index
    %170 = memref.load %arg1[%c11] : memref<98xf32, #tpu.memory_space<smem>>
    %171 = vector.extract_strided_slice %164 {offsets = [0, 1, 0], sizes = [2, 16, 16], strides = [1, 1, 1]} : vector<2x22x16xf32> to vector<2x16x16xf32>
    %172 = vector.broadcast %170 : f32 to vector<2x16x16xf32>
    %173 = arith.mulf %172, %171 : vector<2x16x16xf32>
    %174 = arith.addf %169, %173 : vector<2x16x16xf32>
    %c18 = arith.constant 18 : index
    %175 = memref.load %arg1[%c18] : memref<98xf32, #tpu.memory_space<smem>>
    %176 = vector.extract_strided_slice %164 {offsets = [0, 2, 0], sizes = [2, 16, 16], strides = [1, 1, 1]} : vector<2x22x16xf32> to vector<2x16x16xf32>
    %177 = vector.broadcast %175 : f32 to vector<2x16x16xf32>
    %178 = arith.mulf %177, %176 : vector<2x16x16xf32>
    %179 = arith.addf %174, %178 : vector<2x16x16xf32>
    %c25 = arith.constant 25 : index
    %180 = memref.load %arg1[%c25] : memref<98xf32, #tpu.memory_space<smem>>
    %181 = vector.extract_strided_slice %164 {offsets = [0, 3, 0], sizes = [2, 16, 16], strides = [1, 1, 1]} : vector<2x22x16xf32> to vector<2x16x16xf32>
    %182 = vector.broadcast %180 : f32 to vector<2x16x16xf32>
    %183 = arith.mulf %182, %181 : vector<2x16x16xf32>
    %184 = arith.addf %179, %183 : vector<2x16x16xf32>
    %c32 = arith.constant 32 : index
    %185 = memref.load %arg1[%c32] : memref<98xf32, #tpu.memory_space<smem>>
    %186 = vector.extract_strided_slice %164 {offsets = [0, 4, 0], sizes = [2, 16, 16], strides = [1, 1, 1]} : vector<2x22x16xf32> to vector<2x16x16xf32>
    %187 = vector.broadcast %185 : f32 to vector<2x16x16xf32>
    %188 = arith.mulf %187, %186 : vector<2x16x16xf32>
    %189 = arith.addf %184, %188 : vector<2x16x16xf32>
    %c39 = arith.constant 39 : index
    %190 = memref.load %arg1[%c39] : memref<98xf32, #tpu.memory_space<smem>>
    %191 = vector.extract_strided_slice %164 {offsets = [0, 5, 0], sizes = [2, 16, 16], strides = [1, 1, 1]} : vector<2x22x16xf32> to vector<2x16x16xf32>
    %192 = vector.broadcast %190 : f32 to vector<2x16x16xf32>
    %193 = arith.mulf %192, %191 : vector<2x16x16xf32>
    %194 = arith.addf %189, %193 : vector<2x16x16xf32>
    %c46 = arith.constant 46 : index
    %195 = memref.load %arg1[%c46] : memref<98xf32, #tpu.memory_space<smem>>
    %196 = vector.extract_strided_slice %164 {offsets = [0, 6, 0], sizes = [2, 16, 16], strides = [1, 1, 1]} : vector<2x22x16xf32> to vector<2x16x16xf32>
    %197 = vector.broadcast %195 : f32 to vector<2x16x16xf32>
    %198 = arith.mulf %197, %196 : vector<2x16x16xf32>
    %199 = arith.addf %194, %198 : vector<2x16x16xf32>
    %c0_40 = arith.constant 0 : index
    %c0_41 = arith.constant 0 : index
    %c0_42 = arith.constant 0 : index
    %c5 = arith.constant 5 : index
    %200 = vector.load %arg5[%c0_40, %c0_41, %c0_42, %c5] : memref<2x2x22x22xf32, #tpu.memory_space<vmem>>, vector<2x1x22x16xf32>
    %201 = vector.shape_cast %200 : vector<2x1x22x16xf32> to vector<2x22x16xf32>
    %c5_43 = arith.constant 5 : index
    %202 = memref.load %arg1[%c5_43] : memref<98xf32, #tpu.memory_space<smem>>
    %203 = vector.extract_strided_slice %201 {offsets = [0, 0, 0], sizes = [2, 16, 16], strides = [1, 1, 1]} : vector<2x22x16xf32> to vector<2x16x16xf32>
    %204 = vector.broadcast %202 : f32 to vector<2x16x16xf32>
    %205 = arith.mulf %204, %203 : vector<2x16x16xf32>
    %206 = arith.addf %199, %205 : vector<2x16x16xf32>
    %c12 = arith.constant 12 : index
    %207 = memref.load %arg1[%c12] : memref<98xf32, #tpu.memory_space<smem>>
    %208 = vector.extract_strided_slice %201 {offsets = [0, 1, 0], sizes = [2, 16, 16], strides = [1, 1, 1]} : vector<2x22x16xf32> to vector<2x16x16xf32>
    %209 = vector.broadcast %207 : f32 to vector<2x16x16xf32>
    %210 = arith.mulf %209, %208 : vector<2x16x16xf32>
    %211 = arith.addf %206, %210 : vector<2x16x16xf32>
    %c19 = arith.constant 19 : index
    %212 = memref.load %arg1[%c19] : memref<98xf32, #tpu.memory_space<smem>>
    %213 = vector.extract_strided_slice %201 {offsets = [0, 2, 0], sizes = [2, 16, 16], strides = [1, 1, 1]} : vector<2x22x16xf32> to vector<2x16x16xf32>
    %214 = vector.broadcast %212 : f32 to vector<2x16x16xf32>
    %215 = arith.mulf %214, %213 : vector<2x16x16xf32>
    %216 = arith.addf %211, %215 : vector<2x16x16xf32>
    %c26 = arith.constant 26 : index
    %217 = memref.load %arg1[%c26] : memref<98xf32, #tpu.memory_space<smem>>
    %218 = vector.extract_strided_slice %201 {offsets = [0, 3, 0], sizes = [2, 16, 16], strides = [1, 1, 1]} : vector<2x22x16xf32> to vector<2x16x16xf32>
    %219 = vector.broadcast %217 : f32 to vector<2x16x16xf32>
    %220 = arith.mulf %219, %218 : vector<2x16x16xf32>
    %221 = arith.addf %216, %220 : vector<2x16x16xf32>
    %c33 = arith.constant 33 : index
    %222 = memref.load %arg1[%c33] : memref<98xf32, #tpu.memory_space<smem>>
    %223 = vector.extract_strided_slice %201 {offsets = [0, 4, 0], sizes = [2, 16, 16], strides = [1, 1, 1]} : vector<2x22x16xf32> to vector<2x16x16xf32>
    %224 = vector.broadcast %222 : f32 to vector<2x16x16xf32>
    %225 = arith.mulf %224, %223 : vector<2x16x16xf32>
    %226 = arith.addf %221, %225 : vector<2x16x16xf32>
    %c40 = arith.constant 40 : index
    %227 = memref.load %arg1[%c40] : memref<98xf32, #tpu.memory_space<smem>>
    %228 = vector.extract_strided_slice %201 {offsets = [0, 5, 0], sizes = [2, 16, 16], strides = [1, 1, 1]} : vector<2x22x16xf32> to vector<2x16x16xf32>
    %229 = vector.broadcast %227 : f32 to vector<2x16x16xf32>
    %230 = arith.mulf %229, %228 : vector<2x16x16xf32>
    %231 = arith.addf %226, %230 : vector<2x16x16xf32>
    %c47 = arith.constant 47 : index
    %232 = memref.load %arg1[%c47] : memref<98xf32, #tpu.memory_space<smem>>
    %233 = vector.extract_strided_slice %201 {offsets = [0, 6, 0], sizes = [2, 16, 16], strides = [1, 1, 1]} : vector<2x22x16xf32> to vector<2x16x16xf32>
    %234 = vector.broadcast %232 : f32 to vector<2x16x16xf32>
    %235 = arith.mulf %234, %233 : vector<2x16x16xf32>
    %236 = arith.addf %231, %235 : vector<2x16x16xf32>
    %c0_44 = arith.constant 0 : index
    %c0_45 = arith.constant 0 : index
    %c0_46 = arith.constant 0 : index
    %c6 = arith.constant 6 : index
    %237 = vector.load %arg5[%c0_44, %c0_45, %c0_46, %c6] : memref<2x2x22x22xf32, #tpu.memory_space<vmem>>, vector<2x1x22x16xf32>
    %238 = vector.shape_cast %237 : vector<2x1x22x16xf32> to vector<2x22x16xf32>
    %c6_47 = arith.constant 6 : index
    %239 = memref.load %arg1[%c6_47] : memref<98xf32, #tpu.memory_space<smem>>
    %240 = vector.extract_strided_slice %238 {offsets = [0, 0, 0], sizes = [2, 16, 16], strides = [1, 1, 1]} : vector<2x22x16xf32> to vector<2x16x16xf32>
    %241 = vector.broadcast %239 : f32 to vector<2x16x16xf32>
    %242 = arith.mulf %241, %240 : vector<2x16x16xf32>
    %243 = arith.addf %236, %242 : vector<2x16x16xf32>
    %c13 = arith.constant 13 : index
    %244 = memref.load %arg1[%c13] : memref<98xf32, #tpu.memory_space<smem>>
    %245 = vector.extract_strided_slice %238 {offsets = [0, 1, 0], sizes = [2, 16, 16], strides = [1, 1, 1]} : vector<2x22x16xf32> to vector<2x16x16xf32>
    %246 = vector.broadcast %244 : f32 to vector<2x16x16xf32>
    %247 = arith.mulf %246, %245 : vector<2x16x16xf32>
    %248 = arith.addf %243, %247 : vector<2x16x16xf32>
    %c20 = arith.constant 20 : index
    %249 = memref.load %arg1[%c20] : memref<98xf32, #tpu.memory_space<smem>>
    %250 = vector.extract_strided_slice %238 {offsets = [0, 2, 0], sizes = [2, 16, 16], strides = [1, 1, 1]} : vector<2x22x16xf32> to vector<2x16x16xf32>
    %251 = vector.broadcast %249 : f32 to vector<2x16x16xf32>
    %252 = arith.mulf %251, %250 : vector<2x16x16xf32>
    %253 = arith.addf %248, %252 : vector<2x16x16xf32>
    %c27 = arith.constant 27 : index
    %254 = memref.load %arg1[%c27] : memref<98xf32, #tpu.memory_space<smem>>
    %255 = vector.extract_strided_slice %238 {offsets = [0, 3, 0], sizes = [2, 16, 16], strides = [1, 1, 1]} : vector<2x22x16xf32> to vector<2x16x16xf32>
    %256 = vector.broadcast %254 : f32 to vector<2x16x16xf32>
    %257 = arith.mulf %256, %255 : vector<2x16x16xf32>
    %258 = arith.addf %253, %257 : vector<2x16x16xf32>
    %c34 = arith.constant 34 : index
    %259 = memref.load %arg1[%c34] : memref<98xf32, #tpu.memory_space<smem>>
    %260 = vector.extract_strided_slice %238 {offsets = [0, 4, 0], sizes = [2, 16, 16], strides = [1, 1, 1]} : vector<2x22x16xf32> to vector<2x16x16xf32>
    %261 = vector.broadcast %259 : f32 to vector<2x16x16xf32>
    %262 = arith.mulf %261, %260 : vector<2x16x16xf32>
    %263 = arith.addf %258, %262 : vector<2x16x16xf32>
    %c41 = arith.constant 41 : index
    %264 = memref.load %arg1[%c41] : memref<98xf32, #tpu.memory_space<smem>>
    %265 = vector.extract_strided_slice %238 {offsets = [0, 5, 0], sizes = [2, 16, 16], strides = [1, 1, 1]} : vector<2x22x16xf32> to vector<2x16x16xf32>
    %266 = vector.broadcast %264 : f32 to vector<2x16x16xf32>
    %267 = arith.mulf %266, %265 : vector<2x16x16xf32>
    %268 = arith.addf %263, %267 : vector<2x16x16xf32>
    %c48 = arith.constant 48 : index
    %269 = memref.load %arg1[%c48] : memref<98xf32, #tpu.memory_space<smem>>
    %270 = vector.extract_strided_slice %238 {offsets = [0, 6, 0], sizes = [2, 16, 16], strides = [1, 1, 1]} : vector<2x22x16xf32> to vector<2x16x16xf32>
    %271 = vector.broadcast %269 : f32 to vector<2x16x16xf32>
    %272 = arith.mulf %271, %270 : vector<2x16x16xf32>
    %273 = arith.addf %268, %272 : vector<2x16x16xf32>
    %c0_48 = arith.constant 0 : index
    %c1_49 = arith.constant 1 : index
    %c0_50 = arith.constant 0 : index
    %c0_51 = arith.constant 0 : index
    %274 = vector.load %arg5[%c0_48, %c1_49, %c0_50, %c0_51] : memref<2x2x22x22xf32, #tpu.memory_space<vmem>>, vector<2x1x22x16xf32>
    %275 = vector.shape_cast %274 : vector<2x1x22x16xf32> to vector<2x22x16xf32>
    %c49 = arith.constant 49 : index
    %276 = memref.load %arg1[%c49] : memref<98xf32, #tpu.memory_space<smem>>
    %277 = vector.extract_strided_slice %275 {offsets = [0, 0, 0], sizes = [2, 16, 16], strides = [1, 1, 1]} : vector<2x22x16xf32> to vector<2x16x16xf32>
    %278 = vector.broadcast %276 : f32 to vector<2x16x16xf32>
    %279 = arith.mulf %278, %277 : vector<2x16x16xf32>
    %280 = arith.addf %273, %279 : vector<2x16x16xf32>
    %c56 = arith.constant 56 : index
    %281 = memref.load %arg1[%c56] : memref<98xf32, #tpu.memory_space<smem>>
    %282 = vector.extract_strided_slice %275 {offsets = [0, 1, 0], sizes = [2, 16, 16], strides = [1, 1, 1]} : vector<2x22x16xf32> to vector<2x16x16xf32>
    %283 = vector.broadcast %281 : f32 to vector<2x16x16xf32>
    %284 = arith.mulf %283, %282 : vector<2x16x16xf32>
    %285 = arith.addf %280, %284 : vector<2x16x16xf32>
    %c63 = arith.constant 63 : index
    %286 = memref.load %arg1[%c63] : memref<98xf32, #tpu.memory_space<smem>>
    %287 = vector.extract_strided_slice %275 {offsets = [0, 2, 0], sizes = [2, 16, 16], strides = [1, 1, 1]} : vector<2x22x16xf32> to vector<2x16x16xf32>
    %288 = vector.broadcast %286 : f32 to vector<2x16x16xf32>
    %289 = arith.mulf %288, %287 : vector<2x16x16xf32>
    %290 = arith.addf %285, %289 : vector<2x16x16xf32>
    %c70 = arith.constant 70 : index
    %291 = memref.load %arg1[%c70] : memref<98xf32, #tpu.memory_space<smem>>
    %292 = vector.extract_strided_slice %275 {offsets = [0, 3, 0], sizes = [2, 16, 16], strides = [1, 1, 1]} : vector<2x22x16xf32> to vector<2x16x16xf32>
    %293 = vector.broadcast %291 : f32 to vector<2x16x16xf32>
    %294 = arith.mulf %293, %292 : vector<2x16x16xf32>
    %295 = arith.addf %290, %294 : vector<2x16x16xf32>
    %c77 = arith.constant 77 : index
    %296 = memref.load %arg1[%c77] : memref<98xf32, #tpu.memory_space<smem>>
    %297 = vector.extract_strided_slice %275 {offsets = [0, 4, 0], sizes = [2, 16, 16], strides = [1, 1, 1]} : vector<2x22x16xf32> to vector<2x16x16xf32>
    %298 = vector.broadcast %296 : f32 to vector<2x16x16xf32>
    %299 = arith.mulf %298, %297 : vector<2x16x16xf32>
    %300 = arith.addf %295, %299 : vector<2x16x16xf32>
    %c84 = arith.constant 84 : index
    %301 = memref.load %arg1[%c84] : memref<98xf32, #tpu.memory_space<smem>>
    %302 = vector.extract_strided_slice %275 {offsets = [0, 5, 0], sizes = [2, 16, 16], strides = [1, 1, 1]} : vector<2x22x16xf32> to vector<2x16x16xf32>
    %303 = vector.broadcast %301 : f32 to vector<2x16x16xf32>
    %304 = arith.mulf %303, %302 : vector<2x16x16xf32>
    %305 = arith.addf %300, %304 : vector<2x16x16xf32>
    %c91 = arith.constant 91 : index
    %306 = memref.load %arg1[%c91] : memref<98xf32, #tpu.memory_space<smem>>
    %307 = vector.extract_strided_slice %275 {offsets = [0, 6, 0], sizes = [2, 16, 16], strides = [1, 1, 1]} : vector<2x22x16xf32> to vector<2x16x16xf32>
    %308 = vector.broadcast %306 : f32 to vector<2x16x16xf32>
    %309 = arith.mulf %308, %307 : vector<2x16x16xf32>
    %310 = arith.addf %305, %309 : vector<2x16x16xf32>
    %c0_52 = arith.constant 0 : index
    %c1_53 = arith.constant 1 : index
    %c0_54 = arith.constant 0 : index
    %c1_55 = arith.constant 1 : index
    %311 = vector.load %arg5[%c0_52, %c1_53, %c0_54, %c1_55] : memref<2x2x22x22xf32, #tpu.memory_space<vmem>>, vector<2x1x22x16xf32>
    %312 = vector.shape_cast %311 : vector<2x1x22x16xf32> to vector<2x22x16xf32>
    %c50 = arith.constant 50 : index
    %313 = memref.load %arg1[%c50] : memref<98xf32, #tpu.memory_space<smem>>
    %314 = vector.extract_strided_slice %312 {offsets = [0, 0, 0], sizes = [2, 16, 16], strides = [1, 1, 1]} : vector<2x22x16xf32> to vector<2x16x16xf32>
    %315 = vector.broadcast %313 : f32 to vector<2x16x16xf32>
    %316 = arith.mulf %315, %314 : vector<2x16x16xf32>
    %317 = arith.addf %310, %316 : vector<2x16x16xf32>
    %c57 = arith.constant 57 : index
    %318 = memref.load %arg1[%c57] : memref<98xf32, #tpu.memory_space<smem>>
    %319 = vector.extract_strided_slice %312 {offsets = [0, 1, 0], sizes = [2, 16, 16], strides = [1, 1, 1]} : vector<2x22x16xf32> to vector<2x16x16xf32>
    %320 = vector.broadcast %318 : f32 to vector<2x16x16xf32>
    %321 = arith.mulf %320, %319 : vector<2x16x16xf32>
    %322 = arith.addf %317, %321 : vector<2x16x16xf32>
    %c64 = arith.constant 64 : index
    %323 = memref.load %arg1[%c64] : memref<98xf32, #tpu.memory_space<smem>>
    %324 = vector.extract_strided_slice %312 {offsets = [0, 2, 0], sizes = [2, 16, 16], strides = [1, 1, 1]} : vector<2x22x16xf32> to vector<2x16x16xf32>
    %325 = vector.broadcast %323 : f32 to vector<2x16x16xf32>
    %326 = arith.mulf %325, %324 : vector<2x16x16xf32>
    %327 = arith.addf %322, %326 : vector<2x16x16xf32>
    %c71 = arith.constant 71 : index
    %328 = memref.load %arg1[%c71] : memref<98xf32, #tpu.memory_space<smem>>
    %329 = vector.extract_strided_slice %312 {offsets = [0, 3, 0], sizes = [2, 16, 16], strides = [1, 1, 1]} : vector<2x22x16xf32> to vector<2x16x16xf32>
    %330 = vector.broadcast %328 : f32 to vector<2x16x16xf32>
    %331 = arith.mulf %330, %329 : vector<2x16x16xf32>
    %332 = arith.addf %327, %331 : vector<2x16x16xf32>
    %c78 = arith.constant 78 : index
    %333 = memref.load %arg1[%c78] : memref<98xf32, #tpu.memory_space<smem>>
    %334 = vector.extract_strided_slice %312 {offsets = [0, 4, 0], sizes = [2, 16, 16], strides = [1, 1, 1]} : vector<2x22x16xf32> to vector<2x16x16xf32>
    %335 = vector.broadcast %333 : f32 to vector<2x16x16xf32>
    %336 = arith.mulf %335, %334 : vector<2x16x16xf32>
    %337 = arith.addf %332, %336 : vector<2x16x16xf32>
    %c85 = arith.constant 85 : index
    %338 = memref.load %arg1[%c85] : memref<98xf32, #tpu.memory_space<smem>>
    %339 = vector.extract_strided_slice %312 {offsets = [0, 5, 0], sizes = [2, 16, 16], strides = [1, 1, 1]} : vector<2x22x16xf32> to vector<2x16x16xf32>
    %340 = vector.broadcast %338 : f32 to vector<2x16x16xf32>
    %341 = arith.mulf %340, %339 : vector<2x16x16xf32>
    %342 = arith.addf %337, %341 : vector<2x16x16xf32>
    %c92 = arith.constant 92 : index
    %343 = memref.load %arg1[%c92] : memref<98xf32, #tpu.memory_space<smem>>
    %344 = vector.extract_strided_slice %312 {offsets = [0, 6, 0], sizes = [2, 16, 16], strides = [1, 1, 1]} : vector<2x22x16xf32> to vector<2x16x16xf32>
    %345 = vector.broadcast %343 : f32 to vector<2x16x16xf32>
    %346 = arith.mulf %345, %344 : vector<2x16x16xf32>
    %347 = arith.addf %342, %346 : vector<2x16x16xf32>
    %c0_56 = arith.constant 0 : index
    %c1_57 = arith.constant 1 : index
    %c0_58 = arith.constant 0 : index
    %c2_59 = arith.constant 2 : index
    %348 = vector.load %arg5[%c0_56, %c1_57, %c0_58, %c2_59] : memref<2x2x22x22xf32, #tpu.memory_space<vmem>>, vector<2x1x22x16xf32>
    %349 = vector.shape_cast %348 : vector<2x1x22x16xf32> to vector<2x22x16xf32>
    %c51 = arith.constant 51 : index
    %350 = memref.load %arg1[%c51] : memref<98xf32, #tpu.memory_space<smem>>
    %351 = vector.extract_strided_slice %349 {offsets = [0, 0, 0], sizes = [2, 16, 16], strides = [1, 1, 1]} : vector<2x22x16xf32> to vector<2x16x16xf32>
    %352 = vector.broadcast %350 : f32 to vector<2x16x16xf32>
    %353 = arith.mulf %352, %351 : vector<2x16x16xf32>
    %354 = arith.addf %347, %353 : vector<2x16x16xf32>
    %c58 = arith.constant 58 : index
    %355 = memref.load %arg1[%c58] : memref<98xf32, #tpu.memory_space<smem>>
    %356 = vector.extract_strided_slice %349 {offsets = [0, 1, 0], sizes = [2, 16, 16], strides = [1, 1, 1]} : vector<2x22x16xf32> to vector<2x16x16xf32>
    %357 = vector.broadcast %355 : f32 to vector<2x16x16xf32>
    %358 = arith.mulf %357, %356 : vector<2x16x16xf32>
    %359 = arith.addf %354, %358 : vector<2x16x16xf32>
    %c65 = arith.constant 65 : index
    %360 = memref.load %arg1[%c65] : memref<98xf32, #tpu.memory_space<smem>>
    %361 = vector.extract_strided_slice %349 {offsets = [0, 2, 0], sizes = [2, 16, 16], strides = [1, 1, 1]} : vector<2x22x16xf32> to vector<2x16x16xf32>
    %362 = vector.broadcast %360 : f32 to vector<2x16x16xf32>
    %363 = arith.mulf %362, %361 : vector<2x16x16xf32>
    %364 = arith.addf %359, %363 : vector<2x16x16xf32>
    %c72 = arith.constant 72 : index
    %365 = memref.load %arg1[%c72] : memref<98xf32, #tpu.memory_space<smem>>
    %366 = vector.extract_strided_slice %349 {offsets = [0, 3, 0], sizes = [2, 16, 16], strides = [1, 1, 1]} : vector<2x22x16xf32> to vector<2x16x16xf32>
    %367 = vector.broadcast %365 : f32 to vector<2x16x16xf32>
    %368 = arith.mulf %367, %366 : vector<2x16x16xf32>
    %369 = arith.addf %364, %368 : vector<2x16x16xf32>
    %c79 = arith.constant 79 : index
    %370 = memref.load %arg1[%c79] : memref<98xf32, #tpu.memory_space<smem>>
    %371 = vector.extract_strided_slice %349 {offsets = [0, 4, 0], sizes = [2, 16, 16], strides = [1, 1, 1]} : vector<2x22x16xf32> to vector<2x16x16xf32>
    %372 = vector.broadcast %370 : f32 to vector<2x16x16xf32>
    %373 = arith.mulf %372, %371 : vector<2x16x16xf32>
    %374 = arith.addf %369, %373 : vector<2x16x16xf32>
    %c86 = arith.constant 86 : index
    %375 = memref.load %arg1[%c86] : memref<98xf32, #tpu.memory_space<smem>>
    %376 = vector.extract_strided_slice %349 {offsets = [0, 5, 0], sizes = [2, 16, 16], strides = [1, 1, 1]} : vector<2x22x16xf32> to vector<2x16x16xf32>
    %377 = vector.broadcast %375 : f32 to vector<2x16x16xf32>
    %378 = arith.mulf %377, %376 : vector<2x16x16xf32>
    %379 = arith.addf %374, %378 : vector<2x16x16xf32>
    %c93 = arith.constant 93 : index
    %380 = memref.load %arg1[%c93] : memref<98xf32, #tpu.memory_space<smem>>
    %381 = vector.extract_strided_slice %349 {offsets = [0, 6, 0], sizes = [2, 16, 16], strides = [1, 1, 1]} : vector<2x22x16xf32> to vector<2x16x16xf32>
    %382 = vector.broadcast %380 : f32 to vector<2x16x16xf32>
    %383 = arith.mulf %382, %381 : vector<2x16x16xf32>
    %384 = arith.addf %379, %383 : vector<2x16x16xf32>
    %c0_60 = arith.constant 0 : index
    %c1_61 = arith.constant 1 : index
    %c0_62 = arith.constant 0 : index
    %c3_63 = arith.constant 3 : index
    %385 = vector.load %arg5[%c0_60, %c1_61, %c0_62, %c3_63] : memref<2x2x22x22xf32, #tpu.memory_space<vmem>>, vector<2x1x22x16xf32>
    %386 = vector.shape_cast %385 : vector<2x1x22x16xf32> to vector<2x22x16xf32>
    %c52 = arith.constant 52 : index
    %387 = memref.load %arg1[%c52] : memref<98xf32, #tpu.memory_space<smem>>
    %388 = vector.extract_strided_slice %386 {offsets = [0, 0, 0], sizes = [2, 16, 16], strides = [1, 1, 1]} : vector<2x22x16xf32> to vector<2x16x16xf32>
    %389 = vector.broadcast %387 : f32 to vector<2x16x16xf32>
    %390 = arith.mulf %389, %388 : vector<2x16x16xf32>
    %391 = arith.addf %384, %390 : vector<2x16x16xf32>
    %c59 = arith.constant 59 : index
    %392 = memref.load %arg1[%c59] : memref<98xf32, #tpu.memory_space<smem>>
    %393 = vector.extract_strided_slice %386 {offsets = [0, 1, 0], sizes = [2, 16, 16], strides = [1, 1, 1]} : vector<2x22x16xf32> to vector<2x16x16xf32>
    %394 = vector.broadcast %392 : f32 to vector<2x16x16xf32>
    %395 = arith.mulf %394, %393 : vector<2x16x16xf32>
    %396 = arith.addf %391, %395 : vector<2x16x16xf32>
    %c66 = arith.constant 66 : index
    %397 = memref.load %arg1[%c66] : memref<98xf32, #tpu.memory_space<smem>>
    %398 = vector.extract_strided_slice %386 {offsets = [0, 2, 0], sizes = [2, 16, 16], strides = [1, 1, 1]} : vector<2x22x16xf32> to vector<2x16x16xf32>
    %399 = vector.broadcast %397 : f32 to vector<2x16x16xf32>
    %400 = arith.mulf %399, %398 : vector<2x16x16xf32>
    %401 = arith.addf %396, %400 : vector<2x16x16xf32>
    %c73 = arith.constant 73 : index
    %402 = memref.load %arg1[%c73] : memref<98xf32, #tpu.memory_space<smem>>
    %403 = vector.extract_strided_slice %386 {offsets = [0, 3, 0], sizes = [2, 16, 16], strides = [1, 1, 1]} : vector<2x22x16xf32> to vector<2x16x16xf32>
    %404 = vector.broadcast %402 : f32 to vector<2x16x16xf32>
    %405 = arith.mulf %404, %403 : vector<2x16x16xf32>
    %406 = arith.addf %401, %405 : vector<2x16x16xf32>
    %c80 = arith.constant 80 : index
    %407 = memref.load %arg1[%c80] : memref<98xf32, #tpu.memory_space<smem>>
    %408 = vector.extract_strided_slice %386 {offsets = [0, 4, 0], sizes = [2, 16, 16], strides = [1, 1, 1]} : vector<2x22x16xf32> to vector<2x16x16xf32>
    %409 = vector.broadcast %407 : f32 to vector<2x16x16xf32>
    %410 = arith.mulf %409, %408 : vector<2x16x16xf32>
    %411 = arith.addf %406, %410 : vector<2x16x16xf32>
    %c87 = arith.constant 87 : index
    %412 = memref.load %arg1[%c87] : memref<98xf32, #tpu.memory_space<smem>>
    %413 = vector.extract_strided_slice %386 {offsets = [0, 5, 0], sizes = [2, 16, 16], strides = [1, 1, 1]} : vector<2x22x16xf32> to vector<2x16x16xf32>
    %414 = vector.broadcast %412 : f32 to vector<2x16x16xf32>
    %415 = arith.mulf %414, %413 : vector<2x16x16xf32>
    %416 = arith.addf %411, %415 : vector<2x16x16xf32>
    %c94 = arith.constant 94 : index
    %417 = memref.load %arg1[%c94] : memref<98xf32, #tpu.memory_space<smem>>
    %418 = vector.extract_strided_slice %386 {offsets = [0, 6, 0], sizes = [2, 16, 16], strides = [1, 1, 1]} : vector<2x22x16xf32> to vector<2x16x16xf32>
    %419 = vector.broadcast %417 : f32 to vector<2x16x16xf32>
    %420 = arith.mulf %419, %418 : vector<2x16x16xf32>
    %421 = arith.addf %416, %420 : vector<2x16x16xf32>
    %c0_64 = arith.constant 0 : index
    %c1_65 = arith.constant 1 : index
    %c0_66 = arith.constant 0 : index
    %c4_67 = arith.constant 4 : index
    %422 = vector.load %arg5[%c0_64, %c1_65, %c0_66, %c4_67] : memref<2x2x22x22xf32, #tpu.memory_space<vmem>>, vector<2x1x22x16xf32>
    %423 = vector.shape_cast %422 : vector<2x1x22x16xf32> to vector<2x22x16xf32>
    %c53 = arith.constant 53 : index
    %424 = memref.load %arg1[%c53] : memref<98xf32, #tpu.memory_space<smem>>
    %425 = vector.extract_strided_slice %423 {offsets = [0, 0, 0], sizes = [2, 16, 16], strides = [1, 1, 1]} : vector<2x22x16xf32> to vector<2x16x16xf32>
    %426 = vector.broadcast %424 : f32 to vector<2x16x16xf32>
    %427 = arith.mulf %426, %425 : vector<2x16x16xf32>
    %428 = arith.addf %421, %427 : vector<2x16x16xf32>
    %c60 = arith.constant 60 : index
    %429 = memref.load %arg1[%c60] : memref<98xf32, #tpu.memory_space<smem>>
    %430 = vector.extract_strided_slice %423 {offsets = [0, 1, 0], sizes = [2, 16, 16], strides = [1, 1, 1]} : vector<2x22x16xf32> to vector<2x16x16xf32>
    %431 = vector.broadcast %429 : f32 to vector<2x16x16xf32>
    %432 = arith.mulf %431, %430 : vector<2x16x16xf32>
    %433 = arith.addf %428, %432 : vector<2x16x16xf32>
    %c67 = arith.constant 67 : index
    %434 = memref.load %arg1[%c67] : memref<98xf32, #tpu.memory_space<smem>>
    %435 = vector.extract_strided_slice %423 {offsets = [0, 2, 0], sizes = [2, 16, 16], strides = [1, 1, 1]} : vector<2x22x16xf32> to vector<2x16x16xf32>
    %436 = vector.broadcast %434 : f32 to vector<2x16x16xf32>
    %437 = arith.mulf %436, %435 : vector<2x16x16xf32>
    %438 = arith.addf %433, %437 : vector<2x16x16xf32>
    %c74 = arith.constant 74 : index
    %439 = memref.load %arg1[%c74] : memref<98xf32, #tpu.memory_space<smem>>
    %440 = vector.extract_strided_slice %423 {offsets = [0, 3, 0], sizes = [2, 16, 16], strides = [1, 1, 1]} : vector<2x22x16xf32> to vector<2x16x16xf32>
    %441 = vector.broadcast %439 : f32 to vector<2x16x16xf32>
    %442 = arith.mulf %441, %440 : vector<2x16x16xf32>
    %443 = arith.addf %438, %442 : vector<2x16x16xf32>
    %c81 = arith.constant 81 : index
    %444 = memref.load %arg1[%c81] : memref<98xf32, #tpu.memory_space<smem>>
    %445 = vector.extract_strided_slice %423 {offsets = [0, 4, 0], sizes = [2, 16, 16], strides = [1, 1, 1]} : vector<2x22x16xf32> to vector<2x16x16xf32>
    %446 = vector.broadcast %444 : f32 to vector<2x16x16xf32>
    %447 = arith.mulf %446, %445 : vector<2x16x16xf32>
    %448 = arith.addf %443, %447 : vector<2x16x16xf32>
    %c88 = arith.constant 88 : index
    %449 = memref.load %arg1[%c88] : memref<98xf32, #tpu.memory_space<smem>>
    %450 = vector.extract_strided_slice %423 {offsets = [0, 5, 0], sizes = [2, 16, 16], strides = [1, 1, 1]} : vector<2x22x16xf32> to vector<2x16x16xf32>
    %451 = vector.broadcast %449 : f32 to vector<2x16x16xf32>
    %452 = arith.mulf %451, %450 : vector<2x16x16xf32>
    %453 = arith.addf %448, %452 : vector<2x16x16xf32>
    %c95 = arith.constant 95 : index
    %454 = memref.load %arg1[%c95] : memref<98xf32, #tpu.memory_space<smem>>
    %455 = vector.extract_strided_slice %423 {offsets = [0, 6, 0], sizes = [2, 16, 16], strides = [1, 1, 1]} : vector<2x22x16xf32> to vector<2x16x16xf32>
    %456 = vector.broadcast %454 : f32 to vector<2x16x16xf32>
    %457 = arith.mulf %456, %455 : vector<2x16x16xf32>
    %458 = arith.addf %453, %457 : vector<2x16x16xf32>
    %c0_68 = arith.constant 0 : index
    %c1_69 = arith.constant 1 : index
    %c0_70 = arith.constant 0 : index
    %c5_71 = arith.constant 5 : index
    %459 = vector.load %arg5[%c0_68, %c1_69, %c0_70, %c5_71] : memref<2x2x22x22xf32, #tpu.memory_space<vmem>>, vector<2x1x22x16xf32>
    %460 = vector.shape_cast %459 : vector<2x1x22x16xf32> to vector<2x22x16xf32>
    %c54 = arith.constant 54 : index
    %461 = memref.load %arg1[%c54] : memref<98xf32, #tpu.memory_space<smem>>
    %462 = vector.extract_strided_slice %460 {offsets = [0, 0, 0], sizes = [2, 16, 16], strides = [1, 1, 1]} : vector<2x22x16xf32> to vector<2x16x16xf32>
    %463 = vector.broadcast %461 : f32 to vector<2x16x16xf32>
    %464 = arith.mulf %463, %462 : vector<2x16x16xf32>
    %465 = arith.addf %458, %464 : vector<2x16x16xf32>
    %c61 = arith.constant 61 : index
    %466 = memref.load %arg1[%c61] : memref<98xf32, #tpu.memory_space<smem>>
    %467 = vector.extract_strided_slice %460 {offsets = [0, 1, 0], sizes = [2, 16, 16], strides = [1, 1, 1]} : vector<2x22x16xf32> to vector<2x16x16xf32>
    %468 = vector.broadcast %466 : f32 to vector<2x16x16xf32>
    %469 = arith.mulf %468, %467 : vector<2x16x16xf32>
    %470 = arith.addf %465, %469 : vector<2x16x16xf32>
    %c68 = arith.constant 68 : index
    %471 = memref.load %arg1[%c68] : memref<98xf32, #tpu.memory_space<smem>>
    %472 = vector.extract_strided_slice %460 {offsets = [0, 2, 0], sizes = [2, 16, 16], strides = [1, 1, 1]} : vector<2x22x16xf32> to vector<2x16x16xf32>
    %473 = vector.broadcast %471 : f32 to vector<2x16x16xf32>
    %474 = arith.mulf %473, %472 : vector<2x16x16xf32>
    %475 = arith.addf %470, %474 : vector<2x16x16xf32>
    %c75 = arith.constant 75 : index
    %476 = memref.load %arg1[%c75] : memref<98xf32, #tpu.memory_space<smem>>
    %477 = vector.extract_strided_slice %460 {offsets = [0, 3, 0], sizes = [2, 16, 16], strides = [1, 1, 1]} : vector<2x22x16xf32> to vector<2x16x16xf32>
    %478 = vector.broadcast %476 : f32 to vector<2x16x16xf32>
    %479 = arith.mulf %478, %477 : vector<2x16x16xf32>
    %480 = arith.addf %475, %479 : vector<2x16x16xf32>
    %c82 = arith.constant 82 : index
    %481 = memref.load %arg1[%c82] : memref<98xf32, #tpu.memory_space<smem>>
    %482 = vector.extract_strided_slice %460 {offsets = [0, 4, 0], sizes = [2, 16, 16], strides = [1, 1, 1]} : vector<2x22x16xf32> to vector<2x16x16xf32>
    %483 = vector.broadcast %481 : f32 to vector<2x16x16xf32>
    %484 = arith.mulf %483, %482 : vector<2x16x16xf32>
    %485 = arith.addf %480, %484 : vector<2x16x16xf32>
    %c89 = arith.constant 89 : index
    %486 = memref.load %arg1[%c89] : memref<98xf32, #tpu.memory_space<smem>>
    %487 = vector.extract_strided_slice %460 {offsets = [0, 5, 0], sizes = [2, 16, 16], strides = [1, 1, 1]} : vector<2x22x16xf32> to vector<2x16x16xf32>
    %488 = vector.broadcast %486 : f32 to vector<2x16x16xf32>
    %489 = arith.mulf %488, %487 : vector<2x16x16xf32>
    %490 = arith.addf %485, %489 : vector<2x16x16xf32>
    %c96 = arith.constant 96 : index
    %491 = memref.load %arg1[%c96] : memref<98xf32, #tpu.memory_space<smem>>
    %492 = vector.extract_strided_slice %460 {offsets = [0, 6, 0], sizes = [2, 16, 16], strides = [1, 1, 1]} : vector<2x22x16xf32> to vector<2x16x16xf32>
    %493 = vector.broadcast %491 : f32 to vector<2x16x16xf32>
    %494 = arith.mulf %493, %492 : vector<2x16x16xf32>
    %495 = arith.addf %490, %494 : vector<2x16x16xf32>
    %c0_72 = arith.constant 0 : index
    %c1_73 = arith.constant 1 : index
    %c0_74 = arith.constant 0 : index
    %c6_75 = arith.constant 6 : index
    %496 = vector.load %arg5[%c0_72, %c1_73, %c0_74, %c6_75] : memref<2x2x22x22xf32, #tpu.memory_space<vmem>>, vector<2x1x22x16xf32>
    %497 = vector.shape_cast %496 : vector<2x1x22x16xf32> to vector<2x22x16xf32>
    %c55 = arith.constant 55 : index
    %498 = memref.load %arg1[%c55] : memref<98xf32, #tpu.memory_space<smem>>
    %499 = vector.extract_strided_slice %497 {offsets = [0, 0, 0], sizes = [2, 16, 16], strides = [1, 1, 1]} : vector<2x22x16xf32> to vector<2x16x16xf32>
    %500 = vector.broadcast %498 : f32 to vector<2x16x16xf32>
    %501 = arith.mulf %500, %499 : vector<2x16x16xf32>
    %502 = arith.addf %495, %501 : vector<2x16x16xf32>
    %c62 = arith.constant 62 : index
    %503 = memref.load %arg1[%c62] : memref<98xf32, #tpu.memory_space<smem>>
    %504 = vector.extract_strided_slice %497 {offsets = [0, 1, 0], sizes = [2, 16, 16], strides = [1, 1, 1]} : vector<2x22x16xf32> to vector<2x16x16xf32>
    %505 = vector.broadcast %503 : f32 to vector<2x16x16xf32>
    %506 = arith.mulf %505, %504 : vector<2x16x16xf32>
    %507 = arith.addf %502, %506 : vector<2x16x16xf32>
    %c69 = arith.constant 69 : index
    %508 = memref.load %arg1[%c69] : memref<98xf32, #tpu.memory_space<smem>>
    %509 = vector.extract_strided_slice %497 {offsets = [0, 2, 0], sizes = [2, 16, 16], strides = [1, 1, 1]} : vector<2x22x16xf32> to vector<2x16x16xf32>
    %510 = vector.broadcast %508 : f32 to vector<2x16x16xf32>
    %511 = arith.mulf %510, %509 : vector<2x16x16xf32>
    %512 = arith.addf %507, %511 : vector<2x16x16xf32>
    %c76 = arith.constant 76 : index
    %513 = memref.load %arg1[%c76] : memref<98xf32, #tpu.memory_space<smem>>
    %514 = vector.extract_strided_slice %497 {offsets = [0, 3, 0], sizes = [2, 16, 16], strides = [1, 1, 1]} : vector<2x22x16xf32> to vector<2x16x16xf32>
    %515 = vector.broadcast %513 : f32 to vector<2x16x16xf32>
    %516 = arith.mulf %515, %514 : vector<2x16x16xf32>
    %517 = arith.addf %512, %516 : vector<2x16x16xf32>
    %c83 = arith.constant 83 : index
    %518 = memref.load %arg1[%c83] : memref<98xf32, #tpu.memory_space<smem>>
    %519 = vector.extract_strided_slice %497 {offsets = [0, 4, 0], sizes = [2, 16, 16], strides = [1, 1, 1]} : vector<2x22x16xf32> to vector<2x16x16xf32>
    %520 = vector.broadcast %518 : f32 to vector<2x16x16xf32>
    %521 = arith.mulf %520, %519 : vector<2x16x16xf32>
    %522 = arith.addf %517, %521 : vector<2x16x16xf32>
    %c90 = arith.constant 90 : index
    %523 = memref.load %arg1[%c90] : memref<98xf32, #tpu.memory_space<smem>>
    %524 = vector.extract_strided_slice %497 {offsets = [0, 5, 0], sizes = [2, 16, 16], strides = [1, 1, 1]} : vector<2x22x16xf32> to vector<2x16x16xf32>
    %525 = vector.broadcast %523 : f32 to vector<2x16x16xf32>
    %526 = arith.mulf %525, %524 : vector<2x16x16xf32>
    %527 = arith.addf %522, %526 : vector<2x16x16xf32>
    %c97 = arith.constant 97 : index
    %528 = memref.load %arg1[%c97] : memref<98xf32, #tpu.memory_space<smem>>
    %529 = vector.extract_strided_slice %497 {offsets = [0, 6, 0], sizes = [2, 16, 16], strides = [1, 1, 1]} : vector<2x22x16xf32> to vector<2x16x16xf32>
    %530 = vector.broadcast %528 : f32 to vector<2x16x16xf32>
    %531 = arith.mulf %530, %529 : vector<2x16x16xf32>
    %532 = arith.addf %527, %531 : vector<2x16x16xf32>
    %533 = arith.negf %532 : vector<2x16x16xf32>
    %534 = math.exp %533 : vector<2x16x16xf32>
    %cst_76 = arith.constant 1.000000e+00 : f32
    %535 = vector.broadcast %cst_76 : f32 to vector<2x16x16xf32>
    %536 = arith.addf %535, %534 : vector<2x16x16xf32>
    %537 = arith.divf %535, %536 : vector<2x16x16xf32>
    %538 = vector.shape_cast %537 : vector<2x16x16xf32> to vector<2x1x16x16xf32>
    %c0_77 = arith.constant 0 : index
    %c0_78 = arith.constant 0 : index
    %c0_79 = arith.constant 0 : index
    %c0_80 = arith.constant 0 : index
    %539 = vector.load %arg4[%c0_77, %c0_78, %c0_79, %c0_80] : memref<2x1x16x16xf32, #tpu.memory_space<vmem>>, vector<2x1x16x16xf32>
    tpu.vector_store %arg4[%c0_77, %c0_78, %c0_79, %c0_80], %538 {strides = array<i32>} : memref<2x1x16x16xf32, #tpu.memory_space<vmem>>, vector<2x1x16x16xf32>,
    return
  }
  func.func @transform_0(%arg0: i32) -> i32 {
    %c0_i32 = arith.constant 0 : i32
    %c0_i32_0 = arith.constant 0 : i32
    return %c0_i32 : i32
  }
  func.func @transform_1(%arg0: i32) -> i32 {
    %c0_i32 = arith.constant 0 : i32
    %c0_i32_0 = arith.constant 0 : i32
    return %c0_i32 : i32
  }
  func.func @transform_2(%arg0: i32) -> (i32, i32, i32, i32) {
    %c0_i32 = arith.constant 0 : i32
    %c0_i32_0 = arith.constant 0 : i32
    %c0_i32_1 = arith.constant 0 : i32
    %c0_i32_2 = arith.constant 0 : i32
    return %arg0, %c0_i32, %c0_i32_0, %c0_i32_1 : i32, i32, i32, i32
  }
  func.func @transform_3(%arg0: i32) -> (i32, i32, i32, i32) {
    %c0_i32 = arith.constant 0 : i32
    %c0_i32_0 = arith.constant 0 : i32
    %c0_i32_1 = arith.constant 0 : i32
    %c0_i32_2 = arith.constant 0 : i32
    return %arg0, %c0_i32, %c0_i32_0, %c0_i32_1 : i32, i32, i32, i32
  }
}

</mosaic_0001>

<llo_original>
// kernel: tpu_custom_call.1
$region0: #{tpu_custom_call.1}
  #allocation0 [shape = 'u32[]', space=smem, size = 0x4, offset = 0x4, fixed_abs, tag = 'smem constant byte address 0x4 - core index']
  #allocation1 [shape = 'u32[144,128]{1,0:T(1,128)}', space=vmem, size = 0x12000, scoped, tag = 'internal scratch']
  #allocation2 [shape = 'f32[2,2,22,22]{3,2,1,0:T(8,128)}', space=vmem, size = 0xc000, scoped, tag = 'scratch operand']
  #allocation3 [shape = 'f32[1]{0:T(128)S(6)}', space=smem, size = 0x200, scoped, tag = 'scoped memory for tpu_custom_call.1']
  %s0 = inlined_call_operand.vmem [shape: f32[98], index: 0, kind: input, shape index: {}]
  %s1 = inlined_call_operand.<no memory space> [shape: f32[1], index: 1, kind: input, shape index: {}]
  %s2 = inlined_call_operand.hbm [shape: f32[2,4,16,16], index: 2, kind: input, shape index: {}]
  %s3 = inlined_call_operand.hbm [shape: f32[2,1,16,16], index: 3, kind: output, shape index: {}]
  %s4 = sld [smem:[#allocation0]]
  $region30: #{tpu_custom_call.1} parent=0
    _
  %s6 = ssub.s32 1, %s4
  %s7 = scalar_select 0, %s6, %s4
  %8 = sst [smem:[#allocation3]] %s1
  $region1: #{tpu_custom_call.1} parent=0
    #allocation4 [shape = 'u8[512]{0}', space=smem, size = 0x200, scoped, tag = 'input window, operand 0, single buffered']
    #allocation5 [shape = 's32[1]{0}', space=sflag, size = 0x4, scoped, tag = 'scoped memory for tpu_custom_call.1']
    #allocation6 [shape = 's32[1]{0}', space=sflag, size = 0x4, scoped, tag = 'scoped memory for tpu_custom_call.1']
    #allocation7 [shape = 's32[1]{0}', space=sflag, size = 0x4, scoped, tag = 'scoped memory for tpu_custom_call.1']
    #allocation8 [shape = 'u8[65536]{0}', space=vmem, size = 0x10000, scoped, tag = 'input window, operand 2, single buffered']
    #allocation9 [shape = 'u8[16384]{0}', space=vmem, size = 0x4000, scoped, tag = 'output window, operand 0, single buffered']
    %9 = vsyncpa [#allocation7], 0
    %10 = vsyncpa [#allocation5], 0
    %11 = vsyncpa [#allocation6], 0
    // Predicated region
    $region2: #{tpu_custom_call.1} parent=1 // pred_check
      _
    $region3: #{tpu_custom_call.1} parent=1 // pred_check_branch
      %13 = sbr.rel (0) target = $region5
    $region4: #{tpu_custom_call.1} parent=1 // pred_region
      %s15 = ssub.s32 16, 16
      %16 = vsyncadd [#allocation7], %s15
      %s18 = sshll.u32 %s0, 4
      %s19 = int_to_ptr.vmem [resolvable:$true] %s18
      %21 = dma.vmem_to_smem %s19, 16, [#allocation4], [#allocation7]
    $region5: #{tpu_custom_call.1} parent=1 // pred_fallthru
      _
    // Predicated region
    $region6: #{tpu_custom_call.1} parent=1 // pred_check
      _
    $region7: #{tpu_custom_call.1} parent=1 // pred_check_branch
      %23 = sbr.rel (0) target = $region9
    $region8: #{tpu_custom_call.1} parent=1 // pred_region
      _
    $region9: #{tpu_custom_call.1} parent=1 // pred_fallthru
      _
    // Predicated region
    $region10: #{tpu_custom_call.1} parent=1 // pred_check
      _
    $region11: #{tpu_custom_call.1} parent=1 // pred_check_branch
      %25 = sbr.rel (0) target = $region13
    $region12: #{tpu_custom_call.1} parent=1 // pred_region
      %s27 = ssub.s32 2048, 2048
      %28 = vsyncadd [#allocation5], %s27
      %s29 = sshll.u32 [#allocation8], 4
      %s30 = int_to_ptr.vmem [resolvable:$true] %s29
      %35 = dma.hbm_to_vmem [thread:$0]  %s2, 2048, %s30, [#allocation5], 128, 128, 8
    $region13: #{tpu_custom_call.1} parent=1 // pred_fallthru
      _
    // Predicated region
    $region14: #{tpu_custom_call.1} parent=1 // pred_check
      _
    $region15: #{tpu_custom_call.1} parent=1 // pred_check_branch
      %37 = sbr.rel (0) target = $region17
    $region16: #{tpu_custom_call.1} parent=1 // pred_region
      %38 = dma.done [#allocation7], 16
    $region17: #{tpu_custom_call.1} parent=1 // pred_fallthru
      _
    // Predicated region
    $region18: #{tpu_custom_call.1} parent=1 // pred_check
      _
    $region19: #{tpu_custom_call.1} parent=1 // pred_check_branch
      %40 = sbr.rel (0) target = $region21
    $region20: #{tpu_custom_call.1} parent=1 // pred_region
      %41 = dma.done [#allocation5], 2048
    $region21: #{tpu_custom_call.1} parent=1 // pred_fallthru
      _
    %42 = sfence
    %v43 = vld [vmem:[#allocation8] sm:$0xff]
    %v44 = vld [vmem:[#allocation8 + $0x8] sm:$0xff]
    %v45 = vld [vmem:[#allocation8 + $0x10] sm:$0xff]
    %v46 = vld [vmem:[#allocation8 + $0x18] sm:$0xff]
    %v47 = vld [vmem:[#allocation8 + $0x20] sm:$0xff]
    %v48 = vld [vmem:[#allocation8 + $0x28] sm:$0xff]
    %v49 = vld [vmem:[#allocation8 + $0x30] sm:$0xff]
    %v50 = vld [vmem:[#allocation8 + $0x38] sm:$0xff]
    %v51 = vld [vmem:[#allocation8 + $0x40] sm:$0xff]
    %v52 = vld [vmem:[#allocation8 + $0x48] sm:$0xff]
    %v53 = vld [vmem:[#allocation8 + $0x50] sm:$0xff]
    %v54 = vld [vmem:[#allocation8 + $0x58] sm:$0xff]
    %v55 = vld [vmem:[#allocation8 + $0x60] sm:$0xff]
    %v56 = vld [vmem:[#allocation8 + $0x68] sm:$0xff]
    %v57 = vld [vmem:[#allocation8 + $0x70] sm:$0xff]
    %v58 = vld [vmem:[#allocation8 + $0x78] sm:$0xff]
    %vm59 = vcmask 130048
    %v60 = vsel %vm59, %v43, 0.0
    %v61 = vsel %vm59, %v45, 0.0
    %v62 = vadd.f32 %v60, %v61
    %v63 = vsel %vm59, %v47, 0.0
    %v64 = vadd.f32 %v62, %v63
    %v65 = vsel %vm59, %v49, 0.0
    %v66 = vadd.f32 %v64, %v65
    %v67 = vsel %vm59, %v44, 0.0
    %v68 = vsel %vm59, %v46, 0.0
    %v69 = vadd.f32 %v67, %v68
    %v70 = vsel %vm59, %v48, 0.0
    %v71 = vadd.f32 %v69, %v70
    %v72 = vsel %vm59, %v50, 0.0
    %v73 = vadd.f32 %v71, %v72
    %v74 = vsel %vm59, %v51, 0.0
    %v75 = vsel %vm59, %v53, 0.0
    %v76 = vadd.f32 %v74, %v75
    %v77 = vsel %vm59, %v55, 0.0
    %v78 = vadd.f32 %v76, %v77
    %v79 = vsel %vm59, %v57, 0.0
    %v80 = vadd.f32 %v78, %v79
    %v81 = vsel %vm59, %v52, 0.0
    %v82 = vsel %vm59, %v54, 0.0
    %v83 = vadd.f32 %v81, %v82
    %v84 = vsel %vm59, %v56, 0.0
    %v85 = vadd.f32 %v83, %v84
    %v86 = vsel %vm59, %v58, 0.0
    %v87 = vadd.f32 %v85, %v86
    %v88 = vrcp.pop 4.0
    %v89 = vmul.f32 %v66, %v88
    %v90 = vmul.f32 %v73, %v88
    %v91 = vmul.f32 %v80, %v88
    %v92 = vmul.f32 %v87, %v88
    %v93 = vsel %vm59, %v43, -inf
    %v94 = vsel %vm59, %v45, -inf
    %v95 = vmax.f32 %v93, %v94
    %v96 = vsel %vm59, %v47, -inf
    %v97 = vmax.f32 %v95, %v96
    %v98 = vsel %vm59, %v49, -inf
    %v99 = vmax.f32 %v97, %v98
    %v100 = vsel %vm59, %v44, -inf
    %v101 = vsel %vm59, %v46, -inf
    %v102 = vmax.f32 %v100, %v101
    %v103 = vsel %vm59, %v48, -inf
    %v104 = vmax.f32 %v102, %v103
    %v105 = vsel %vm59, %v50, -inf
    %v106 = vmax.f32 %v104, %v105
    %v107 = vsel %vm59, %v51, -inf
    %v108 = vsel %vm59, %v53, -inf
    %v109 = vmax.f32 %v107, %v108
    %v110 = vsel %vm59, %v55, -inf
    %v111 = vmax.f32 %v109, %v110
    %v112 = vsel %vm59, %v57, -inf
    %v113 = vmax.f32 %v111, %v112
    %v114 = vsel %vm59, %v52, -inf
    %v115 = vsel %vm59, %v54, -inf
    %v116 = vmax.f32 %v114, %v115
    %v117 = vsel %vm59, %v56, -inf
    %v118 = vmax.f32 %v116, %v117
    %v119 = vsel %vm59, %v58, -inf
    %v120 = vmax.f32 %v118, %v119
    %vm121 = vcmask 179200
    %122 = vst.msk [vmem:[#allocation2] sm:$0xff] %vm121, 0.0
    %123 = vst.msk [vmem:[#allocation2 + $0x8] sm:$0xff] %vm121, 0.0
    %vm124 = vcmask 177152
    %125 = vst.msk [vmem:[#allocation2 + $0x10] sm:$0x3f] %vm124, 0.0
    %126 = vst.msk [vmem:[#allocation2 + $0x18] sm:$0xff] %vm121, 0.0
    %127 = vst.msk [vmem:[#allocation2 + $0x20] sm:$0xff] %vm121, 0.0
    %128 = vst.msk [vmem:[#allocation2 + $0x28] sm:$0x3f] %vm124, 0.0
    %129 = vst.msk [vmem:[#allocation2 + $0x30] sm:$0xff] %vm121, 0.0
    %130 = vst.msk [vmem:[#allocation2 + $0x38] sm:$0xff] %vm121, 0.0
    %131 = vst.msk [vmem:[#allocation2 + $0x40] sm:$0x3f] %vm124, 0.0
    %132 = vst.msk [vmem:[#allocation2 + $0x48] sm:$0xff] %vm121, 0.0
    %133 = vst.msk [vmem:[#allocation2 + $0x50] sm:$0xff] %vm121, 0.0
    %134 = vst.msk [vmem:[#allocation2 + $0x58] sm:$0x3f] %vm124, 0.0
    %139 = vrot.lane.b32.xlu0 %v89, 3
    %v140 = vpop.permute.xlu0 %139
    %141 = vrot.lane.b32.xlu0 %v90, 3
    %v142 = vpop.permute.xlu0 %141
    %143 = vrot.lane.b32.xlu0 %v91, 3
    %v144 = vpop.permute.xlu0 %143
    %145 = vrot.lane.b32.xlu0 %v92, 3
    %v146 = vpop.permute.xlu0 %145
    %vm151 = vcmask 154648
    %152 = vst.msk [vmem:[#allocation2 + $0x3] sm:$0xff] %vm151, %v140
    %153 = vst.msk [vmem:[#allocation2 + $0xb] sm:$0xff] %vm151, %v142
    %154 = vst.msk [vmem:[#allocation2 + $0x33] sm:$0xff] %vm151, %v144
    %155 = vst.msk [vmem:[#allocation2 + $0x3b] sm:$0xff] %vm151, %v146
    %160 = vrot.lane.b32.xlu0 %v99, 3
    %v161 = vpop.permute.xlu0 %160
    %162 = vrot.lane.b32.xlu0 %v106, 3
    %v163 = vpop.permute.xlu0 %162
    %164 = vrot.lane.b32.xlu0 %v113, 3
    %v165 = vpop.permute.xlu0 %164
    %166 = vrot.lane.b32.xlu0 %v120, 3
    %v167 = vpop.permute.xlu0 %166
    %s172 = scalar_lea.vmem [#allocation2], 24
    %173 = vst.msk [vmem:[%s172 + $0x3] sm:$0xff] %vm151, %v161
    %174 = vst.msk [vmem:[%s172 + $0xb] sm:$0xff] %vm151, %v163
    %175 = vst.msk [vmem:[%s172 + $0x33] sm:$0xff] %vm151, %v165
    %176 = vst.msk [vmem:[%s172 + $0x3b] sm:$0xff] %vm151, %v167
    %s177 = sld [smem:[#allocation3]]
    %v178 = vstv %s177
    %v179 = vld [vmem:[#allocation2] sm:$0xff]
    %v180 = vld [vmem:[#allocation2 + $0x8] sm:$0xff]
    %v181 = vld [vmem:[#allocation2 + $0x10] sm:$0x3f]
    %v182 = vld [vmem:[#allocation2 + $0x30] sm:$0xff]
    %v183 = vld [vmem:[#allocation2 + $0x38] sm:$0xff]
    %v184 = vld [vmem:[#allocation2 + $0x40] sm:$0x3f]
    %s185 = sld [smem:[#allocation4]]
    %v186 = vstv %s185
    %v187 = vmul.f32 %v186, %v179
    %v188 = vmul.f32 %v186, %v180
    %v189 = vmul.f32 %v186, %v182
    %v190 = vmul.f32 %v186, %v183
    %v191 = vadd.f32 %v178, %v187
    %v192 = vadd.f32 %v178, %v188
    %v193 = vadd.f32 %v178, %v189
    %v194 = vadd.f32 %v178, %v190
    %s195 = sld [smem:[#allocation4 + $0x7]]
    %v196 = vstv %s195
    %v197 = vmul.f32 %v196, %v179
    %v198 = vmul.f32 %v196, %v180
    %v199 = vmul.f32 %v196, %v181
    %v200 = vmul.f32 %v196, %v182
    %v201 = vmul.f32 %v196, %v183
    %v202 = vmul.f32 %v196, %v184
    %vm209 = vcmask 1046528
    %v210 = vrot.slane %v197, 1
    %v211 = vrot.slane %v198, 1
    %v212 = vsel %vm209, %v210, %v211
    %v213 = vrot.slane %v199, 1
    %v214 = vsel %vm209, %v211, %v213
    %v215 = vrot.slane %v200, 1
    %v216 = vrot.slane %v201, 1
    %v217 = vsel %vm209, %v215, %v216
    %v218 = vrot.slane %v202, 1
    %v219 = vsel %vm209, %v216, %v218
    %v224 = vadd.f32 %v191, %v212
    %v225 = vadd.f32 %v192, %v214
    %v226 = vadd.f32 %v193, %v217
    %v227 = vadd.f32 %v194, %v219
    %s228 = sld [smem:[#allocation4 + $0xe]]
    %v229 = vstv %s228
    %v230 = vmul.f32 %v229, %v179
    %v231 = vmul.f32 %v229, %v180
    %v232 = vmul.f32 %v229, %v181
    %v233 = vmul.f32 %v229, %v182
    %v234 = vmul.f32 %v229, %v183
    %v235 = vmul.f32 %v229, %v184
    %vm242 = vcmask 1045504
    %v243 = vrot.slane %v230, 2
    %v244 = vrot.slane %v231, 2
    %v245 = vsel %vm242, %v243, %v244
    %v246 = vrot.slane %v232, 2
    %v247 = vsel %vm242, %v244, %v246
    %v248 = vrot.slane %v233, 2
    %v249 = vrot.slane %v234, 2
    %v250 = vsel %vm242, %v248, %v249
    %v251 = vrot.slane %v235, 2
    %v252 = vsel %vm242, %v249, %v251
    %v257 = vadd.f32 %v224, %v245
    %v258 = vadd.f32 %v225, %v247
    %v259 = vadd.f32 %v226, %v250
    %v260 = vadd.f32 %v227, %v252
    %s261 = sld [smem:[#allocation4 + $0x15]]
    %v262 = vstv %s261
    %v263 = vmul.f32 %v262, %v179
    %v264 = vmul.f32 %v262, %v180
    %v265 = vmul.f32 %v262, %v181
    %v266 = vmul.f32 %v262, %v182
    %v267 = vmul.f32 %v262, %v183
    %v268 = vmul.f32 %v262, %v184
    %vm275 = vcmask 1044480
    %v276 = vrot.slane %v263, 3
    %v277 = vrot.slane %v264, 3
    %v278 = vsel %vm275, %v276, %v277
    %v279 = vrot.slane %v265, 3
    %v280 = vsel %vm275, %v277, %v279
    %v281 = vrot.slane %v266, 3
    %v282 = vrot.slane %v267, 3
    %v283 = vsel %vm275, %v281, %v282
    %v284 = vrot.slane %v268, 3
    %v285 = vsel %vm275, %v282, %v284
    %v290 = vadd.f32 %v257, %v278
    %v291 = vadd.f32 %v258, %v280
    %v292 = vadd.f32 %v259, %v283
    %v293 = vadd.f32 %v260, %v285
    %s294 = sld [smem:[#allocation4 + $0x1c]]
    %v295 = vstv %s294
    %v296 = vmul.f32 %v295, %v179
    %v297 = vmul.f32 %v295, %v180
    %v298 = vmul.f32 %v295, %v181
    %v299 = vmul.f32 %v295, %v182
    %v300 = vmul.f32 %v295, %v183
    %v301 = vmul.f32 %v295, %v184
    %vm308 = vcmask 1043456
    %v309 = vrot.slane %v296, 4
    %v310 = vrot.slane %v297, 4
    %v311 = vsel %vm308, %v309, %v310
    %v312 = vrot.slane %v298, 4
    %v313 = vsel %vm308, %v310, %v312
    %v314 = vrot.slane %v299, 4
    %v315 = vrot.slane %v300, 4
    %v316 = vsel %vm308, %v314, %v315
    %v317 = vrot.slane %v301, 4
    %v318 = vsel %vm308, %v315, %v317
    %v323 = vadd.f32 %v290, %v311
    %v324 = vadd.f32 %v291, %v313
    %v325 = vadd.f32 %v292, %v316
    %v326 = vadd.f32 %v293, %v318
    %s327 = sld [smem:[#allocation4 + $0x23]]
    %v328 = vstv %s327
    %v329 = vmul.f32 %v328, %v179
    %v330 = vmul.f32 %v328, %v180
    %v331 = vmul.f32 %v328, %v181
    %v332 = vmul.f32 %v328, %v182
    %v333 = vmul.f32 %v328, %v183
    %v334 = vmul.f32 %v328, %v184
    %vm341 = vcmask 1042432
    %v342 = vrot.slane %v329, 5
    %v343 = vrot.slane %v330, 5
    %v344 = vsel %vm341, %v342, %v343
    %v345 = vrot.slane %v331, 5
    %v346 = vsel %vm341, %v343, %v345
    %v347 = vrot.slane %v332, 5
    %v348 = vrot.slane %v333, 5
    %v349 = vsel %vm341, %v347, %v348
    %v350 = vrot.slane %v334, 5
    %v351 = vsel %vm341, %v348, %v350
    %v356 = vadd.f32 %v323, %v344
    %v357 = vadd.f32 %v324, %v346
    %v358 = vadd.f32 %v325, %v349
    %v359 = vadd.f32 %v326, %v351
    %s360 = sld [smem:[#allocation4 + $0x2a]]
    %v361 = vstv %s360
    %v362 = vmul.f32 %v361, %v179
    %v363 = vmul.f32 %v361, %v180
    %v364 = vmul.f32 %v361, %v181
    %v365 = vmul.f32 %v361, %v182
    %v366 = vmul.f32 %v361, %v183
    %v367 = vmul.f32 %v361, %v184
    %vm374 = vcmask 1041408
    %v375 = vrot.slane %v362, 6
    %v376 = vrot.slane %v363, 6
    %v377 = vsel %vm374, %v375, %v376
    %v378 = vrot.slane %v364, 6
    %v379 = vsel %vm374, %v376, %v378
    %v380 = vrot.slane %v365, 6
    %v381 = vrot.slane %v366, 6
    %v382 = vsel %vm374, %v380, %v381
    %v383 = vrot.slane %v367, 6
    %v384 = vsel %vm374, %v381, %v383
    %v389 = vadd.f32 %v356, %v377
    %v390 = vadd.f32 %v357, %v379
    %v391 = vadd.f32 %v358, %v382
    %v392 = vadd.f32 %v359, %v384
    %s393 = sld [smem:[#allocation4 + $0x1]]
    %v394 = vstv %s393
    %v395 = vmul.f32 %v394, %v179
    %v396 = vmul.f32 %v394, %v180
    %v397 = vmul.f32 %v394, %v182
    %v398 = vmul.f32 %v394, %v183
    %403 = vrot.lane.b32.xlu0 %v395, 127
    %v404 = vpop.permute.xlu0 %403
    %405 = vrot.lane.b32.xlu0 %v396, 127
    %v406 = vpop.permute.xlu0 %405
    %407 = vrot.lane.b32.xlu0 %v397, 127
    %v408 = vpop.permute.xlu0 %407
    %409 = vrot.lane.b32.xlu0 %v398, 127
    %v410 = vpop.permute.xlu0 %409
    %v415 = vadd.f32 %v389, %v404
    %v416 = vadd.f32 %v390, %v406
    %v417 = vadd.f32 %v391, %v408
    %v418 = vadd.f32 %v392, %v410
    %s419 = sld [smem:[#allocation4 + $0x8]]
    %v420 = vstv %s419
    %v421 = vmul.f32 %v420, %v179
    %v422 = vmul.f32 %v420, %v180
    %v423 = vmul.f32 %v420, %v181
    %v424 = vmul.f32 %v420, %v182
    %v425 = vmul.f32 %v420, %v183
    %v426 = vmul.f32 %v420, %v184
    %v433 = vrot.slane %v421, 1
    %v434 = vrot.slane %v422, 1
    %v435 = vsel %vm209, %v433, %v434
    %v436 = vrot.slane %v423, 1
    %v437 = vsel %vm209, %v434, %v436
    %v438 = vrot.slane %v424, 1
    %v439 = vrot.slane %v425, 1
    %v440 = vsel %vm209, %v438, %v439
    %v441 = vrot.slane %v426, 1
    %v442 = vsel %vm209, %v439, %v441
    %443 = vrot.lane.b32.xlu0 %v435, 127
    %v444 = vpop.permute.xlu0 %443
    %445 = vrot.lane.b32.xlu0 %v437, 127
    %v446 = vpop.permute.xlu0 %445
    %447 = vrot.lane.b32.xlu0 %v440, 127
    %v448 = vpop.permute.xlu0 %447
    %449 = vrot.lane.b32.xlu0 %v442, 127
    %v450 = vpop.permute.xlu0 %449
    %v455 = vadd.f32 %v415, %v444
    %v456 = vadd.f32 %v416, %v446
    %v457 = vadd.f32 %v417, %v448
    %v458 = vadd.f32 %v418, %v450
    %s459 = sld [smem:[#allocation4 + $0xf]]
    %v460 = vstv %s459
    %v461 = vmul.f32 %v460, %v179
    %v462 = vmul.f32 %v460, %v180
    %v463 = vmul.f32 %v460, %v181
    %v464 = vmul.f32 %v460, %v182
    %v465 = vmul.f32 %v460, %v183
    %v466 = vmul.f32 %v460, %v184
    %v473 = vrot.slane %v461, 2
    %v474 = vrot.slane %v462, 2
    %v475 = vsel %vm242, %v473, %v474
    %v476 = vrot.slane %v463, 2
    %v477 = vsel %vm242, %v474, %v476
    %v478 = vrot.slane %v464, 2
    %v479 = vrot.slane %v465, 2
    %v480 = vsel %vm242, %v478, %v479
    %v481 = vrot.slane %v466, 2
    %v482 = vsel %vm242, %v479, %v481
    %483 = vrot.lane.b32.xlu0 %v475, 127
    %v484 = vpop.permute.xlu0 %483
    %485 = vrot.lane.b32.xlu0 %v477, 127
    %v486 = vpop.permute.xlu0 %485
    %487 = vrot.lane.b32.xlu0 %v480, 127
    %v488 = vpop.permute.xlu0 %487
    %489 = vrot.lane.b32.xlu0 %v482, 127
    %v490 = vpop.permute.xlu0 %489
    %v495 = vadd.f32 %v455, %v484
    %v496 = vadd.f32 %v456, %v486
    %v497 = vadd.f32 %v457, %v488
    %v498 = vadd.f32 %v458, %v490
    %s499 = sld [smem:[#allocation4 + $0x16]]
    %v500 = vstv %s499
    %v501 = vmul.f32 %v500, %v179
    %v502 = vmul.f32 %v500, %v180
    %v503 = vmul.f32 %v500, %v181
    %v504 = vmul.f32 %v500, %v182
    %v505 = vmul.f32 %v500, %v183
    %v506 = vmul.f32 %v500, %v184
    %v513 = vrot.slane %v501, 3
    %v514 = vrot.slane %v502, 3
    %v515 = vsel %vm275, %v513, %v514
    %v516 = vrot.slane %v503, 3
    %v517 = vsel %vm275, %v514, %v516
    %v518 = vrot.slane %v504, 3
    %v519 = vrot.slane %v505, 3
    %v520 = vsel %vm275, %v518, %v519
    %v521 = vrot.slane %v506, 3
    %v522 = vsel %vm275, %v519, %v521
    %523 = vrot.lane.b32.xlu0 %v515, 127
    %v524 = vpop.permute.xlu0 %523
    %525 = vrot.lane.b32.xlu0 %v517, 127
    %v526 = vpop.permute.xlu0 %525
    %527 = vrot.lane.b32.xlu0 %v520, 127
    %v528 = vpop.permute.xlu0 %527
    %529 = vrot.lane.b32.xlu0 %v522, 127
    %v530 = vpop.permute.xlu0 %529
    %v535 = vadd.f32 %v495, %v524
    %v536 = vadd.f32 %v496, %v526
    %v537 = vadd.f32 %v497, %v528
    %v538 = vadd.f32 %v498, %v530
    %s539 = sld [smem:[#allocation4 + $0x1d]]
    %v540 = vstv %s539
    %v541 = vmul.f32 %v540, %v179
    %v542 = vmul.f32 %v540, %v180
    %v543 = vmul.f32 %v540, %v181
    %v544 = vmul.f32 %v540, %v182
    %v545 = vmul.f32 %v540, %v183
    %v546 = vmul.f32 %v540, %v184
    %v553 = vrot.slane %v541, 4
    %v554 = vrot.slane %v542, 4
    %v555 = vsel %vm308, %v553, %v554
    %v556 = vrot.slane %v543, 4
    %v557 = vsel %vm308, %v554, %v556
    %v558 = vrot.slane %v544, 4
    %v559 = vrot.slane %v545, 4
    %v560 = vsel %vm308, %v558, %v559
    %v561 = vrot.slane %v546, 4
    %v562 = vsel %vm308, %v559, %v561
    %563 = vrot.lane.b32.xlu0 %v555, 127
    %v564 = vpop.permute.xlu0 %563
    %565 = vrot.lane.b32.xlu0 %v557, 127
    %v566 = vpop.permute.xlu0 %565
    %567 = vrot.lane.b32.xlu0 %v560, 127
    %v568 = vpop.permute.xlu0 %567
    %569 = vrot.lane.b32.xlu0 %v562, 127
    %v570 = vpop.permute.xlu0 %569
    %v575 = vadd.f32 %v535, %v564
    %v576 = vadd.f32 %v536, %v566
    %v577 = vadd.f32 %v537, %v568
    %v578 = vadd.f32 %v538, %v570
    %s579 = sld [smem:[#allocation4 + $0x24]]
    %v580 = vstv %s579
    %v581 = vmul.f32 %v580, %v179
    %v582 = vmul.f32 %v580, %v180
    %v583 = vmul.f32 %v580, %v181
    %v584 = vmul.f32 %v580, %v182
    %v585 = vmul.f32 %v580, %v183
    %v586 = vmul.f32 %v580, %v184
    %v593 = vrot.slane %v581, 5
    %v594 = vrot.slane %v582, 5
    %v595 = vsel %vm341, %v593, %v594
    %v596 = vrot.slane %v583, 5
    %v597 = vsel %vm341, %v594, %v596
    %v598 = vrot.slane %v584, 5
    %v599 = vrot.slane %v585, 5
    %v600 = vsel %vm341, %v598, %v599
    %v601 = vrot.slane %v586, 5
    %v602 = vsel %vm341, %v599, %v601
    %603 = vrot.lane.b32.xlu0 %v595, 127
    %v604 = vpop.permute.xlu0 %603
    %605 = vrot.lane.b32.xlu0 %v597, 127
    %v606 = vpop.permute.xlu0 %605
    %607 = vrot.lane.b32.xlu0 %v600, 127
    %v608 = vpop.permute.xlu0 %607
    %609 = vrot.lane.b32.xlu0 %v602, 127
    %v610 = vpop.permute.xlu0 %609
    %v615 = vadd.f32 %v575, %v604
    %v616 = vadd.f32 %v576, %v606
    %v617 = vadd.f32 %v577, %v608
    %v618 = vadd.f32 %v578, %v610
    %s619 = sld [smem:[#allocation4 + $0x2b]]
    %v620 = vstv %s619
    %v621 = vmul.f32 %v620, %v179
    %v622 = vmul.f32 %v620, %v180
    %v623 = vmul.f32 %v620, %v181
    %v624 = vmul.f32 %v620, %v182
    %v625 = vmul.f32 %v620, %v183
    %v626 = vmul.f32 %v620, %v184
    %v633 = vrot.slane %v621, 6
    %v634 = vrot.slane %v622, 6
    %v635 = vsel %vm374, %v633, %v634
    %v636 = vrot.slane %v623, 6
    %v637 = vsel %vm374, %v634, %v636
    %v638 = vrot.slane %v624, 6
    %v639 = vrot.slane %v625, 6
    %v640 = vsel %vm374, %v638, %v639
    %v641 = vrot.slane %v626, 6
    %v642 = vsel %vm374, %v639, %v641
    %643 = vrot.lane.b32.xlu0 %v635, 127
    %v644 = vpop.permute.xlu0 %643
    %645 = vrot.lane.b32.xlu0 %v637, 127
    %v646 = vpop.permute.xlu0 %645
    %647 = vrot.lane.b32.xlu0 %v640, 127
    %v648 = vpop.permute.xlu0 %647
    %649 = vrot.lane.b32.xlu0 %v642, 127
    %v650 = vpop.permute.xlu0 %649
    %v655 = vadd.f32 %v615, %v644
    %v656 = vadd.f32 %v616, %v646
    %v657 = vadd.f32 %v617, %v648
    %v658 = vadd.f32 %v618, %v650
    %s659 = sld [smem:[#allocation4 + $0x2]]
    %v660 = vstv %s659
    %v661 = vmul.f32 %v660, %v179
    %v662 = vmul.f32 %v660, %v180
    %v663 = vmul.f32 %v660, %v182
    %v664 = vmul.f32 %v660, %v183
    %669 = vrot.lane.b32.xlu0 %v661, 126
    %v670 = vpop.permute.xlu0 %669
    %671 = vrot.lane.b32.xlu0 %v662, 126
    %v672 = vpop.permute.xlu0 %671
    %673 = vrot.lane.b32.xlu0 %v663, 126
    %v674 = vpop.permute.xlu0 %673
    %675 = vrot.lane.b32.xlu0 %v664, 126
    %v676 = vpop.permute.xlu0 %675
    %v681 = vadd.f32 %v655, %v670
    %v682 = vadd.f32 %v656, %v672
    %v683 = vadd.f32 %v657, %v674
    %v684 = vadd.f32 %v658, %v676
    %s685 = sld [smem:[#allocation4 + $0x9]]
    %v686 = vstv %s685
    %v687 = vmul.f32 %v686, %v179
    %v688 = vmul.f32 %v686, %v180
    %v689 = vmul.f32 %v686, %v181
    %v690 = vmul.f32 %v686, %v182
    %v691 = vmul.f32 %v686, %v183
    %v692 = vmul.f32 %v686, %v184
    %v699 = vrot.slane %v687, 1
    %v700 = vrot.slane %v688, 1
    %v701 = vsel %vm209, %v699, %v700
    %v702 = vrot.slane %v689, 1
    %v703 = vsel %vm209, %v700, %v702
    %v704 = vrot.slane %v690, 1
    %v705 = vrot.slane %v691, 1
    %v706 = vsel %vm209, %v704, %v705
    %v707 = vrot.slane %v692, 1
    %v708 = vsel %vm209, %v705, %v707
    %709 = vrot.lane.b32.xlu0 %v701, 126
    %v710 = vpop.permute.xlu0 %709
    %711 = vrot.lane.b32.xlu0 %v703, 126
    %v712 = vpop.permute.xlu0 %711
    %713 = vrot.lane.b32.xlu0 %v706, 126
    %v714 = vpop.permute.xlu0 %713
    %715 = vrot.lane.b32.xlu0 %v708, 126
    %v716 = vpop.permute.xlu0 %715
    %v721 = vadd.f32 %v681, %v710
    %v722 = vadd.f32 %v682, %v712
    %v723 = vadd.f32 %v683, %v714
    %v724 = vadd.f32 %v684, %v716
    %s725 = sld [smem:[#allocation4 + $0x10]]
    %v726 = vstv %s725
    %v727 = vmul.f32 %v726, %v179
    %v728 = vmul.f32 %v726, %v180
    %v729 = vmul.f32 %v726, %v181
    %v730 = vmul.f32 %v726, %v182
    %v731 = vmul.f32 %v726, %v183
    %v732 = vmul.f32 %v726, %v184
    %v739 = vrot.slane %v727, 2
    %v740 = vrot.slane %v728, 2
    %v741 = vsel %vm242, %v739, %v740
    %v742 = vrot.slane %v729, 2
    %v743 = vsel %vm242, %v740, %v742
    %v744 = vrot.slane %v730, 2
    %v745 = vrot.slane %v731, 2
    %v746 = vsel %vm242, %v744, %v745
    %v747 = vrot.slane %v732, 2
    %v748 = vsel %vm242, %v745, %v747
    %749 = vrot.lane.b32.xlu0 %v741, 126
    %v750 = vpop.permute.xlu0 %749
    %751 = vrot.lane.b32.xlu0 %v743, 126
    %v752 = vpop.permute.xlu0 %751
    %753 = vrot.lane.b32.xlu0 %v746, 126
    %v754 = vpop.permute.xlu0 %753
    %755 = vrot.lane.b32.xlu0 %v748, 126
    %v756 = vpop.permute.xlu0 %755
    %v761 = vadd.f32 %v721, %v750
    %v762 = vadd.f32 %v722, %v752
    %v763 = vadd.f32 %v723, %v754
    %v764 = vadd.f32 %v724, %v756
    %s765 = sld [smem:[#allocation4 + $0x17]]
    %v766 = vstv %s765
    %v767 = vmul.f32 %v766, %v179
    %v768 = vmul.f32 %v766, %v180
    %v769 = vmul.f32 %v766, %v181
    %v770 = vmul.f32 %v766, %v182
    %v771 = vmul.f32 %v766, %v183
    %v772 = vmul.f32 %v766, %v184
    %v779 = vrot.slane %v767, 3
    %v780 = vrot.slane %v768, 3
    %v781 = vsel %vm275, %v779, %v780
    %v782 = vrot.slane %v769, 3
    %v783 = vsel %vm275, %v780, %v782
    %v784 = vrot.slane %v770, 3
    %v785 = vrot.slane %v771, 3
    %v786 = vsel %vm275, %v784, %v785
    %v787 = vrot.slane %v772, 3
    %v788 = vsel %vm275, %v785, %v787
    %789 = vrot.lane.b32.xlu0 %v781, 126
    %v790 = vpop.permute.xlu0 %789
    %791 = vrot.lane.b32.xlu0 %v783, 126
    %v792 = vpop.permute.xlu0 %791
    %793 = vrot.lane.b32.xlu0 %v786, 126
    %v794 = vpop.permute.xlu0 %793
    %795 = vrot.lane.b32.xlu0 %v788, 126
    %v796 = vpop.permute.xlu0 %795
    %v801 = vadd.f32 %v761, %v790
    %v802 = vadd.f32 %v762, %v792
    %v803 = vadd.f32 %v763, %v794
    %v804 = vadd.f32 %v764, %v796
    %s805 = sld [smem:[#allocation4 + $0x1e]]
    %v806 = vstv %s805
    %v807 = vmul.f32 %v806, %v179
    %v808 = vmul.f32 %v806, %v180
    %v809 = vmul.f32 %v806, %v181
    %v810 = vmul.f32 %v806, %v182
    %v811 = vmul.f32 %v806, %v183
    %v812 = vmul.f32 %v806, %v184
    %v819 = vrot.slane %v807, 4
    %v820 = vrot.slane %v808, 4
    %v821 = vsel %vm308, %v819, %v820
    %v822 = vrot.slane %v809, 4
    %v823 = vsel %vm308, %v820, %v822
    %v824 = vrot.slane %v810, 4
    %v825 = vrot.slane %v811, 4
    %v826 = vsel %vm308, %v824, %v825
    %v827 = vrot.slane %v812, 4
    %v828 = vsel %vm308, %v825, %v827
    %829 = vrot.lane.b32.xlu0 %v821, 126
    %v830 = vpop.permute.xlu0 %829
    %831 = vrot.lane.b32.xlu0 %v823, 126
    %v832 = vpop.permute.xlu0 %831
    %833 = vrot.lane.b32.xlu0 %v826, 126
    %v834 = vpop.permute.xlu0 %833
    %835 = vrot.lane.b32.xlu0 %v828, 126
    %v836 = vpop.permute.xlu0 %835
    %v841 = vadd.f32 %v801, %v830
    %v842 = vadd.f32 %v802, %v832
    %v843 = vadd.f32 %v803, %v834
    %v844 = vadd.f32 %v804, %v836
    %s845 = sld [smem:[#allocation4 + $0x25]]
    %v846 = vstv %s845
    %v847 = vmul.f32 %v846, %v179
    %v848 = vmul.f32 %v846, %v180
    %v849 = vmul.f32 %v846, %v181
    %v850 = vmul.f32 %v846, %v182
    %v851 = vmul.f32 %v846, %v183
    %v852 = vmul.f32 %v846, %v184
    %v859 = vrot.slane %v847, 5
    %v860 = vrot.slane %v848, 5
    %v861 = vsel %vm341, %v859, %v860
    %v862 = vrot.slane %v849, 5
    %v863 = vsel %vm341, %v860, %v862
    %v864 = vrot.slane %v850, 5
    %v865 = vrot.slane %v851, 5
    %v866 = vsel %vm341, %v864, %v865
    %v867 = vrot.slane %v852, 5
    %v868 = vsel %vm341, %v865, %v867
    %869 = vrot.lane.b32.xlu0 %v861, 126
    %v870 = vpop.permute.xlu0 %869
    %871 = vrot.lane.b32.xlu0 %v863, 126
    %v872 = vpop.permute.xlu0 %871
    %873 = vrot.lane.b32.xlu0 %v866, 126
    %v874 = vpop.permute.xlu0 %873
    %875 = vrot.lane.b32.xlu0 %v868, 126
    %v876 = vpop.permute.xlu0 %875
    %v881 = vadd.f32 %v841, %v870
    %v882 = vadd.f32 %v842, %v872
    %v883 = vadd.f32 %v843, %v874
    %v884 = vadd.f32 %v844, %v876
    %s885 = sld [smem:[#allocation4 + $0x2c]]
    %v886 = vstv %s885
    %v887 = vmul.f32 %v886, %v179
    %v888 = vmul.f32 %v886, %v180
    %v889 = vmul.f32 %v886, %v181
    %v890 = vmul.f32 %v886, %v182
    %v891 = vmul.f32 %v886, %v183
    %v892 = vmul.f32 %v886, %v184
    %v899 = vrot.slane %v887, 6
    %v900 = vrot.slane %v888, 6
    %v901 = vsel %vm374, %v899, %v900
    %v902 = vrot.slane %v889, 6
    %v903 = vsel %vm374, %v900, %v902
    %v904 = vrot.slane %v890, 6
    %v905 = vrot.slane %v891, 6
    %v906 = vsel %vm374, %v904, %v905
    %v907 = vrot.slane %v892, 6
    %v908 = vsel %vm374, %v905, %v907
    %909 = vrot.lane.b32.xlu0 %v901, 126
    %v910 = vpop.permute.xlu0 %909
    %911 = vrot.lane.b32.xlu0 %v903, 126
    %v912 = vpop.permute.xlu0 %911
    %913 = vrot.lane.b32.xlu0 %v906, 126
    %v914 = vpop.permute.xlu0 %913
    %915 = vrot.lane.b32.xlu0 %v908, 126
    %v916 = vpop.permute.xlu0 %915
    %v921 = vadd.f32 %v881, %v910
    %v922 = vadd.f32 %v882, %v912
    %v923 = vadd.f32 %v883, %v914
    %v924 = vadd.f32 %v884, %v916
    %s925 = sld [smem:[#allocation4 + $0x3]]
    %v926 = vstv %s925
    %v927 = vmul.f32 %v926, %v179
    %v928 = vmul.f32 %v926, %v180
    %v929 = vmul.f32 %v926, %v182
    %v930 = vmul.f32 %v926, %v183
    %935 = vrot.lane.b32.xlu0 %v927, 125
    %v936 = vpop.permute.xlu0 %935
    %937 = vrot.lane.b32.xlu0 %v928, 125
    %v938 = vpop.permute.xlu0 %937
    %939 = vrot.lane.b32.xlu0 %v929, 125
    %v940 = vpop.permute.xlu0 %939
    %941 = vrot.lane.b32.xlu0 %v930, 125
    %v942 = vpop.permute.xlu0 %941
    %v947 = vadd.f32 %v921, %v936
    %v948 = vadd.f32 %v922, %v938
    %v949 = vadd.f32 %v923, %v940
    %v950 = vadd.f32 %v924, %v942
    %s951 = sld [smem:[#allocation4 + $0xa]]
    %v952 = vstv %s951
    %v953 = vmul.f32 %v952, %v179
    %v954 = vmul.f32 %v952, %v180
    %v955 = vmul.f32 %v952, %v181
    %v956 = vmul.f32 %v952, %v182
    %v957 = vmul.f32 %v952, %v183
    %v958 = vmul.f32 %v952, %v184
    %v965 = vrot.slane %v953, 1
    %v966 = vrot.slane %v954, 1
    %v967 = vsel %vm209, %v965, %v966
    %v968 = vrot.slane %v955, 1
    %v969 = vsel %vm209, %v966, %v968
    %v970 = vrot.slane %v956, 1
    %v971 = vrot.slane %v957, 1
    %v972 = vsel %vm209, %v970, %v971
    %v973 = vrot.slane %v958, 1
    %v974 = vsel %vm209, %v971, %v973
    %975 = vrot.lane.b32.xlu0 %v967, 125
    %v976 = vpop.permute.xlu0 %975
    %977 = vrot.lane.b32.xlu0 %v969, 125
    %v978 = vpop.permute.xlu0 %977
    %979 = vrot.lane.b32.xlu0 %v972, 125
    %v980 = vpop.permute.xlu0 %979
    %981 = vrot.lane.b32.xlu0 %v974, 125
    %v982 = vpop.permute.xlu0 %981
    %v987 = vadd.f32 %v947, %v976
    %v988 = vadd.f32 %v948, %v978
    %v989 = vadd.f32 %v949, %v980
    %v990 = vadd.f32 %v950, %v982
    %s991 = sld [smem:[#allocation4 + $0x11]]
    %v992 = vstv %s991
    %v993 = vmul.f32 %v992, %v179
    %v994 = vmul.f32 %v992, %v180
    %v995 = vmul.f32 %v992, %v181
    %v996 = vmul.f32 %v992, %v182
    %v997 = vmul.f32 %v992, %v183
    %v998 = vmul.f32 %v992, %v184
    %v1005 = vrot.slane %v993, 2
    %v1006 = vrot.slane %v994, 2
    %v1007 = vsel %vm242, %v1005, %v1006
    %v1008 = vrot.slane %v995, 2
    %v1009 = vsel %vm242, %v1006, %v1008
    %v1010 = vrot.slane %v996, 2
    %v1011 = vrot.slane %v997, 2
    %v1012 = vsel %vm242, %v1010, %v1011
    %v1013 = vrot.slane %v998, 2
    %v1014 = vsel %vm242, %v1011, %v1013
    %1015 = vrot.lane.b32.xlu0 %v1007, 125
    %v1016 = vpop.permute.xlu0 %1015
    %1017 = vrot.lane.b32.xlu0 %v1009, 125
    %v1018 = vpop.permute.xlu0 %1017
    %1019 = vrot.lane.b32.xlu0 %v1012, 125
    %v1020 = vpop.permute.xlu0 %1019
    %1021 = vrot.lane.b32.xlu0 %v1014, 125
    %v1022 = vpop.permute.xlu0 %1021
    %v1027 = vadd.f32 %v987, %v1016
    %v1028 = vadd.f32 %v988, %v1018
    %v1029 = vadd.f32 %v989, %v1020
    %v1030 = vadd.f32 %v990, %v1022
    %s1031 = sld [smem:[#allocation4 + $0x18]]
    %v1032 = vstv %s1031
    %v1033 = vmul.f32 %v1032, %v179
    %v1034 = vmul.f32 %v1032, %v180
    %v1035 = vmul.f32 %v1032, %v181
    %v1036 = vmul.f32 %v1032, %v182
    %v1037 = vmul.f32 %v1032, %v183
    %v1038 = vmul.f32 %v1032, %v184
    %v1045 = vrot.slane %v1033, 3
    %v1046 = vrot.slane %v1034, 3
    %v1047 = vsel %vm275, %v1045, %v1046
    %v1048 = vrot.slane %v1035, 3
    %v1049 = vsel %vm275, %v1046, %v1048
    %v1050 = vrot.slane %v1036, 3
    %v1051 = vrot.slane %v1037, 3
    %v1052 = vsel %vm275, %v1050, %v1051
    %v1053 = vrot.slane %v1038, 3
    %v1054 = vsel %vm275, %v1051, %v1053
    %1055 = vrot.lane.b32.xlu0 %v1047, 125
    %v1056 = vpop.permute.xlu0 %1055
    %1057 = vrot.lane.b32.xlu0 %v1049, 125
    %v1058 = vpop.permute.xlu0 %1057
    %1059 = vrot.lane.b32.xlu0 %v1052, 125
    %v1060 = vpop.permute.xlu0 %1059
    %1061 = vrot.lane.b32.xlu0 %v1054, 125
    %v1062 = vpop.permute.xlu0 %1061
    %v1067 = vadd.f32 %v1027, %v1056
    %v1068 = vadd.f32 %v1028, %v1058
    %v1069 = vadd.f32 %v1029, %v1060
    %v1070 = vadd.f32 %v1030, %v1062
    %s1071 = sld [smem:[#allocation4 + $0x1f]]
    %v1072 = vstv %s1071
    %v1073 = vmul.f32 %v1072, %v179
    %v1074 = vmul.f32 %v1072, %v180
    %v1075 = vmul.f32 %v1072, %v181
    %v1076 = vmul.f32 %v1072, %v182
    %v1077 = vmul.f32 %v1072, %v183
    %v1078 = vmul.f32 %v1072, %v184
    %v1085 = vrot.slane %v1073, 4
    %v1086 = vrot.slane %v1074, 4
    %v1087 = vsel %vm308, %v1085, %v1086
    %v1088 = vrot.slane %v1075, 4
    %v1089 = vsel %vm308, %v1086, %v1088
    %v1090 = vrot.slane %v1076, 4
    %v1091 = vrot.slane %v1077, 4
    %v1092 = vsel %vm308, %v1090, %v1091
    %v1093 = vrot.slane %v1078, 4
    %v1094 = vsel %vm308, %v1091, %v1093
    %1095 = vrot.lane.b32.xlu0 %v1087, 125
    %v1096 = vpop.permute.xlu0 %1095
    %1097 = vrot.lane.b32.xlu0 %v1089, 125
    %v1098 = vpop.permute.xlu0 %1097
    %1099 = vrot.lane.b32.xlu0 %v1092, 125
    %v1100 = vpop.permute.xlu0 %1099
    %1101 = vrot.lane.b32.xlu0 %v1094, 125
    %v1102 = vpop.permute.xlu0 %1101
    %v1107 = vadd.f32 %v1067, %v1096
    %v1108 = vadd.f32 %v1068, %v1098
    %v1109 = vadd.f32 %v1069, %v1100
    %v1110 = vadd.f32 %v1070, %v1102
    %s1111 = sld [smem:[#allocation4 + $0x26]]
    %v1112 = vstv %s1111
    %v1113 = vmul.f32 %v1112, %v179
    %v1114 = vmul.f32 %v1112, %v180
    %v1115 = vmul.f32 %v1112, %v181
    %v1116 = vmul.f32 %v1112, %v182
    %v1117 = vmul.f32 %v1112, %v183
    %v1118 = vmul.f32 %v1112, %v184
    %v1125 = vrot.slane %v1113, 5
    %v1126 = vrot.slane %v1114, 5
    %v1127 = vsel %vm341, %v1125, %v1126
    %v1128 = vrot.slane %v1115, 5
    %v1129 = vsel %vm341, %v1126, %v1128
    %v1130 = vrot.slane %v1116, 5
    %v1131 = vrot.slane %v1117, 5
    %v1132 = vsel %vm341, %v1130, %v1131
    %v1133 = vrot.slane %v1118, 5
    %v1134 = vsel %vm341, %v1131, %v1133
    %1135 = vrot.lane.b32.xlu0 %v1127, 125
    %v1136 = vpop.permute.xlu0 %1135
    %1137 = vrot.lane.b32.xlu0 %v1129, 125
    %v1138 = vpop.permute.xlu0 %1137
    %1139 = vrot.lane.b32.xlu0 %v1132, 125
    %v1140 = vpop.permute.xlu0 %1139
    %1141 = vrot.lane.b32.xlu0 %v1134, 125
    %v1142 = vpop.permute.xlu0 %1141
    %v1147 = vadd.f32 %v1107, %v1136
    %v1148 = vadd.f32 %v1108, %v1138
    %v1149 = vadd.f32 %v1109, %v1140
    %v1150 = vadd.f32 %v1110, %v1142
    %s1151 = sld [smem:[#allocation4 + $0x2d]]
    %v1152 = vstv %s1151
    %v1153 = vmul.f32 %v1152, %v179
    %v1154 = vmul.f32 %v1152, %v180
    %v1155 = vmul.f32 %v1152, %v181
    %v1156 = vmul.f32 %v1152, %v182
    %v1157 = vmul.f32 %v1152, %v183
    %v1158 = vmul.f32 %v1152, %v184
    %v1165 = vrot.slane %v1153, 6
    %v1166 = vrot.slane %v1154, 6
    %v1167 = vsel %vm374, %v1165, %v1166
    %v1168 = vrot.slane %v1155, 6
    %v1169 = vsel %vm374, %v1166, %v1168
    %v1170 = vrot.slane %v1156, 6
    %v1171 = vrot.slane %v1157, 6
    %v1172 = vsel %vm374, %v1170, %v1171
    %v1173 = vrot.slane %v1158, 6
    %v1174 = vsel %vm374, %v1171, %v1173
    %1175 = vrot.lane.b32.xlu0 %v1167, 125
    %v1176 = vpop.permute.xlu0 %1175
    %1177 = vrot.lane.b32.xlu0 %v1169, 125
    %v1178 = vpop.permute.xlu0 %1177
    %1179 = vrot.lane.b32.xlu0 %v1172, 125
    %v1180 = vpop.permute.xlu0 %1179
    %1181 = vrot.lane.b32.xlu0 %v1174, 125
    %v1182 = vpop.permute.xlu0 %1181
    %v1187 = vadd.f32 %v1147, %v1176
    %v1188 = vadd.f32 %v1148, %v1178
    %v1189 = vadd.f32 %v1149, %v1180
    %v1190 = vadd.f32 %v1150, %v1182
    %s1191 = sld [smem:[#allocation4 + $0x4]]
    %v1192 = vstv %s1191
    %v1193 = vmul.f32 %v1192, %v179
    %v1194 = vmul.f32 %v1192, %v180
    %v1195 = vmul.f32 %v1192, %v182
    %v1196 = vmul.f32 %v1192, %v183
    %1201 = vrot.lane.b32.xlu0 %v1193, 124
    %v1202 = vpop.permute.xlu0 %1201
    %1203 = vrot.lane.b32.xlu0 %v1194, 124
    %v1204 = vpop.permute.xlu0 %1203
    %1205 = vrot.lane.b32.xlu0 %v1195, 124
    %v1206 = vpop.permute.xlu0 %1205
    %1207 = vrot.lane.b32.xlu0 %v1196, 124
    %v1208 = vpop.permute.xlu0 %1207
    %v1213 = vadd.f32 %v1187, %v1202
    %v1214 = vadd.f32 %v1188, %v1204
    %v1215 = vadd.f32 %v1189, %v1206
    %v1216 = vadd.f32 %v1190, %v1208
    %s1217 = sld [smem:[#allocation4 + $0xb]]
    %v1218 = vstv %s1217
    %v1219 = vmul.f32 %v1218, %v179
    %v1220 = vmul.f32 %v1218, %v180
    %v1221 = vmul.f32 %v1218, %v181
    %v1222 = vmul.f32 %v1218, %v182
    %v1223 = vmul.f32 %v1218, %v183
    %v1224 = vmul.f32 %v1218, %v184
    %v1231 = vrot.slane %v1219, 1
    %v1232 = vrot.slane %v1220, 1
    %v1233 = vsel %vm209, %v1231, %v1232
    %v1234 = vrot.slane %v1221, 1
    %v1235 = vsel %vm209, %v1232, %v1234
    %v1236 = vrot.slane %v1222, 1
    %v1237 = vrot.slane %v1223, 1
    %v1238 = vsel %vm209, %v1236, %v1237
    %v1239 = vrot.slane %v1224, 1
    %v1240 = vsel %vm209, %v1237, %v1239
    %1241 = vrot.lane.b32.xlu0 %v1233, 124
    %v1242 = vpop.permute.xlu0 %1241
    %1243 = vrot.lane.b32.xlu0 %v1235, 124
    %v1244 = vpop.permute.xlu0 %1243
    %1245 = vrot.lane.b32.xlu0 %v1238, 124
    %v1246 = vpop.permute.xlu0 %1245
    %1247 = vrot.lane.b32.xlu0 %v1240, 124
    %v1248 = vpop.permute.xlu0 %1247
    %v1253 = vadd.f32 %v1213, %v1242
    %v1254 = vadd.f32 %v1214, %v1244
    %v1255 = vadd.f32 %v1215, %v1246
    %v1256 = vadd.f32 %v1216, %v1248
    %s1257 = sld [smem:[#allocation4 + $0x12]]
    %v1258 = vstv %s1257
    %v1259 = vmul.f32 %v1258, %v179
    %v1260 = vmul.f32 %v1258, %v180
    %v1261 = vmul.f32 %v1258, %v181
    %v1262 = vmul.f32 %v1258, %v182
    %v1263 = vmul.f32 %v1258, %v183
    %v1264 = vmul.f32 %v1258, %v184
    %v1271 = vrot.slane %v1259, 2
    %v1272 = vrot.slane %v1260, 2
    %v1273 = vsel %vm242, %v1271, %v1272
    %v1274 = vrot.slane %v1261, 2
    %v1275 = vsel %vm242, %v1272, %v1274
    %v1276 = vrot.slane %v1262, 2
    %v1277 = vrot.slane %v1263, 2
    %v1278 = vsel %vm242, %v1276, %v1277
    %v1279 = vrot.slane %v1264, 2
    %v1280 = vsel %vm242, %v1277, %v1279
    %1281 = vrot.lane.b32.xlu0 %v1273, 124
    %v1282 = vpop.permute.xlu0 %1281
    %1283 = vrot.lane.b32.xlu0 %v1275, 124
    %v1284 = vpop.permute.xlu0 %1283
    %1285 = vrot.lane.b32.xlu0 %v1278, 124
    %v1286 = vpop.permute.xlu0 %1285
    %1287 = vrot.lane.b32.xlu0 %v1280, 124
    %v1288 = vpop.permute.xlu0 %1287
    %v1293 = vadd.f32 %v1253, %v1282
    %v1294 = vadd.f32 %v1254, %v1284
    %v1295 = vadd.f32 %v1255, %v1286
    %v1296 = vadd.f32 %v1256, %v1288
    %s1297 = sld [smem:[#allocation4 + $0x19]]
    %v1298 = vstv %s1297
    %v1299 = vmul.f32 %v1298, %v179
    %v1300 = vmul.f32 %v1298, %v180
    %v1301 = vmul.f32 %v1298, %v181
    %v1302 = vmul.f32 %v1298, %v182
    %v1303 = vmul.f32 %v1298, %v183
    %v1304 = vmul.f32 %v1298, %v184
    %v1311 = vrot.slane %v1299, 3
    %v1312 = vrot.slane %v1300, 3
    %v1313 = vsel %vm275, %v1311, %v1312
    %v1314 = vrot.slane %v1301, 3
    %v1315 = vsel %vm275, %v1312, %v1314
    %v1316 = vrot.slane %v1302, 3
    %v1317 = vrot.slane %v1303, 3
    %v1318 = vsel %vm275, %v1316, %v1317
    %v1319 = vrot.slane %v1304, 3
    %v1320 = vsel %vm275, %v1317, %v1319
    %1321 = vrot.lane.b32.xlu0 %v1313, 124
    %v1322 = vpop.permute.xlu0 %1321
    %1323 = vrot.lane.b32.xlu0 %v1315, 124
    %v1324 = vpop.permute.xlu0 %1323
    %1325 = vrot.lane.b32.xlu0 %v1318, 124
    %v1326 = vpop.permute.xlu0 %1325
    %1327 = vrot.lane.b32.xlu0 %v1320, 124
    %v1328 = vpop.permute.xlu0 %1327
    %v1333 = vadd.f32 %v1293, %v1322
    %v1334 = vadd.f32 %v1294, %v1324
    %v1335 = vadd.f32 %v1295, %v1326
    %v1336 = vadd.f32 %v1296, %v1328
    %s1337 = sld [smem:[#allocation4 + $0x20]]
    %v1338 = vstv %s1337
    %v1339 = vmul.f32 %v1338, %v179
    %v1340 = vmul.f32 %v1338, %v180
    %v1341 = vmul.f32 %v1338, %v181
    %v1342 = vmul.f32 %v1338, %v182
    %v1343 = vmul.f32 %v1338, %v183
    %v1344 = vmul.f32 %v1338, %v184
    %v1351 = vrot.slane %v1339, 4
    %v1352 = vrot.slane %v1340, 4
    %v1353 = vsel %vm308, %v1351, %v1352
    %v1354 = vrot.slane %v1341, 4
    %v1355 = vsel %vm308, %v1352, %v1354
    %v1356 = vrot.slane %v1342, 4
    %v1357 = vrot.slane %v1343, 4
    %v1358 = vsel %vm308, %v1356, %v1357
    %v1359 = vrot.slane %v1344, 4
    %v1360 = vsel %vm308, %v1357, %v1359
    %1361 = vrot.lane.b32.xlu0 %v1353, 124
    %v1362 = vpop.permute.xlu0 %1361
    %1363 = vrot.lane.b32.xlu0 %v1355, 124
    %v1364 = vpop.permute.xlu0 %1363
    %1365 = vrot.lane.b32.xlu0 %v1358, 124
    %v1366 = vpop.permute.xlu0 %1365
    %1367 = vrot.lane.b32.xlu0 %v1360, 124
    %v1368 = vpop.permute.xlu0 %1367
    %v1373 = vadd.f32 %v1333, %v1362
    %v1374 = vadd.f32 %v1334, %v1364
    %v1375 = vadd.f32 %v1335, %v1366
    %v1376 = vadd.f32 %v1336, %v1368
    %s1377 = sld [smem:[#allocation4 + $0x27]]
    %v1378 = vstv %s1377
    %v1379 = vmul.f32 %v1378, %v179
    %v1380 = vmul.f32 %v1378, %v180
    %v1381 = vmul.f32 %v1378, %v181
    %v1382 = vmul.f32 %v1378, %v182
    %v1383 = vmul.f32 %v1378, %v183
    %v1384 = vmul.f32 %v1378, %v184
    %v1391 = vrot.slane %v1379, 5
    %v1392 = vrot.slane %v1380, 5
    %v1393 = vsel %vm341, %v1391, %v1392
    %v1394 = vrot.slane %v1381, 5
    %v1395 = vsel %vm341, %v1392, %v1394
    %v1396 = vrot.slane %v1382, 5
    %v1397 = vrot.slane %v1383, 5
    %v1398 = vsel %vm341, %v1396, %v1397
    %v1399 = vrot.slane %v1384, 5
    %v1400 = vsel %vm341, %v1397, %v1399
    %1401 = vrot.lane.b32.xlu0 %v1393, 124
    %v1402 = vpop.permute.xlu0 %1401
    %1403 = vrot.lane.b32.xlu0 %v1395, 124
    %v1404 = vpop.permute.xlu0 %1403
    %1405 = vrot.lane.b32.xlu0 %v1398, 124
    %v1406 = vpop.permute.xlu0 %1405
    %1407 = vrot.lane.b32.xlu0 %v1400, 124
    %v1408 = vpop.permute.xlu0 %1407
    %v1413 = vadd.f32 %v1373, %v1402
    %v1414 = vadd.f32 %v1374, %v1404
    %v1415 = vadd.f32 %v1375, %v1406
    %v1416 = vadd.f32 %v1376, %v1408
    %s1417 = sld [smem:[#allocation4 + $0x2e]]
    %v1418 = vstv %s1417
    %v1419 = vmul.f32 %v1418, %v179
    %v1420 = vmul.f32 %v1418, %v180
    %v1421 = vmul.f32 %v1418, %v181
    %v1422 = vmul.f32 %v1418, %v182
    %v1423 = vmul.f32 %v1418, %v183
    %v1424 = vmul.f32 %v1418, %v184
    %v1431 = vrot.slane %v1419, 6
    %v1432 = vrot.slane %v1420, 6
    %v1433 = vsel %vm374, %v1431, %v1432
    %v1434 = vrot.slane %v1421, 6
    %v1435 = vsel %vm374, %v1432, %v1434
    %v1436 = vrot.slane %v1422, 6
    %v1437 = vrot.slane %v1423, 6
    %v1438 = vsel %vm374, %v1436, %v1437
    %v1439 = vrot.slane %v1424, 6
    %v1440 = vsel %vm374, %v1437, %v1439
    %1441 = vrot.lane.b32.xlu0 %v1433, 124
    %v1442 = vpop.permute.xlu0 %1441
    %1443 = vrot.lane.b32.xlu0 %v1435, 124
    %v1444 = vpop.permute.xlu0 %1443
    %1445 = vrot.lane.b32.xlu0 %v1438, 124
    %v1446 = vpop.permute.xlu0 %1445
    %1447 = vrot.lane.b32.xlu0 %v1440, 124
    %v1448 = vpop.permute.xlu0 %1447
    %v1453 = vadd.f32 %v1413, %v1442
    %v1454 = vadd.f32 %v1414, %v1444
    %v1455 = vadd.f32 %v1415, %v1446
    %v1456 = vadd.f32 %v1416, %v1448
    %s1457 = sld [smem:[#allocation4 + $0x5]]
    %v1458 = vstv %s1457
    %v1459 = vmul.f32 %v1458, %v179
    %v1460 = vmul.f32 %v1458, %v180
    %v1461 = vmul.f32 %v1458, %v182
    %v1462 = vmul.f32 %v1458, %v183
    %1467 = vrot.lane.b32.xlu0 %v1459, 123
    %v1468 = vpop.permute.xlu0 %1467
    %1469 = vrot.lane.b32.xlu0 %v1460, 123
    %v1470 = vpop.permute.xlu0 %1469
    %1471 = vrot.lane.b32.xlu0 %v1461, 123
    %v1472 = vpop.permute.xlu0 %1471
    %1473 = vrot.lane.b32.xlu0 %v1462, 123
    %v1474 = vpop.permute.xlu0 %1473
    %v1479 = vadd.f32 %v1453, %v1468
    %v1480 = vadd.f32 %v1454, %v1470
    %v1481 = vadd.f32 %v1455, %v1472
    %v1482 = vadd.f32 %v1456, %v1474
    %s1483 = sld [smem:[#allocation4 + $0xc]]
    %v1484 = vstv %s1483
    %v1485 = vmul.f32 %v1484, %v179
    %v1486 = vmul.f32 %v1484, %v180
    %v1487 = vmul.f32 %v1484, %v181
    %v1488 = vmul.f32 %v1484, %v182
    %v1489 = vmul.f32 %v1484, %v183
    %v1490 = vmul.f32 %v1484, %v184
    %v1497 = vrot.slane %v1485, 1
    %v1498 = vrot.slane %v1486, 1
    %v1499 = vsel %vm209, %v1497, %v1498
    %v1500 = vrot.slane %v1487, 1
    %v1501 = vsel %vm209, %v1498, %v1500
    %v1502 = vrot.slane %v1488, 1
    %v1503 = vrot.slane %v1489, 1
    %v1504 = vsel %vm209, %v1502, %v1503
    %v1505 = vrot.slane %v1490, 1
    %v1506 = vsel %vm209, %v1503, %v1505
    %1507 = vrot.lane.b32.xlu0 %v1499, 123
    %v1508 = vpop.permute.xlu0 %1507
    %1509 = vrot.lane.b32.xlu0 %v1501, 123
    %v1510 = vpop.permute.xlu0 %1509
    %1511 = vrot.lane.b32.xlu0 %v1504, 123
    %v1512 = vpop.permute.xlu0 %1511
    %1513 = vrot.lane.b32.xlu0 %v1506, 123
    %v1514 = vpop.permute.xlu0 %1513
    %v1519 = vadd.f32 %v1479, %v1508
    %v1520 = vadd.f32 %v1480, %v1510
    %v1521 = vadd.f32 %v1481, %v1512
    %v1522 = vadd.f32 %v1482, %v1514
    %s1523 = sld [smem:[#allocation4 + $0x13]]
    %v1524 = vstv %s1523
    %v1525 = vmul.f32 %v1524, %v179
    %v1526 = vmul.f32 %v1524, %v180
    %v1527 = vmul.f32 %v1524, %v181
    %v1528 = vmul.f32 %v1524, %v182
    %v1529 = vmul.f32 %v1524, %v183
    %v1530 = vmul.f32 %v1524, %v184
    %v1537 = vrot.slane %v1525, 2
    %v1538 = vrot.slane %v1526, 2
    %v1539 = vsel %vm242, %v1537, %v1538
    %v1540 = vrot.slane %v1527, 2
    %v1541 = vsel %vm242, %v1538, %v1540
    %v1542 = vrot.slane %v1528, 2
    %v1543 = vrot.slane %v1529, 2
    %v1544 = vsel %vm242, %v1542, %v1543
    %v1545 = vrot.slane %v1530, 2
    %v1546 = vsel %vm242, %v1543, %v1545
    %1547 = vrot.lane.b32.xlu0 %v1539, 123
    %v1548 = vpop.permute.xlu0 %1547
    %1549 = vrot.lane.b32.xlu0 %v1541, 123
    %v1550 = vpop.permute.xlu0 %1549
    %1551 = vrot.lane.b32.xlu0 %v1544, 123
    %v1552 = vpop.permute.xlu0 %1551
    %1553 = vrot.lane.b32.xlu0 %v1546, 123
    %v1554 = vpop.permute.xlu0 %1553
    %v1559 = vadd.f32 %v1519, %v1548
    %v1560 = vadd.f32 %v1520, %v1550
    %v1561 = vadd.f32 %v1521, %v1552
    %v1562 = vadd.f32 %v1522, %v1554
    %s1563 = sld [smem:[#allocation4 + $0x1a]]
    %v1564 = vstv %s1563
    %v1565 = vmul.f32 %v1564, %v179
    %v1566 = vmul.f32 %v1564, %v180
    %v1567 = vmul.f32 %v1564, %v181
    %v1568 = vmul.f32 %v1564, %v182
    %v1569 = vmul.f32 %v1564, %v183
    %v1570 = vmul.f32 %v1564, %v184
    %v1577 = vrot.slane %v1565, 3
    %v1578 = vrot.slane %v1566, 3
    %v1579 = vsel %vm275, %v1577, %v1578
    %v1580 = vrot.slane %v1567, 3
    %v1581 = vsel %vm275, %v1578, %v1580
    %v1582 = vrot.slane %v1568, 3
    %v1583 = vrot.slane %v1569, 3
    %v1584 = vsel %vm275, %v1582, %v1583
    %v1585 = vrot.slane %v1570, 3
    %v1586 = vsel %vm275, %v1583, %v1585
    %1587 = vrot.lane.b32.xlu0 %v1579, 123
    %v1588 = vpop.permute.xlu0 %1587
    %1589 = vrot.lane.b32.xlu0 %v1581, 123
    %v1590 = vpop.permute.xlu0 %1589
    %1591 = vrot.lane.b32.xlu0 %v1584, 123
    %v1592 = vpop.permute.xlu0 %1591
    %1593 = vrot.lane.b32.xlu0 %v1586, 123
    %v1594 = vpop.permute.xlu0 %1593
    %v1599 = vadd.f32 %v1559, %v1588
    %v1600 = vadd.f32 %v1560, %v1590
    %v1601 = vadd.f32 %v1561, %v1592
    %v1602 = vadd.f32 %v1562, %v1594
    %s1603 = sld [smem:[#allocation4 + $0x21]]
    %v1604 = vstv %s1603
    %v1605 = vmul.f32 %v1604, %v179
    %v1606 = vmul.f32 %v1604, %v180
    %v1607 = vmul.f32 %v1604, %v181
    %v1608 = vmul.f32 %v1604, %v182
    %v1609 = vmul.f32 %v1604, %v183
    %v1610 = vmul.f32 %v1604, %v184
    %v1617 = vrot.slane %v1605, 4
    %v1618 = vrot.slane %v1606, 4
    %v1619 = vsel %vm308, %v1617, %v1618
    %v1620 = vrot.slane %v1607, 4
    %v1621 = vsel %vm308, %v1618, %v1620
    %v1622 = vrot.slane %v1608, 4
    %v1623 = vrot.slane %v1609, 4
    %v1624 = vsel %vm308, %v1622, %v1623
    %v1625 = vrot.slane %v1610, 4
    %v1626 = vsel %vm308, %v1623, %v1625
    %1627 = vrot.lane.b32.xlu0 %v1619, 123
    %v1628 = vpop.permute.xlu0 %1627
    %1629 = vrot.lane.b32.xlu0 %v1621, 123
    %v1630 = vpop.permute.xlu0 %1629
    %1631 = vrot.lane.b32.xlu0 %v1624, 123
    %v1632 = vpop.permute.xlu0 %1631
    %1633 = vrot.lane.b32.xlu0 %v1626, 123
    %v1634 = vpop.permute.xlu0 %1633
    %v1639 = vadd.f32 %v1599, %v1628
    %v1640 = vadd.f32 %v1600, %v1630
    %v1641 = vadd.f32 %v1601, %v1632
    %v1642 = vadd.f32 %v1602, %v1634
    %s1643 = sld [smem:[#allocation4 + $0x28]]
    %v1644 = vstv %s1643
    %v1645 = vmul.f32 %v1644, %v179
    %v1646 = vmul.f32 %v1644, %v180
    %v1647 = vmul.f32 %v1644, %v181
    %v1648 = vmul.f32 %v1644, %v182
    %v1649 = vmul.f32 %v1644, %v183
    %v1650 = vmul.f32 %v1644, %v184
    %v1657 = vrot.slane %v1645, 5
    %v1658 = vrot.slane %v1646, 5
    %v1659 = vsel %vm341, %v1657, %v1658
    %v1660 = vrot.slane %v1647, 5
    %v1661 = vsel %vm341, %v1658, %v1660
    %v1662 = vrot.slane %v1648, 5
    %v1663 = vrot.slane %v1649, 5
    %v1664 = vsel %vm341, %v1662, %v1663
    %v1665 = vrot.slane %v1650, 5
    %v1666 = vsel %vm341, %v1663, %v1665
    %1667 = vrot.lane.b32.xlu0 %v1659, 123
    %v1668 = vpop.permute.xlu0 %1667
    %1669 = vrot.lane.b32.xlu0 %v1661, 123
    %v1670 = vpop.permute.xlu0 %1669
    %1671 = vrot.lane.b32.xlu0 %v1664, 123
    %v1672 = vpop.permute.xlu0 %1671
    %1673 = vrot.lane.b32.xlu0 %v1666, 123
    %v1674 = vpop.permute.xlu0 %1673
    %v1679 = vadd.f32 %v1639, %v1668
    %v1680 = vadd.f32 %v1640, %v1670
    %v1681 = vadd.f32 %v1641, %v1672
    %v1682 = vadd.f32 %v1642, %v1674
    %s1683 = sld [smem:[#allocation4 + $0x2f]]
    %v1684 = vstv %s1683
    %v1685 = vmul.f32 %v1684, %v179
    %v1686 = vmul.f32 %v1684, %v180
    %v1687 = vmul.f32 %v1684, %v181
    %v1688 = vmul.f32 %v1684, %v182
    %v1689 = vmul.f32 %v1684, %v183
    %v1690 = vmul.f32 %v1684, %v184
    %v1697 = vrot.slane %v1685, 6
    %v1698 = vrot.slane %v1686, 6
    %v1699 = vsel %vm374, %v1697, %v1698
    %v1700 = vrot.slane %v1687, 6
    %v1701 = vsel %vm374, %v1698, %v1700
    %v1702 = vrot.slane %v1688, 6
    %v1703 = vrot.slane %v1689, 6
    %v1704 = vsel %vm374, %v1702, %v1703
    %v1705 = vrot.slane %v1690, 6
    %v1706 = vsel %vm374, %v1703, %v1705
    %1707 = vrot.lane.b32.xlu0 %v1699, 123
    %v1708 = vpop.permute.xlu0 %1707
    %1709 = vrot.lane.b32.xlu0 %v1701, 123
    %v1710 = vpop.permute.xlu0 %1709
    %1711 = vrot.lane.b32.xlu0 %v1704, 123
    %v1712 = vpop.permute.xlu0 %1711
    %1713 = vrot.lane.b32.xlu0 %v1706, 123
    %v1714 = vpop.permute.xlu0 %1713
    %v1719 = vadd.f32 %v1679, %v1708
    %v1720 = vadd.f32 %v1680, %v1710
    %v1721 = vadd.f32 %v1681, %v1712
    %v1722 = vadd.f32 %v1682, %v1714
    %s1723 = sld [smem:[#allocation4 + $0x6]]
    %v1724 = vstv %s1723
    %v1725 = vmul.f32 %v1724, %v179
    %v1726 = vmul.f32 %v1724, %v180
    %v1727 = vmul.f32 %v1724, %v182
    %v1728 = vmul.f32 %v1724, %v183
    %1733 = vrot.lane.b32.xlu0 %v1725, 122
    %v1734 = vpop.permute.xlu0 %1733
    %1735 = vrot.lane.b32.xlu0 %v1726, 122
    %v1736 = vpop.permute.xlu0 %1735
    %1737 = vrot.lane.b32.xlu0 %v1727, 122
    %v1738 = vpop.permute.xlu0 %1737
    %1739 = vrot.lane.b32.xlu0 %v1728, 122
    %v1740 = vpop.permute.xlu0 %1739
    %v1745 = vadd.f32 %v1719, %v1734
    %v1746 = vadd.f32 %v1720, %v1736
    %v1747 = vadd.f32 %v1721, %v1738
    %v1748 = vadd.f32 %v1722, %v1740
    %s1749 = sld [smem:[#allocation4 + $0xd]]
    %v1750 = vstv %s1749
    %v1751 = vmul.f32 %v1750, %v179
    %v1752 = vmul.f32 %v1750, %v180
    %v1753 = vmul.f32 %v1750, %v181
    %v1754 = vmul.f32 %v1750, %v182
    %v1755 = vmul.f32 %v1750, %v183
    %v1756 = vmul.f32 %v1750, %v184
    %v1763 = vrot.slane %v1751, 1
    %v1764 = vrot.slane %v1752, 1
    %v1765 = vsel %vm209, %v1763, %v1764
    %v1766 = vrot.slane %v1753, 1
    %v1767 = vsel %vm209, %v1764, %v1766
    %v1768 = vrot.slane %v1754, 1
    %v1769 = vrot.slane %v1755, 1
    %v1770 = vsel %vm209, %v1768, %v1769
    %v1771 = vrot.slane %v1756, 1
    %v1772 = vsel %vm209, %v1769, %v1771
    %1773 = vrot.lane.b32.xlu0 %v1765, 122
    %v1774 = vpop.permute.xlu0 %1773
    %1775 = vrot.lane.b32.xlu0 %v1767, 122
    %v1776 = vpop.permute.xlu0 %1775
    %1777 = vrot.lane.b32.xlu0 %v1770, 122
    %v1778 = vpop.permute.xlu0 %1777
    %1779 = vrot.lane.b32.xlu0 %v1772, 122
    %v1780 = vpop.permute.xlu0 %1779
    %v1785 = vadd.f32 %v1745, %v1774
    %v1786 = vadd.f32 %v1746, %v1776
    %v1787 = vadd.f32 %v1747, %v1778
    %v1788 = vadd.f32 %v1748, %v1780
    %s1789 = sld [smem:[#allocation4 + $0x14]]
    %v1790 = vstv %s1789
    %v1791 = vmul.f32 %v1790, %v179
    %v1792 = vmul.f32 %v1790, %v180
    %v1793 = vmul.f32 %v1790, %v181
    %v1794 = vmul.f32 %v1790, %v182
    %v1795 = vmul.f32 %v1790, %v183
    %v1796 = vmul.f32 %v1790, %v184
    %v1803 = vrot.slane %v1791, 2
    %v1804 = vrot.slane %v1792, 2
    %v1805 = vsel %vm242, %v1803, %v1804
    %v1806 = vrot.slane %v1793, 2
    %v1807 = vsel %vm242, %v1804, %v1806
    %v1808 = vrot.slane %v1794, 2
    %v1809 = vrot.slane %v1795, 2
    %v1810 = vsel %vm242, %v1808, %v1809
    %v1811 = vrot.slane %v1796, 2
    %v1812 = vsel %vm242, %v1809, %v1811
    %1813 = vrot.lane.b32.xlu0 %v1805, 122
    %v1814 = vpop.permute.xlu0 %1813
    %1815 = vrot.lane.b32.xlu0 %v1807, 122
    %v1816 = vpop.permute.xlu0 %1815
    %1817 = vrot.lane.b32.xlu0 %v1810, 122
    %v1818 = vpop.permute.xlu0 %1817
    %1819 = vrot.lane.b32.xlu0 %v1812, 122
    %v1820 = vpop.permute.xlu0 %1819
    %v1825 = vadd.f32 %v1785, %v1814
    %v1826 = vadd.f32 %v1786, %v1816
    %v1827 = vadd.f32 %v1787, %v1818
    %v1828 = vadd.f32 %v1788, %v1820
    %s1829 = sld [smem:[#allocation4 + $0x1b]]
    %v1830 = vstv %s1829
    %v1831 = vmul.f32 %v1830, %v179
    %v1832 = vmul.f32 %v1830, %v180
    %v1833 = vmul.f32 %v1830, %v181
    %v1834 = vmul.f32 %v1830, %v182
    %v1835 = vmul.f32 %v1830, %v183
    %v1836 = vmul.f32 %v1830, %v184
    %v1843 = vrot.slane %v1831, 3
    %v1844 = vrot.slane %v1832, 3
    %v1845 = vsel %vm275, %v1843, %v1844
    %v1846 = vrot.slane %v1833, 3
    %v1847 = vsel %vm275, %v1844, %v1846
    %v1848 = vrot.slane %v1834, 3
    %v1849 = vrot.slane %v1835, 3
    %v1850 = vsel %vm275, %v1848, %v1849
    %v1851 = vrot.slane %v1836, 3
    %v1852 = vsel %vm275, %v1849, %v1851
    %1853 = vrot.lane.b32.xlu0 %v1845, 122
    %v1854 = vpop.permute.xlu0 %1853
    %1855 = vrot.lane.b32.xlu0 %v1847, 122
    %v1856 = vpop.permute.xlu0 %1855
    %1857 = vrot.lane.b32.xlu0 %v1850, 122
    %v1858 = vpop.permute.xlu0 %1857
    %1859 = vrot.lane.b32.xlu0 %v1852, 122
    %v1860 = vpop.permute.xlu0 %1859
    %v1865 = vadd.f32 %v1825, %v1854
    %v1866 = vadd.f32 %v1826, %v1856
    %v1867 = vadd.f32 %v1827, %v1858
    %v1868 = vadd.f32 %v1828, %v1860
    %s1869 = sld [smem:[#allocation4 + $0x22]]
    %v1870 = vstv %s1869
    %v1871 = vmul.f32 %v1870, %v179
    %v1872 = vmul.f32 %v1870, %v180
    %v1873 = vmul.f32 %v1870, %v181
    %v1874 = vmul.f32 %v1870, %v182
    %v1875 = vmul.f32 %v1870, %v183
    %v1876 = vmul.f32 %v1870, %v184
    %v1883 = vrot.slane %v1871, 4
    %v1884 = vrot.slane %v1872, 4
    %v1885 = vsel %vm308, %v1883, %v1884
    %v1886 = vrot.slane %v1873, 4
    %v1887 = vsel %vm308, %v1884, %v1886
    %v1888 = vrot.slane %v1874, 4
    %v1889 = vrot.slane %v1875, 4
    %v1890 = vsel %vm308, %v1888, %v1889
    %v1891 = vrot.slane %v1876, 4
    %v1892 = vsel %vm308, %v1889, %v1891
    %1893 = vrot.lane.b32.xlu0 %v1885, 122
    %v1894 = vpop.permute.xlu0 %1893
    %1895 = vrot.lane.b32.xlu0 %v1887, 122
    %v1896 = vpop.permute.xlu0 %1895
    %1897 = vrot.lane.b32.xlu0 %v1890, 122
    %v1898 = vpop.permute.xlu0 %1897
    %1899 = vrot.lane.b32.xlu0 %v1892, 122
    %v1900 = vpop.permute.xlu0 %1899
    %v1905 = vadd.f32 %v1865, %v1894
    %v1906 = vadd.f32 %v1866, %v1896
    %v1907 = vadd.f32 %v1867, %v1898
    %v1908 = vadd.f32 %v1868, %v1900
    %s1909 = sld [smem:[#allocation4 + $0x29]]
    %v1910 = vstv %s1909
    %v1911 = vmul.f32 %v1910, %v179
    %v1912 = vmul.f32 %v1910, %v180
    %v1913 = vmul.f32 %v1910, %v181
    %v1914 = vmul.f32 %v1910, %v182
    %v1915 = vmul.f32 %v1910, %v183
    %v1916 = vmul.f32 %v1910, %v184
    %v1923 = vrot.slane %v1911, 5
    %v1924 = vrot.slane %v1912, 5
    %v1925 = vsel %vm341, %v1923, %v1924
    %v1926 = vrot.slane %v1913, 5
    %v1927 = vsel %vm341, %v1924, %v1926
    %v1928 = vrot.slane %v1914, 5
    %v1929 = vrot.slane %v1915, 5
    %v1930 = vsel %vm341, %v1928, %v1929
    %v1931 = vrot.slane %v1916, 5
    %v1932 = vsel %vm341, %v1929, %v1931
    %1933 = vrot.lane.b32.xlu0 %v1925, 122
    %v1934 = vpop.permute.xlu0 %1933
    %1935 = vrot.lane.b32.xlu0 %v1927, 122
    %v1936 = vpop.permute.xlu0 %1935
    %1937 = vrot.lane.b32.xlu0 %v1930, 122
    %v1938 = vpop.permute.xlu0 %1937
    %1939 = vrot.lane.b32.xlu0 %v1932, 122
    %v1940 = vpop.permute.xlu0 %1939
    %v1945 = vadd.f32 %v1905, %v1934
    %v1946 = vadd.f32 %v1906, %v1936
    %v1947 = vadd.f32 %v1907, %v1938
    %v1948 = vadd.f32 %v1908, %v1940
    %s1949 = sld [smem:[#allocation4 + $0x30]]
    %v1950 = vstv %s1949
    %v1951 = vmul.f32 %v1950, %v179
    %v1952 = vmul.f32 %v1950, %v180
    %v1953 = vmul.f32 %v1950, %v181
    %v1954 = vmul.f32 %v1950, %v182
    %v1955 = vmul.f32 %v1950, %v183
    %v1956 = vmul.f32 %v1950, %v184
    %v1963 = vrot.slane %v1951, 6
    %v1964 = vrot.slane %v1952, 6
    %v1965 = vsel %vm374, %v1963, %v1964
    %v1966 = vrot.slane %v1953, 6
    %v1967 = vsel %vm374, %v1964, %v1966
    %v1968 = vrot.slane %v1954, 6
    %v1969 = vrot.slane %v1955, 6
    %v1970 = vsel %vm374, %v1968, %v1969
    %v1971 = vrot.slane %v1956, 6
    %v1972 = vsel %vm374, %v1969, %v1971
    %1973 = vrot.lane.b32.xlu0 %v1965, 122
    %v1974 = vpop.permute.xlu0 %1973
    %1975 = vrot.lane.b32.xlu0 %v1967, 122
    %v1976 = vpop.permute.xlu0 %1975
    %1977 = vrot.lane.b32.xlu0 %v1970, 122
    %v1978 = vpop.permute.xlu0 %1977
    %1979 = vrot.lane.b32.xlu0 %v1972, 122
    %v1980 = vpop.permute.xlu0 %1979
    %v1985 = vadd.f32 %v1945, %v1974
    %v1986 = vadd.f32 %v1946, %v1976
    %v1987 = vadd.f32 %v1947, %v1978
    %v1988 = vadd.f32 %v1948, %v1980
    %v1989 = vld [vmem:[%s172] sm:$0xff]
    %v1990 = vld [vmem:[%s172 + $0x8] sm:$0xff]
    %v1991 = vld [vmem:[%s172 + $0x10] sm:$0x3f]
    %v1992 = vld [vmem:[%s172 + $0x30] sm:$0xff]
    %v1993 = vld [vmem:[%s172 + $0x38] sm:$0xff]
    %v1994 = vld [vmem:[%s172 + $0x40] sm:$0x3f]
    %s1995 = sld [smem:[#allocation4 + $0x31]]
    %v1996 = vstv %s1995
    %v1997 = vmul.f32 %v1996, %v1989
    %v1998 = vmul.f32 %v1996, %v1990
    %v1999 = vmul.f32 %v1996, %v1992
    %v2000 = vmul.f32 %v1996, %v1993
    %v2001 = vadd.f32 %v1985, %v1997
    %v2002 = vadd.f32 %v1986, %v1998
    %v2003 = vadd.f32 %v1987, %v1999
    %v2004 = vadd.f32 %v1988, %v2000
    %s2005 = sld [smem:[#allocation4 + $0x38]]
    %v2006 = vstv %s2005
    %v2007 = vmul.f32 %v2006, %v1989
    %v2008 = vmul.f32 %v2006, %v1990
    %v2009 = vmul.f32 %v2006, %v1991
    %v2010 = vmul.f32 %v2006, %v1992
    %v2011 = vmul.f32 %v2006, %v1993
    %v2012 = vmul.f32 %v2006, %v1994
    %v2019 = vrot.slane %v2007, 1
    %v2020 = vrot.slane %v2008, 1
    %v2021 = vsel %vm209, %v2019, %v2020
    %v2022 = vrot.slane %v2009, 1
    %v2023 = vsel %vm209, %v2020, %v2022
    %v2024 = vrot.slane %v2010, 1
    %v2025 = vrot.slane %v2011, 1
    %v2026 = vsel %vm209, %v2024, %v2025
    %v2027 = vrot.slane %v2012, 1
    %v2028 = vsel %vm209, %v2025, %v2027
    %v2033 = vadd.f32 %v2001, %v2021
    %v2034 = vadd.f32 %v2002, %v2023
    %v2035 = vadd.f32 %v2003, %v2026
    %v2036 = vadd.f32 %v2004, %v2028
    %s2037 = sld [smem:[#allocation4 + $0x3f]]
    %v2038 = vstv %s2037
    %v2039 = vmul.f32 %v2038, %v1989
    %v2040 = vmul.f32 %v2038, %v1990
    %v2041 = vmul.f32 %v2038, %v1991
    %v2042 = vmul.f32 %v2038, %v1992
    %v2043 = vmul.f32 %v2038, %v1993
    %v2044 = vmul.f32 %v2038, %v1994
    %v2051 = vrot.slane %v2039, 2
    %v2052 = vrot.slane %v2040, 2
    %v2053 = vsel %vm242, %v2051, %v2052
    %v2054 = vrot.slane %v2041, 2
    %v2055 = vsel %vm242, %v2052, %v2054
    %v2056 = vrot.slane %v2042, 2
    %v2057 = vrot.slane %v2043, 2
    %v2058 = vsel %vm242, %v2056, %v2057
    %v2059 = vrot.slane %v2044, 2
    %v2060 = vsel %vm242, %v2057, %v2059
    %v2065 = vadd.f32 %v2033, %v2053
    %v2066 = vadd.f32 %v2034, %v2055
    %v2067 = vadd.f32 %v2035, %v2058
    %v2068 = vadd.f32 %v2036, %v2060
    %s2069 = sld [smem:[#allocation4 + $0x46]]
    %v2070 = vstv %s2069
    %v2071 = vmul.f32 %v2070, %v1989
    %v2072 = vmul.f32 %v2070, %v1990
    %v2073 = vmul.f32 %v2070, %v1991
    %v2074 = vmul.f32 %v2070, %v1992
    %v2075 = vmul.f32 %v2070, %v1993
    %v2076 = vmul.f32 %v2070, %v1994
    %v2083 = vrot.slane %v2071, 3
    %v2084 = vrot.slane %v2072, 3
    %v2085 = vsel %vm275, %v2083, %v2084
    %v2086 = vrot.slane %v2073, 3
    %v2087 = vsel %vm275, %v2084, %v2086
    %v2088 = vrot.slane %v2074, 3
    %v2089 = vrot.slane %v2075, 3
    %v2090 = vsel %vm275, %v2088, %v2089
    %v2091 = vrot.slane %v2076, 3
    %v2092 = vsel %vm275, %v2089, %v2091
    %v2097 = vadd.f32 %v2065, %v2085
    %v2098 = vadd.f32 %v2066, %v2087
    %v2099 = vadd.f32 %v2067, %v2090
    %v2100 = vadd.f32 %v2068, %v2092
    %s2101 = sld [smem:[#allocation4 + $0x4d]]
    %v2102 = vstv %s2101
    %v2103 = vmul.f32 %v2102, %v1989
    %v2104 = vmul.f32 %v2102, %v1990
    %v2105 = vmul.f32 %v2102, %v1991
    %v2106 = vmul.f32 %v2102, %v1992
    %v2107 = vmul.f32 %v2102, %v1993
    %v2108 = vmul.f32 %v2102, %v1994
    %v2115 = vrot.slane %v2103, 4
    %v2116 = vrot.slane %v2104, 4
    %v2117 = vsel %vm308, %v2115, %v2116
    %v2118 = vrot.slane %v2105, 4
    %v2119 = vsel %vm308, %v2116, %v2118
    %v2120 = vrot.slane %v2106, 4
    %v2121 = vrot.slane %v2107, 4
    %v2122 = vsel %vm308, %v2120, %v2121
    %v2123 = vrot.slane %v2108, 4
    %v2124 = vsel %vm308, %v2121, %v2123
    %v2129 = vadd.f32 %v2097, %v2117
    %v2130 = vadd.f32 %v2098, %v2119
    %v2131 = vadd.f32 %v2099, %v2122
    %v2132 = vadd.f32 %v2100, %v2124
    %s2133 = sld [smem:[#allocation4 + $0x54]]
    %v2134 = vstv %s2133
    %v2135 = vmul.f32 %v2134, %v1989
    %v2136 = vmul.f32 %v2134, %v1990
    %v2137 = vmul.f32 %v2134, %v1991
    %v2138 = vmul.f32 %v2134, %v1992
    %v2139 = vmul.f32 %v2134, %v1993
    %v2140 = vmul.f32 %v2134, %v1994
    %v2147 = vrot.slane %v2135, 5
    %v2148 = vrot.slane %v2136, 5
    %v2149 = vsel %vm341, %v2147, %v2148
    %v2150 = vrot.slane %v2137, 5
    %v2151 = vsel %vm341, %v2148, %v2150
    %v2152 = vrot.slane %v2138, 5
    %v2153 = vrot.slane %v2139, 5
    %v2154 = vsel %vm341, %v2152, %v2153
    %v2155 = vrot.slane %v2140, 5
    %v2156 = vsel %vm341, %v2153, %v2155
    %v2161 = vadd.f32 %v2129, %v2149
    %v2162 = vadd.f32 %v2130, %v2151
    %v2163 = vadd.f32 %v2131, %v2154
    %v2164 = vadd.f32 %v2132, %v2156
    %s2165 = sld [smem:[#allocation4 + $0x5b]]
    %v2166 = vstv %s2165
    %v2167 = vmul.f32 %v2166, %v1989
    %v2168 = vmul.f32 %v2166, %v1990
    %v2169 = vmul.f32 %v2166, %v1991
    %v2170 = vmul.f32 %v2166, %v1992
    %v2171 = vmul.f32 %v2166, %v1993
    %v2172 = vmul.f32 %v2166, %v1994
    %v2179 = vrot.slane %v2167, 6
    %v2180 = vrot.slane %v2168, 6
    %v2181 = vsel %vm374, %v2179, %v2180
    %v2182 = vrot.slane %v2169, 6
    %v2183 = vsel %vm374, %v2180, %v2182
    %v2184 = vrot.slane %v2170, 6
    %v2185 = vrot.slane %v2171, 6
    %v2186 = vsel %vm374, %v2184, %v2185
    %v2187 = vrot.slane %v2172, 6
    %v2188 = vsel %vm374, %v2185, %v2187
    %v2193 = vadd.f32 %v2161, %v2181
    %v2194 = vadd.f32 %v2162, %v2183
    %v2195 = vadd.f32 %v2163, %v2186
    %v2196 = vadd.f32 %v2164, %v2188
    %s2197 = sld [smem:[#allocation4 + $0x32]]
    %v2198 = vstv %s2197
    %v2199 = vmul.f32 %v2198, %v1989
    %v2200 = vmul.f32 %v2198, %v1990
    %v2201 = vmul.f32 %v2198, %v1992
    %v2202 = vmul.f32 %v2198, %v1993
    %2207 = vrot.lane.b32.xlu0 %v2199, 127
    %v2208 = vpop.permute.xlu0 %2207
    %2209 = vrot.lane.b32.xlu0 %v2200, 127
    %v2210 = vpop.permute.xlu0 %2209
    %2211 = vrot.lane.b32.xlu0 %v2201, 127
    %v2212 = vpop.permute.xlu0 %2211
    %2213 = vrot.lane.b32.xlu0 %v2202, 127
    %v2214 = vpop.permute.xlu0 %2213
    %v2219 = vadd.f32 %v2193, %v2208
    %v2220 = vadd.f32 %v2194, %v2210
    %v2221 = vadd.f32 %v2195, %v2212
    %v2222 = vadd.f32 %v2196, %v2214
    %s2223 = sld [smem:[#allocation4 + $0x39]]
    %v2224 = vstv %s2223
    %v2225 = vmul.f32 %v2224, %v1989
    %v2226 = vmul.f32 %v2224, %v1990
    %v2227 = vmul.f32 %v2224, %v1991
    %v2228 = vmul.f32 %v2224, %v1992
    %v2229 = vmul.f32 %v2224, %v1993
    %v2230 = vmul.f32 %v2224, %v1994
    %v2237 = vrot.slane %v2225, 1
    %v2238 = vrot.slane %v2226, 1
    %v2239 = vsel %vm209, %v2237, %v2238
    %v2240 = vrot.slane %v2227, 1
    %v2241 = vsel %vm209, %v2238, %v2240
    %v2242 = vrot.slane %v2228, 1
    %v2243 = vrot.slane %v2229, 1
    %v2244 = vsel %vm209, %v2242, %v2243
    %v2245 = vrot.slane %v2230, 1
    %v2246 = vsel %vm209, %v2243, %v2245
    %2247 = vrot.lane.b32.xlu0 %v2239, 127
    %v2248 = vpop.permute.xlu0 %2247
    %2249 = vrot.lane.b32.xlu0 %v2241, 127
    %v2250 = vpop.permute.xlu0 %2249
    %2251 = vrot.lane.b32.xlu0 %v2244, 127
    %v2252 = vpop.permute.xlu0 %2251
    %2253 = vrot.lane.b32.xlu0 %v2246, 127
    %v2254 = vpop.permute.xlu0 %2253
    %v2259 = vadd.f32 %v2219, %v2248
    %v2260 = vadd.f32 %v2220, %v2250
    %v2261 = vadd.f32 %v2221, %v2252
    %v2262 = vadd.f32 %v2222, %v2254
    %s2263 = sld [smem:[#allocation4 + $0x40]]
    %v2264 = vstv %s2263
    %v2265 = vmul.f32 %v2264, %v1989
    %v2266 = vmul.f32 %v2264, %v1990
    %v2267 = vmul.f32 %v2264, %v1991
    %v2268 = vmul.f32 %v2264, %v1992
    %v2269 = vmul.f32 %v2264, %v1993
    %v2270 = vmul.f32 %v2264, %v1994
    %v2277 = vrot.slane %v2265, 2
    %v2278 = vrot.slane %v2266, 2
    %v2279 = vsel %vm242, %v2277, %v2278
    %v2280 = vrot.slane %v2267, 2
    %v2281 = vsel %vm242, %v2278, %v2280
    %v2282 = vrot.slane %v2268, 2
    %v2283 = vrot.slane %v2269, 2
    %v2284 = vsel %vm242, %v2282, %v2283
    %v2285 = vrot.slane %v2270, 2
    %v2286 = vsel %vm242, %v2283, %v2285
    %2287 = vrot.lane.b32.xlu0 %v2279, 127
    %v2288 = vpop.permute.xlu0 %2287
    %2289 = vrot.lane.b32.xlu0 %v2281, 127
    %v2290 = vpop.permute.xlu0 %2289
    %2291 = vrot.lane.b32.xlu0 %v2284, 127
    %v2292 = vpop.permute.xlu0 %2291
    %2293 = vrot.lane.b32.xlu0 %v2286, 127
    %v2294 = vpop.permute.xlu0 %2293
    %v2299 = vadd.f32 %v2259, %v2288
    %v2300 = vadd.f32 %v2260, %v2290
    %v2301 = vadd.f32 %v2261, %v2292
    %v2302 = vadd.f32 %v2262, %v2294
    %s2303 = sld [smem:[#allocation4 + $0x47]]
    %v2304 = vstv %s2303
    %v2305 = vmul.f32 %v2304, %v1989
    %v2306 = vmul.f32 %v2304, %v1990
    %v2307 = vmul.f32 %v2304, %v1991
    %v2308 = vmul.f32 %v2304, %v1992
    %v2309 = vmul.f32 %v2304, %v1993
    %v2310 = vmul.f32 %v2304, %v1994
    %v2317 = vrot.slane %v2305, 3
    %v2318 = vrot.slane %v2306, 3
    %v2319 = vsel %vm275, %v2317, %v2318
    %v2320 = vrot.slane %v2307, 3
    %v2321 = vsel %vm275, %v2318, %v2320
    %v2322 = vrot.slane %v2308, 3
    %v2323 = vrot.slane %v2309, 3
    %v2324 = vsel %vm275, %v2322, %v2323
    %v2325 = vrot.slane %v2310, 3
    %v2326 = vsel %vm275, %v2323, %v2325
    %2327 = vrot.lane.b32.xlu0 %v2319, 127
    %v2328 = vpop.permute.xlu0 %2327
    %2329 = vrot.lane.b32.xlu0 %v2321, 127
    %v2330 = vpop.permute.xlu0 %2329
    %2331 = vrot.lane.b32.xlu0 %v2324, 127
    %v2332 = vpop.permute.xlu0 %2331
    %2333 = vrot.lane.b32.xlu0 %v2326, 127
    %v2334 = vpop.permute.xlu0 %2333
    %v2339 = vadd.f32 %v2299, %v2328
    %v2340 = vadd.f32 %v2300, %v2330
    %v2341 = vadd.f32 %v2301, %v2332
    %v2342 = vadd.f32 %v2302, %v2334
    %s2343 = sld [smem:[#allocation4 + $0x4e]]
    %v2344 = vstv %s2343
    %v2345 = vmul.f32 %v2344, %v1989
    %v2346 = vmul.f32 %v2344, %v1990
    %v2347 = vmul.f32 %v2344, %v1991
    %v2348 = vmul.f32 %v2344, %v1992
    %v2349 = vmul.f32 %v2344, %v1993
    %v2350 = vmul.f32 %v2344, %v1994
    %v2357 = vrot.slane %v2345, 4
    %v2358 = vrot.slane %v2346, 4
    %v2359 = vsel %vm308, %v2357, %v2358
    %v2360 = vrot.slane %v2347, 4
    %v2361 = vsel %vm308, %v2358, %v2360
    %v2362 = vrot.slane %v2348, 4
    %v2363 = vrot.slane %v2349, 4
    %v2364 = vsel %vm308, %v2362, %v2363
    %v2365 = vrot.slane %v2350, 4
    %v2366 = vsel %vm308, %v2363, %v2365
    %2367 = vrot.lane.b32.xlu0 %v2359, 127
    %v2368 = vpop.permute.xlu0 %2367
    %2369 = vrot.lane.b32.xlu0 %v2361, 127
    %v2370 = vpop.permute.xlu0 %2369
    %2371 = vrot.lane.b32.xlu0 %v2364, 127
    %v2372 = vpop.permute.xlu0 %2371
    %2373 = vrot.lane.b32.xlu0 %v2366, 127
    %v2374 = vpop.permute.xlu0 %2373
    %v2379 = vadd.f32 %v2339, %v2368
    %v2380 = vadd.f32 %v2340, %v2370
    %v2381 = vadd.f32 %v2341, %v2372
    %v2382 = vadd.f32 %v2342, %v2374
    %s2383 = sld [smem:[#allocation4 + $0x55]]
    %v2384 = vstv %s2383
    %v2385 = vmul.f32 %v2384, %v1989
    %v2386 = vmul.f32 %v2384, %v1990
    %v2387 = vmul.f32 %v2384, %v1991
    %v2388 = vmul.f32 %v2384, %v1992
    %v2389 = vmul.f32 %v2384, %v1993
    %v2390 = vmul.f32 %v2384, %v1994
    %v2397 = vrot.slane %v2385, 5
    %v2398 = vrot.slane %v2386, 5
    %v2399 = vsel %vm341, %v2397, %v2398
    %v2400 = vrot.slane %v2387, 5
    %v2401 = vsel %vm341, %v2398, %v2400
    %v2402 = vrot.slane %v2388, 5
    %v2403 = vrot.slane %v2389, 5
    %v2404 = vsel %vm341, %v2402, %v2403
    %v2405 = vrot.slane %v2390, 5
    %v2406 = vsel %vm341, %v2403, %v2405
    %2407 = vrot.lane.b32.xlu0 %v2399, 127
    %v2408 = vpop.permute.xlu0 %2407
    %2409 = vrot.lane.b32.xlu0 %v2401, 127
    %v2410 = vpop.permute.xlu0 %2409
    %2411 = vrot.lane.b32.xlu0 %v2404, 127
    %v2412 = vpop.permute.xlu0 %2411
    %2413 = vrot.lane.b32.xlu0 %v2406, 127
    %v2414 = vpop.permute.xlu0 %2413
    %v2419 = vadd.f32 %v2379, %v2408
    %v2420 = vadd.f32 %v2380, %v2410
    %v2421 = vadd.f32 %v2381, %v2412
    %v2422 = vadd.f32 %v2382, %v2414
    %s2423 = sld [smem:[#allocation4 + $0x5c]]
    %v2424 = vstv %s2423
    %v2425 = vmul.f32 %v2424, %v1989
    %v2426 = vmul.f32 %v2424, %v1990
    %v2427 = vmul.f32 %v2424, %v1991
    %v2428 = vmul.f32 %v2424, %v1992
    %v2429 = vmul.f32 %v2424, %v1993
    %v2430 = vmul.f32 %v2424, %v1994
    %v2437 = vrot.slane %v2425, 6
    %v2438 = vrot.slane %v2426, 6
    %v2439 = vsel %vm374, %v2437, %v2438
    %v2440 = vrot.slane %v2427, 6
    %v2441 = vsel %vm374, %v2438, %v2440
    %v2442 = vrot.slane %v2428, 6
    %v2443 = vrot.slane %v2429, 6
    %v2444 = vsel %vm374, %v2442, %v2443
    %v2445 = vrot.slane %v2430, 6
    %v2446 = vsel %vm374, %v2443, %v2445
    %2447 = vrot.lane.b32.xlu0 %v2439, 127
    %v2448 = vpop.permute.xlu0 %2447
    %2449 = vrot.lane.b32.xlu0 %v2441, 127
    %v2450 = vpop.permute.xlu0 %2449
    %2451 = vrot.lane.b32.xlu0 %v2444, 127
    %v2452 = vpop.permute.xlu0 %2451
    %2453 = vrot.lane.b32.xlu0 %v2446, 127
    %v2454 = vpop.permute.xlu0 %2453
    %v2459 = vadd.f32 %v2419, %v2448
    %v2460 = vadd.f32 %v2420, %v2450
    %v2461 = vadd.f32 %v2421, %v2452
    %v2462 = vadd.f32 %v2422, %v2454
    %s2463 = sld [smem:[#allocation4 + $0x33]]
    %v2464 = vstv %s2463
    %v2465 = vmul.f32 %v2464, %v1989
    %v2466 = vmul.f32 %v2464, %v1990
    %v2467 = vmul.f32 %v2464, %v1992
    %v2468 = vmul.f32 %v2464, %v1993
    %2473 = vrot.lane.b32.xlu0 %v2465, 126
    %v2474 = vpop.permute.xlu0 %2473
    %2475 = vrot.lane.b32.xlu0 %v2466, 126
    %v2476 = vpop.permute.xlu0 %2475
    %2477 = vrot.lane.b32.xlu0 %v2467, 126
    %v2478 = vpop.permute.xlu0 %2477
    %2479 = vrot.lane.b32.xlu0 %v2468, 126
    %v2480 = vpop.permute.xlu0 %2479
    %v2485 = vadd.f32 %v2459, %v2474
    %v2486 = vadd.f32 %v2460, %v2476
    %v2487 = vadd.f32 %v2461, %v2478
    %v2488 = vadd.f32 %v2462, %v2480
    %s2489 = sld [smem:[#allocation4 + $0x3a]]
    %v2490 = vstv %s2489
    %v2491 = vmul.f32 %v2490, %v1989
    %v2492 = vmul.f32 %v2490, %v1990
    %v2493 = vmul.f32 %v2490, %v1991
    %v2494 = vmul.f32 %v2490, %v1992
    %v2495 = vmul.f32 %v2490, %v1993
    %v2496 = vmul.f32 %v2490, %v1994
    %v2503 = vrot.slane %v2491, 1
    %v2504 = vrot.slane %v2492, 1
    %v2505 = vsel %vm209, %v2503, %v2504
    %v2506 = vrot.slane %v2493, 1
    %v2507 = vsel %vm209, %v2504, %v2506
    %v2508 = vrot.slane %v2494, 1
    %v2509 = vrot.slane %v2495, 1
    %v2510 = vsel %vm209, %v2508, %v2509
    %v2511 = vrot.slane %v2496, 1
    %v2512 = vsel %vm209, %v2509, %v2511
    %2513 = vrot.lane.b32.xlu0 %v2505, 126
    %v2514 = vpop.permute.xlu0 %2513
    %2515 = vrot.lane.b32.xlu0 %v2507, 126
    %v2516 = vpop.permute.xlu0 %2515
    %2517 = vrot.lane.b32.xlu0 %v2510, 126
    %v2518 = vpop.permute.xlu0 %2517
    %2519 = vrot.lane.b32.xlu0 %v2512, 126
    %v2520 = vpop.permute.xlu0 %2519
    %v2525 = vadd.f32 %v2485, %v2514
    %v2526 = vadd.f32 %v2486, %v2516
    %v2527 = vadd.f32 %v2487, %v2518
    %v2528 = vadd.f32 %v2488, %v2520
    %s2529 = sld [smem:[#allocation4 + $0x41]]
    %v2530 = vstv %s2529
    %v2531 = vmul.f32 %v2530, %v1989
    %v2532 = vmul.f32 %v2530, %v1990
    %v2533 = vmul.f32 %v2530, %v1991
    %v2534 = vmul.f32 %v2530, %v1992
    %v2535 = vmul.f32 %v2530, %v1993
    %v2536 = vmul.f32 %v2530, %v1994
    %v2543 = vrot.slane %v2531, 2
    %v2544 = vrot.slane %v2532, 2
    %v2545 = vsel %vm242, %v2543, %v2544
    %v2546 = vrot.slane %v2533, 2
    %v2547 = vsel %vm242, %v2544, %v2546
    %v2548 = vrot.slane %v2534, 2
    %v2549 = vrot.slane %v2535, 2
    %v2550 = vsel %vm242, %v2548, %v2549
    %v2551 = vrot.slane %v2536, 2
    %v2552 = vsel %vm242, %v2549, %v2551
    %2553 = vrot.lane.b32.xlu0 %v2545, 126
    %v2554 = vpop.permute.xlu0 %2553
    %2555 = vrot.lane.b32.xlu0 %v2547, 126
    %v2556 = vpop.permute.xlu0 %2555
    %2557 = vrot.lane.b32.xlu0 %v2550, 126
    %v2558 = vpop.permute.xlu0 %2557
    %2559 = vrot.lane.b32.xlu0 %v2552, 126
    %v2560 = vpop.permute.xlu0 %2559
    %v2565 = vadd.f32 %v2525, %v2554
    %v2566 = vadd.f32 %v2526, %v2556
    %v2567 = vadd.f32 %v2527, %v2558
    %v2568 = vadd.f32 %v2528, %v2560
    %s2569 = sld [smem:[#allocation4 + $0x48]]
    %v2570 = vstv %s2569
    %v2571 = vmul.f32 %v2570, %v1989
    %v2572 = vmul.f32 %v2570, %v1990
    %v2573 = vmul.f32 %v2570, %v1991
    %v2574 = vmul.f32 %v2570, %v1992
    %v2575 = vmul.f32 %v2570, %v1993
    %v2576 = vmul.f32 %v2570, %v1994
    %v2583 = vrot.slane %v2571, 3
    %v2584 = vrot.slane %v2572, 3
    %v2585 = vsel %vm275, %v2583, %v2584
    %v2586 = vrot.slane %v2573, 3
    %v2587 = vsel %vm275, %v2584, %v2586
    %v2588 = vrot.slane %v2574, 3
    %v2589 = vrot.slane %v2575, 3
    %v2590 = vsel %vm275, %v2588, %v2589
    %v2591 = vrot.slane %v2576, 3
    %v2592 = vsel %vm275, %v2589, %v2591
    %2593 = vrot.lane.b32.xlu0 %v2585, 126
    %v2594 = vpop.permute.xlu0 %2593
    %2595 = vrot.lane.b32.xlu0 %v2587, 126
    %v2596 = vpop.permute.xlu0 %2595
    %2597 = vrot.lane.b32.xlu0 %v2590, 126
    %v2598 = vpop.permute.xlu0 %2597
    %2599 = vrot.lane.b32.xlu0 %v2592, 126
    %v2600 = vpop.permute.xlu0 %2599
    %v2605 = vadd.f32 %v2565, %v2594
    %v2606 = vadd.f32 %v2566, %v2596
    %v2607 = vadd.f32 %v2567, %v2598
    %v2608 = vadd.f32 %v2568, %v2600
    %s2609 = sld [smem:[#allocation4 + $0x4f]]
    %v2610 = vstv %s2609
    %v2611 = vmul.f32 %v2610, %v1989
    %v2612 = vmul.f32 %v2610, %v1990
    %v2613 = vmul.f32 %v2610, %v1991
    %v2614 = vmul.f32 %v2610, %v1992
    %v2615 = vmul.f32 %v2610, %v1993
    %v2616 = vmul.f32 %v2610, %v1994
    %v2623 = vrot.slane %v2611, 4
    %v2624 = vrot.slane %v2612, 4
    %v2625 = vsel %vm308, %v2623, %v2624
    %v2626 = vrot.slane %v2613, 4
    %v2627 = vsel %vm308, %v2624, %v2626
    %v2628 = vrot.slane %v2614, 4
    %v2629 = vrot.slane %v2615, 4
    %v2630 = vsel %vm308, %v2628, %v2629
    %v2631 = vrot.slane %v2616, 4
    %v2632 = vsel %vm308, %v2629, %v2631
    %2633 = vrot.lane.b32.xlu0 %v2625, 126
    %v2634 = vpop.permute.xlu0 %2633
    %2635 = vrot.lane.b32.xlu0 %v2627, 126
    %v2636 = vpop.permute.xlu0 %2635
    %2637 = vrot.lane.b32.xlu0 %v2630, 126
    %v2638 = vpop.permute.xlu0 %2637
    %2639 = vrot.lane.b32.xlu0 %v2632, 126
    %v2640 = vpop.permute.xlu0 %2639
    %v2645 = vadd.f32 %v2605, %v2634
    %v2646 = vadd.f32 %v2606, %v2636
    %v2647 = vadd.f32 %v2607, %v2638
    %v2648 = vadd.f32 %v2608, %v2640
    %s2649 = sld [smem:[#allocation4 + $0x56]]
    %v2650 = vstv %s2649
    %v2651 = vmul.f32 %v2650, %v1989
    %v2652 = vmul.f32 %v2650, %v1990
    %v2653 = vmul.f32 %v2650, %v1991
    %v2654 = vmul.f32 %v2650, %v1992
    %v2655 = vmul.f32 %v2650, %v1993
    %v2656 = vmul.f32 %v2650, %v1994
    %v2663 = vrot.slane %v2651, 5
    %v2664 = vrot.slane %v2652, 5
    %v2665 = vsel %vm341, %v2663, %v2664
    %v2666 = vrot.slane %v2653, 5
    %v2667 = vsel %vm341, %v2664, %v2666
    %v2668 = vrot.slane %v2654, 5
    %v2669 = vrot.slane %v2655, 5
    %v2670 = vsel %vm341, %v2668, %v2669
    %v2671 = vrot.slane %v2656, 5
    %v2672 = vsel %vm341, %v2669, %v2671
    %2673 = vrot.lane.b32.xlu0 %v2665, 126
    %v2674 = vpop.permute.xlu0 %2673
    %2675 = vrot.lane.b32.xlu0 %v2667, 126
    %v2676 = vpop.permute.xlu0 %2675
    %2677 = vrot.lane.b32.xlu0 %v2670, 126
    %v2678 = vpop.permute.xlu0 %2677
    %2679 = vrot.lane.b32.xlu0 %v2672, 126
    %v2680 = vpop.permute.xlu0 %2679
    %v2685 = vadd.f32 %v2645, %v2674
    %v2686 = vadd.f32 %v2646, %v2676
    %v2687 = vadd.f32 %v2647, %v2678
    %v2688 = vadd.f32 %v2648, %v2680
    %s2689 = sld [smem:[#allocation4 + $0x5d]]
    %v2690 = vstv %s2689
    %v2691 = vmul.f32 %v2690, %v1989
    %v2692 = vmul.f32 %v2690, %v1990
    %v2693 = vmul.f32 %v2690, %v1991
    %v2694 = vmul.f32 %v2690, %v1992
    %v2695 = vmul.f32 %v2690, %v1993
    %v2696 = vmul.f32 %v2690, %v1994
    %v2703 = vrot.slane %v2691, 6
    %v2704 = vrot.slane %v2692, 6
    %v2705 = vsel %vm374, %v2703, %v2704
    %v2706 = vrot.slane %v2693, 6
    %v2707 = vsel %vm374, %v2704, %v2706
    %v2708 = vrot.slane %v2694, 6
    %v2709 = vrot.slane %v2695, 6
    %v2710 = vsel %vm374, %v2708, %v2709
    %v2711 = vrot.slane %v2696, 6
    %v2712 = vsel %vm374, %v2709, %v2711
    %2713 = vrot.lane.b32.xlu0 %v2705, 126
    %v2714 = vpop.permute.xlu0 %2713
    %2715 = vrot.lane.b32.xlu0 %v2707, 126
    %v2716 = vpop.permute.xlu0 %2715
    %2717 = vrot.lane.b32.xlu0 %v2710, 126
    %v2718 = vpop.permute.xlu0 %2717
    %2719 = vrot.lane.b32.xlu0 %v2712, 126
    %v2720 = vpop.permute.xlu0 %2719
    %v2725 = vadd.f32 %v2685, %v2714
    %v2726 = vadd.f32 %v2686, %v2716
    %v2727 = vadd.f32 %v2687, %v2718
    %v2728 = vadd.f32 %v2688, %v2720
    %s2729 = sld [smem:[#allocation4 + $0x34]]
    %v2730 = vstv %s2729
    %v2731 = vmul.f32 %v2730, %v1989
    %v2732 = vmul.f32 %v2730, %v1990
    %v2733 = vmul.f32 %v2730, %v1992
    %v2734 = vmul.f32 %v2730, %v1993
    %2739 = vrot.lane.b32.xlu0 %v2731, 125
    %v2740 = vpop.permute.xlu0 %2739
    %2741 = vrot.lane.b32.xlu0 %v2732, 125
    %v2742 = vpop.permute.xlu0 %2741
    %2743 = vrot.lane.b32.xlu0 %v2733, 125
    %v2744 = vpop.permute.xlu0 %2743
    %2745 = vrot.lane.b32.xlu0 %v2734, 125
    %v2746 = vpop.permute.xlu0 %2745
    %v2751 = vadd.f32 %v2725, %v2740
    %v2752 = vadd.f32 %v2726, %v2742
    %v2753 = vadd.f32 %v2727, %v2744
    %v2754 = vadd.f32 %v2728, %v2746
    %s2755 = sld [smem:[#allocation4 + $0x3b]]
    %v2756 = vstv %s2755
    %v2757 = vmul.f32 %v2756, %v1989
    %v2758 = vmul.f32 %v2756, %v1990
    %v2759 = vmul.f32 %v2756, %v1991
    %v2760 = vmul.f32 %v2756, %v1992
    %v2761 = vmul.f32 %v2756, %v1993
    %v2762 = vmul.f32 %v2756, %v1994
    %v2769 = vrot.slane %v2757, 1
    %v2770 = vrot.slane %v2758, 1
    %v2771 = vsel %vm209, %v2769, %v2770
    %v2772 = vrot.slane %v2759, 1
    %v2773 = vsel %vm209, %v2770, %v2772
    %v2774 = vrot.slane %v2760, 1
    %v2775 = vrot.slane %v2761, 1
    %v2776 = vsel %vm209, %v2774, %v2775
    %v2777 = vrot.slane %v2762, 1
    %v2778 = vsel %vm209, %v2775, %v2777
    %2779 = vrot.lane.b32.xlu0 %v2771, 125
    %v2780 = vpop.permute.xlu0 %2779
    %2781 = vrot.lane.b32.xlu0 %v2773, 125
    %v2782 = vpop.permute.xlu0 %2781
    %2783 = vrot.lane.b32.xlu0 %v2776, 125
    %v2784 = vpop.permute.xlu0 %2783
    %2785 = vrot.lane.b32.xlu0 %v2778, 125
    %v2786 = vpop.permute.xlu0 %2785
    %v2791 = vadd.f32 %v2751, %v2780
    %v2792 = vadd.f32 %v2752, %v2782
    %v2793 = vadd.f32 %v2753, %v2784
    %v2794 = vadd.f32 %v2754, %v2786
    %s2795 = sld [smem:[#allocation4 + $0x42]]
    %v2796 = vstv %s2795
    %v2797 = vmul.f32 %v2796, %v1989
    %v2798 = vmul.f32 %v2796, %v1990
    %v2799 = vmul.f32 %v2796, %v1991
    %v2800 = vmul.f32 %v2796, %v1992
    %v2801 = vmul.f32 %v2796, %v1993
    %v2802 = vmul.f32 %v2796, %v1994
    %v2809 = vrot.slane %v2797, 2
    %v2810 = vrot.slane %v2798, 2
    %v2811 = vsel %vm242, %v2809, %v2810
    %v2812 = vrot.slane %v2799, 2
    %v2813 = vsel %vm242, %v2810, %v2812
    %v2814 = vrot.slane %v2800, 2
    %v2815 = vrot.slane %v2801, 2
    %v2816 = vsel %vm242, %v2814, %v2815
    %v2817 = vrot.slane %v2802, 2
    %v2818 = vsel %vm242, %v2815, %v2817
    %2819 = vrot.lane.b32.xlu0 %v2811, 125
    %v2820 = vpop.permute.xlu0 %2819
    %2821 = vrot.lane.b32.xlu0 %v2813, 125
    %v2822 = vpop.permute.xlu0 %2821
    %2823 = vrot.lane.b32.xlu0 %v2816, 125
    %v2824 = vpop.permute.xlu0 %2823
    %2825 = vrot.lane.b32.xlu0 %v2818, 125
    %v2826 = vpop.permute.xlu0 %2825
    %v2831 = vadd.f32 %v2791, %v2820
    %v2832 = vadd.f32 %v2792, %v2822
    %v2833 = vadd.f32 %v2793, %v2824
    %v2834 = vadd.f32 %v2794, %v2826
    %s2835 = sld [smem:[#allocation4 + $0x49]]
    %v2836 = vstv %s2835
    %v2837 = vmul.f32 %v2836, %v1989
    %v2838 = vmul.f32 %v2836, %v1990
    %v2839 = vmul.f32 %v2836, %v1991
    %v2840 = vmul.f32 %v2836, %v1992
    %v2841 = vmul.f32 %v2836, %v1993
    %v2842 = vmul.f32 %v2836, %v1994
    %v2849 = vrot.slane %v2837, 3
    %v2850 = vrot.slane %v2838, 3
    %v2851 = vsel %vm275, %v2849, %v2850
    %v2852 = vrot.slane %v2839, 3
    %v2853 = vsel %vm275, %v2850, %v2852
    %v2854 = vrot.slane %v2840, 3
    %v2855 = vrot.slane %v2841, 3
    %v2856 = vsel %vm275, %v2854, %v2855
    %v2857 = vrot.slane %v2842, 3
    %v2858 = vsel %vm275, %v2855, %v2857
    %2859 = vrot.lane.b32.xlu0 %v2851, 125
    %v2860 = vpop.permute.xlu0 %2859
    %2861 = vrot.lane.b32.xlu0 %v2853, 125
    %v2862 = vpop.permute.xlu0 %2861
    %2863 = vrot.lane.b32.xlu0 %v2856, 125
    %v2864 = vpop.permute.xlu0 %2863
    %2865 = vrot.lane.b32.xlu0 %v2858, 125
    %v2866 = vpop.permute.xlu0 %2865
    %v2871 = vadd.f32 %v2831, %v2860
    %v2872 = vadd.f32 %v2832, %v2862
    %v2873 = vadd.f32 %v2833, %v2864
    %v2874 = vadd.f32 %v2834, %v2866
    %s2875 = sld [smem:[#allocation4 + $0x50]]
    %v2876 = vstv %s2875
    %v2877 = vmul.f32 %v2876, %v1989
    %v2878 = vmul.f32 %v2876, %v1990
    %v2879 = vmul.f32 %v2876, %v1991
    %v2880 = vmul.f32 %v2876, %v1992
    %v2881 = vmul.f32 %v2876, %v1993
    %v2882 = vmul.f32 %v2876, %v1994
    %v2889 = vrot.slane %v2877, 4
    %v2890 = vrot.slane %v2878, 4
    %v2891 = vsel %vm308, %v2889, %v2890
    %v2892 = vrot.slane %v2879, 4
    %v2893 = vsel %vm308, %v2890, %v2892
    %v2894 = vrot.slane %v2880, 4
    %v2895 = vrot.slane %v2881, 4
    %v2896 = vsel %vm308, %v2894, %v2895
    %v2897 = vrot.slane %v2882, 4
    %v2898 = vsel %vm308, %v2895, %v2897
    %2899 = vrot.lane.b32.xlu0 %v2891, 125
    %v2900 = vpop.permute.xlu0 %2899
    %2901 = vrot.lane.b32.xlu0 %v2893, 125
    %v2902 = vpop.permute.xlu0 %2901
    %2903 = vrot.lane.b32.xlu0 %v2896, 125
    %v2904 = vpop.permute.xlu0 %2903
    %2905 = vrot.lane.b32.xlu0 %v2898, 125
    %v2906 = vpop.permute.xlu0 %2905
    %v2911 = vadd.f32 %v2871, %v2900
    %v2912 = vadd.f32 %v2872, %v2902
    %v2913 = vadd.f32 %v2873, %v2904
    %v2914 = vadd.f32 %v2874, %v2906
    %s2915 = sld [smem:[#allocation4 + $0x57]]
    %v2916 = vstv %s2915
    %v2917 = vmul.f32 %v2916, %v1989
    %v2918 = vmul.f32 %v2916, %v1990
    %v2919 = vmul.f32 %v2916, %v1991
    %v2920 = vmul.f32 %v2916, %v1992
    %v2921 = vmul.f32 %v2916, %v1993
    %v2922 = vmul.f32 %v2916, %v1994
    %v2929 = vrot.slane %v2917, 5
    %v2930 = vrot.slane %v2918, 5
    %v2931 = vsel %vm341, %v2929, %v2930
    %v2932 = vrot.slane %v2919, 5
    %v2933 = vsel %vm341, %v2930, %v2932
    %v2934 = vrot.slane %v2920, 5
    %v2935 = vrot.slane %v2921, 5
    %v2936 = vsel %vm341, %v2934, %v2935
    %v2937 = vrot.slane %v2922, 5
    %v2938 = vsel %vm341, %v2935, %v2937
    %2939 = vrot.lane.b32.xlu0 %v2931, 125
    %v2940 = vpop.permute.xlu0 %2939
    %2941 = vrot.lane.b32.xlu0 %v2933, 125
    %v2942 = vpop.permute.xlu0 %2941
    %2943 = vrot.lane.b32.xlu0 %v2936, 125
    %v2944 = vpop.permute.xlu0 %2943
    %2945 = vrot.lane.b32.xlu0 %v2938, 125
    %v2946 = vpop.permute.xlu0 %2945
    %v2951 = vadd.f32 %v2911, %v2940
    %v2952 = vadd.f32 %v2912, %v2942
    %v2953 = vadd.f32 %v2913, %v2944
    %v2954 = vadd.f32 %v2914, %v2946
    %s2955 = sld [smem:[#allocation4 + $0x5e]]
    %v2956 = vstv %s2955
    %v2957 = vmul.f32 %v2956, %v1989
    %v2958 = vmul.f32 %v2956, %v1990
    %v2959 = vmul.f32 %v2956, %v1991
    %v2960 = vmul.f32 %v2956, %v1992
    %v2961 = vmul.f32 %v2956, %v1993
    %v2962 = vmul.f32 %v2956, %v1994
    %v2969 = vrot.slane %v2957, 6
    %v2970 = vrot.slane %v2958, 6
    %v2971 = vsel %vm374, %v2969, %v2970
    %v2972 = vrot.slane %v2959, 6
    %v2973 = vsel %vm374, %v2970, %v2972
    %v2974 = vrot.slane %v2960, 6
    %v2975 = vrot.slane %v2961, 6
    %v2976 = vsel %vm374, %v2974, %v2975
    %v2977 = vrot.slane %v2962, 6
    %v2978 = vsel %vm374, %v2975, %v2977
    %2979 = vrot.lane.b32.xlu0 %v2971, 125
    %v2980 = vpop.permute.xlu0 %2979
    %2981 = vrot.lane.b32.xlu0 %v2973, 125
    %v2982 = vpop.permute.xlu0 %2981
    %2983 = vrot.lane.b32.xlu0 %v2976, 125
    %v2984 = vpop.permute.xlu0 %2983
    %2985 = vrot.lane.b32.xlu0 %v2978, 125
    %v2986 = vpop.permute.xlu0 %2985
    %v2991 = vadd.f32 %v2951, %v2980
    %v2992 = vadd.f32 %v2952, %v2982
    %v2993 = vadd.f32 %v2953, %v2984
    %v2994 = vadd.f32 %v2954, %v2986
    %s2995 = sld [smem:[#allocation4 + $0x35]]
    %v2996 = vstv %s2995
    %v2997 = vmul.f32 %v2996, %v1989
    %v2998 = vmul.f32 %v2996, %v1990
    %v2999 = vmul.f32 %v2996, %v1992
    %v3000 = vmul.f32 %v2996, %v1993
    %3005 = vrot.lane.b32.xlu0 %v2997, 124
    %v3006 = vpop.permute.xlu0 %3005
    %3007 = vrot.lane.b32.xlu0 %v2998, 124
    %v3008 = vpop.permute.xlu0 %3007
    %3009 = vrot.lane.b32.xlu0 %v2999, 124
    %v3010 = vpop.permute.xlu0 %3009
    %3011 = vrot.lane.b32.xlu0 %v3000, 124
    %v3012 = vpop.permute.xlu0 %3011
    %v3017 = vadd.f32 %v2991, %v3006
    %v3018 = vadd.f32 %v2992, %v3008
    %v3019 = vadd.f32 %v2993, %v3010
    %v3020 = vadd.f32 %v2994, %v3012
    %s3021 = sld [smem:[#allocation4 + $0x3c]]
    %v3022 = vstv %s3021
    %v3023 = vmul.f32 %v3022, %v1989
    %v3024 = vmul.f32 %v3022, %v1990
    %v3025 = vmul.f32 %v3022, %v1991
    %v3026 = vmul.f32 %v3022, %v1992
    %v3027 = vmul.f32 %v3022, %v1993
    %v3028 = vmul.f32 %v3022, %v1994
    %v3035 = vrot.slane %v3023, 1
    %v3036 = vrot.slane %v3024, 1
    %v3037 = vsel %vm209, %v3035, %v3036
    %v3038 = vrot.slane %v3025, 1
    %v3039 = vsel %vm209, %v3036, %v3038
    %v3040 = vrot.slane %v3026, 1
    %v3041 = vrot.slane %v3027, 1
    %v3042 = vsel %vm209, %v3040, %v3041
    %v3043 = vrot.slane %v3028, 1
    %v3044 = vsel %vm209, %v3041, %v3043
    %3045 = vrot.lane.b32.xlu0 %v3037, 124
    %v3046 = vpop.permute.xlu0 %3045
    %3047 = vrot.lane.b32.xlu0 %v3039, 124
    %v3048 = vpop.permute.xlu0 %3047
    %3049 = vrot.lane.b32.xlu0 %v3042, 124
    %v3050 = vpop.permute.xlu0 %3049
    %3051 = vrot.lane.b32.xlu0 %v3044, 124
    %v3052 = vpop.permute.xlu0 %3051
    %v3057 = vadd.f32 %v3017, %v3046
    %v3058 = vadd.f32 %v3018, %v3048
    %v3059 = vadd.f32 %v3019, %v3050
    %v3060 = vadd.f32 %v3020, %v3052
    %s3061 = sld [smem:[#allocation4 + $0x43]]
    %v3062 = vstv %s3061
    %v3063 = vmul.f32 %v3062, %v1989
    %v3064 = vmul.f32 %v3062, %v1990
    %v3065 = vmul.f32 %v3062, %v1991
    %v3066 = vmul.f32 %v3062, %v1992
    %v3067 = vmul.f32 %v3062, %v1993
    %v3068 = vmul.f32 %v3062, %v1994
    %v3075 = vrot.slane %v3063, 2
    %v3076 = vrot.slane %v3064, 2
    %v3077 = vsel %vm242, %v3075, %v3076
    %v3078 = vrot.slane %v3065, 2
    %v3079 = vsel %vm242, %v3076, %v3078
    %v3080 = vrot.slane %v3066, 2
    %v3081 = vrot.slane %v3067, 2
    %v3082 = vsel %vm242, %v3080, %v3081
    %v3083 = vrot.slane %v3068, 2
    %v3084 = vsel %vm242, %v3081, %v3083
    %3085 = vrot.lane.b32.xlu0 %v3077, 124
    %v3086 = vpop.permute.xlu0 %3085
    %3087 = vrot.lane.b32.xlu0 %v3079, 124
    %v3088 = vpop.permute.xlu0 %3087
    %3089 = vrot.lane.b32.xlu0 %v3082, 124
    %v3090 = vpop.permute.xlu0 %3089
    %3091 = vrot.lane.b32.xlu0 %v3084, 124
    %v3092 = vpop.permute.xlu0 %3091
    %v3097 = vadd.f32 %v3057, %v3086
    %v3098 = vadd.f32 %v3058, %v3088
    %v3099 = vadd.f32 %v3059, %v3090
    %v3100 = vadd.f32 %v3060, %v3092
    %s3101 = sld [smem:[#allocation4 + $0x4a]]
    %v3102 = vstv %s3101
    %v3103 = vmul.f32 %v3102, %v1989
    %v3104 = vmul.f32 %v3102, %v1990
    %v3105 = vmul.f32 %v3102, %v1991
    %v3106 = vmul.f32 %v3102, %v1992
    %v3107 = vmul.f32 %v3102, %v1993
    %v3108 = vmul.f32 %v3102, %v1994
    %v3115 = vrot.slane %v3103, 3
    %v3116 = vrot.slane %v3104, 3
    %v3117 = vsel %vm275, %v3115, %v3116
    %v3118 = vrot.slane %v3105, 3
    %v3119 = vsel %vm275, %v3116, %v3118
    %v3120 = vrot.slane %v3106, 3
    %v3121 = vrot.slane %v3107, 3
    %v3122 = vsel %vm275, %v3120, %v3121
    %v3123 = vrot.slane %v3108, 3
    %v3124 = vsel %vm275, %v3121, %v3123
    %3125 = vrot.lane.b32.xlu0 %v3117, 124
    %v3126 = vpop.permute.xlu0 %3125
    %3127 = vrot.lane.b32.xlu0 %v3119, 124
    %v3128 = vpop.permute.xlu0 %3127
    %3129 = vrot.lane.b32.xlu0 %v3122, 124
    %v3130 = vpop.permute.xlu0 %3129
    %3131 = vrot.lane.b32.xlu0 %v3124, 124
    %v3132 = vpop.permute.xlu0 %3131
    %v3137 = vadd.f32 %v3097, %v3126
    %v3138 = vadd.f32 %v3098, %v3128
    %v3139 = vadd.f32 %v3099, %v3130
    %v3140 = vadd.f32 %v3100, %v3132
    %s3141 = sld [smem:[#allocation4 + $0x51]]
    %v3142 = vstv %s3141
    %v3143 = vmul.f32 %v3142, %v1989
    %v3144 = vmul.f32 %v3142, %v1990
    %v3145 = vmul.f32 %v3142, %v1991
    %v3146 = vmul.f32 %v3142, %v1992
    %v3147 = vmul.f32 %v3142, %v1993
    %v3148 = vmul.f32 %v3142, %v1994
    %v3155 = vrot.slane %v3143, 4
    %v3156 = vrot.slane %v3144, 4
    %v3157 = vsel %vm308, %v3155, %v3156
    %v3158 = vrot.slane %v3145, 4
    %v3159 = vsel %vm308, %v3156, %v3158
    %v3160 = vrot.slane %v3146, 4
    %v3161 = vrot.slane %v3147, 4
    %v3162 = vsel %vm308, %v3160, %v3161
    %v3163 = vrot.slane %v3148, 4
    %v3164 = vsel %vm308, %v3161, %v3163
    %3165 = vrot.lane.b32.xlu0 %v3157, 124
    %v3166 = vpop.permute.xlu0 %3165
    %3167 = vrot.lane.b32.xlu0 %v3159, 124
    %v3168 = vpop.permute.xlu0 %3167
    %3169 = vrot.lane.b32.xlu0 %v3162, 124
    %v3170 = vpop.permute.xlu0 %3169
    %3171 = vrot.lane.b32.xlu0 %v3164, 124
    %v3172 = vpop.permute.xlu0 %3171
    %v3177 = vadd.f32 %v3137, %v3166
    %v3178 = vadd.f32 %v3138, %v3168
    %v3179 = vadd.f32 %v3139, %v3170
    %v3180 = vadd.f32 %v3140, %v3172
    %s3181 = sld [smem:[#allocation4 + $0x58]]
    %v3182 = vstv %s3181
    %v3183 = vmul.f32 %v3182, %v1989
    %v3184 = vmul.f32 %v3182, %v1990
    %v3185 = vmul.f32 %v3182, %v1991
    %v3186 = vmul.f32 %v3182, %v1992
    %v3187 = vmul.f32 %v3182, %v1993
    %v3188 = vmul.f32 %v3182, %v1994
    %v3195 = vrot.slane %v3183, 5
    %v3196 = vrot.slane %v3184, 5
    %v3197 = vsel %vm341, %v3195, %v3196
    %v3198 = vrot.slane %v3185, 5
    %v3199 = vsel %vm341, %v3196, %v3198
    %v3200 = vrot.slane %v3186, 5
    %v3201 = vrot.slane %v3187, 5
    %v3202 = vsel %vm341, %v3200, %v3201
    %v3203 = vrot.slane %v3188, 5
    %v3204 = vsel %vm341, %v3201, %v3203
    %3205 = vrot.lane.b32.xlu0 %v3197, 124
    %v3206 = vpop.permute.xlu0 %3205
    %3207 = vrot.lane.b32.xlu0 %v3199, 124
    %v3208 = vpop.permute.xlu0 %3207
    %3209 = vrot.lane.b32.xlu0 %v3202, 124
    %v3210 = vpop.permute.xlu0 %3209
    %3211 = vrot.lane.b32.xlu0 %v3204, 124
    %v3212 = vpop.permute.xlu0 %3211
    %v3217 = vadd.f32 %v3177, %v3206
    %v3218 = vadd.f32 %v3178, %v3208
    %v3219 = vadd.f32 %v3179, %v3210
    %v3220 = vadd.f32 %v3180, %v3212
    %s3221 = sld [smem:[#allocation4 + $0x5f]]
    %v3222 = vstv %s3221
    %v3223 = vmul.f32 %v3222, %v1989
    %v3224 = vmul.f32 %v3222, %v1990
    %v3225 = vmul.f32 %v3222, %v1991
    %v3226 = vmul.f32 %v3222, %v1992
    %v3227 = vmul.f32 %v3222, %v1993
    %v3228 = vmul.f32 %v3222, %v1994
    %v3235 = vrot.slane %v3223, 6
    %v3236 = vrot.slane %v3224, 6
    %v3237 = vsel %vm374, %v3235, %v3236
    %v3238 = vrot.slane %v3225, 6
    %v3239 = vsel %vm374, %v3236, %v3238
    %v3240 = vrot.slane %v3226, 6
    %v3241 = vrot.slane %v3227, 6
    %v3242 = vsel %vm374, %v3240, %v3241
    %v3243 = vrot.slane %v3228, 6
    %v3244 = vsel %vm374, %v3241, %v3243
    %3245 = vrot.lane.b32.xlu0 %v3237, 124
    %v3246 = vpop.permute.xlu0 %3245
    %3247 = vrot.lane.b32.xlu0 %v3239, 124
    %v3248 = vpop.permute.xlu0 %3247
    %3249 = vrot.lane.b32.xlu0 %v3242, 124
    %v3250 = vpop.permute.xlu0 %3249
    %3251 = vrot.lane.b32.xlu0 %v3244, 124
    %v3252 = vpop.permute.xlu0 %3251
    %v3257 = vadd.f32 %v3217, %v3246
    %v3258 = vadd.f32 %v3218, %v3248
    %v3259 = vadd.f32 %v3219, %v3250
    %v3260 = vadd.f32 %v3220, %v3252
    %s3261 = sld [smem:[#allocation4 + $0x36]]
    %v3262 = vstv %s3261
    %v3263 = vmul.f32 %v3262, %v1989
    %v3264 = vmul.f32 %v3262, %v1990
    %v3265 = vmul.f32 %v3262, %v1992
    %v3266 = vmul.f32 %v3262, %v1993
    %3271 = vrot.lane.b32.xlu0 %v3263, 123
    %v3272 = vpop.permute.xlu0 %3271
    %3273 = vrot.lane.b32.xlu0 %v3264, 123
    %v3274 = vpop.permute.xlu0 %3273
    %3275 = vrot.lane.b32.xlu0 %v3265, 123
    %v3276 = vpop.permute.xlu0 %3275
    %3277 = vrot.lane.b32.xlu0 %v3266, 123
    %v3278 = vpop.permute.xlu0 %3277
    %v3283 = vadd.f32 %v3257, %v3272
    %v3284 = vadd.f32 %v3258, %v3274
    %v3285 = vadd.f32 %v3259, %v3276
    %v3286 = vadd.f32 %v3260, %v3278
    %s3287 = sld [smem:[#allocation4 + $0x3d]]
    %v3288 = vstv %s3287
    %v3289 = vmul.f32 %v3288, %v1989
    %v3290 = vmul.f32 %v3288, %v1990
    %v3291 = vmul.f32 %v3288, %v1991
    %v3292 = vmul.f32 %v3288, %v1992
    %v3293 = vmul.f32 %v3288, %v1993
    %v3294 = vmul.f32 %v3288, %v1994
    %v3301 = vrot.slane %v3289, 1
    %v3302 = vrot.slane %v3290, 1
    %v3303 = vsel %vm209, %v3301, %v3302
    %v3304 = vrot.slane %v3291, 1
    %v3305 = vsel %vm209, %v3302, %v3304
    %v3306 = vrot.slane %v3292, 1
    %v3307 = vrot.slane %v3293, 1
    %v3308 = vsel %vm209, %v3306, %v3307
    %v3309 = vrot.slane %v3294, 1
    %v3310 = vsel %vm209, %v3307, %v3309
    %3311 = vrot.lane.b32.xlu0 %v3303, 123
    %v3312 = vpop.permute.xlu0 %3311
    %3313 = vrot.lane.b32.xlu0 %v3305, 123
    %v3314 = vpop.permute.xlu0 %3313
    %3315 = vrot.lane.b32.xlu0 %v3308, 123
    %v3316 = vpop.permute.xlu0 %3315
    %3317 = vrot.lane.b32.xlu0 %v3310, 123
    %v3318 = vpop.permute.xlu0 %3317
    %v3323 = vadd.f32 %v3283, %v3312
    %v3324 = vadd.f32 %v3284, %v3314
    %v3325 = vadd.f32 %v3285, %v3316
    %v3326 = vadd.f32 %v3286, %v3318
    %s3327 = sld [smem:[#allocation4 + $0x44]]
    %v3328 = vstv %s3327
    %v3329 = vmul.f32 %v3328, %v1989
    %v3330 = vmul.f32 %v3328, %v1990
    %v3331 = vmul.f32 %v3328, %v1991
    %v3332 = vmul.f32 %v3328, %v1992
    %v3333 = vmul.f32 %v3328, %v1993
    %v3334 = vmul.f32 %v3328, %v1994
    %v3341 = vrot.slane %v3329, 2
    %v3342 = vrot.slane %v3330, 2
    %v3343 = vsel %vm242, %v3341, %v3342
    %v3344 = vrot.slane %v3331, 2
    %v3345 = vsel %vm242, %v3342, %v3344
    %v3346 = vrot.slane %v3332, 2
    %v3347 = vrot.slane %v3333, 2
    %v3348 = vsel %vm242, %v3346, %v3347
    %v3349 = vrot.slane %v3334, 2
    %v3350 = vsel %vm242, %v3347, %v3349
    %3351 = vrot.lane.b32.xlu0 %v3343, 123
    %v3352 = vpop.permute.xlu0 %3351
    %3353 = vrot.lane.b32.xlu0 %v3345, 123
    %v3354 = vpop.permute.xlu0 %3353
    %3355 = vrot.lane.b32.xlu0 %v3348, 123
    %v3356 = vpop.permute.xlu0 %3355
    %3357 = vrot.lane.b32.xlu0 %v3350, 123
    %v3358 = vpop.permute.xlu0 %3357
    %v3363 = vadd.f32 %v3323, %v3352
    %v3364 = vadd.f32 %v3324, %v3354
    %v3365 = vadd.f32 %v3325, %v3356
    %v3366 = vadd.f32 %v3326, %v3358
    %s3367 = sld [smem:[#allocation4 + $0x4b]]
    %v3368 = vstv %s3367
    %v3369 = vmul.f32 %v3368, %v1989
    %v3370 = vmul.f32 %v3368, %v1990
    %v3371 = vmul.f32 %v3368, %v1991
    %v3372 = vmul.f32 %v3368, %v1992
    %v3373 = vmul.f32 %v3368, %v1993
    %v3374 = vmul.f32 %v3368, %v1994
    %v3381 = vrot.slane %v3369, 3
    %v3382 = vrot.slane %v3370, 3
    %v3383 = vsel %vm275, %v3381, %v3382
    %v3384 = vrot.slane %v3371, 3
    %v3385 = vsel %vm275, %v3382, %v3384
    %v3386 = vrot.slane %v3372, 3
    %v3387 = vrot.slane %v3373, 3
    %v3388 = vsel %vm275, %v3386, %v3387
    %v3389 = vrot.slane %v3374, 3
    %v3390 = vsel %vm275, %v3387, %v3389
    %3391 = vrot.lane.b32.xlu0 %v3383, 123
    %v3392 = vpop.permute.xlu0 %3391
    %3393 = vrot.lane.b32.xlu0 %v3385, 123
    %v3394 = vpop.permute.xlu0 %3393
    %3395 = vrot.lane.b32.xlu0 %v3388, 123
    %v3396 = vpop.permute.xlu0 %3395
    %3397 = vrot.lane.b32.xlu0 %v3390, 123
    %v3398 = vpop.permute.xlu0 %3397
    %v3403 = vadd.f32 %v3363, %v3392
    %v3404 = vadd.f32 %v3364, %v3394
    %v3405 = vadd.f32 %v3365, %v3396
    %v3406 = vadd.f32 %v3366, %v3398
    %s3407 = sld [smem:[#allocation4 + $0x52]]
    %v3408 = vstv %s3407
    %v3409 = vmul.f32 %v3408, %v1989
    %v3410 = vmul.f32 %v3408, %v1990
    %v3411 = vmul.f32 %v3408, %v1991
    %v3412 = vmul.f32 %v3408, %v1992
    %v3413 = vmul.f32 %v3408, %v1993
    %v3414 = vmul.f32 %v3408, %v1994
    %v3421 = vrot.slane %v3409, 4
    %v3422 = vrot.slane %v3410, 4
    %v3423 = vsel %vm308, %v3421, %v3422
    %v3424 = vrot.slane %v3411, 4
    %v3425 = vsel %vm308, %v3422, %v3424
    %v3426 = vrot.slane %v3412, 4
    %v3427 = vrot.slane %v3413, 4
    %v3428 = vsel %vm308, %v3426, %v3427
    %v3429 = vrot.slane %v3414, 4
    %v3430 = vsel %vm308, %v3427, %v3429
    %3431 = vrot.lane.b32.xlu0 %v3423, 123
    %v3432 = vpop.permute.xlu0 %3431
    %3433 = vrot.lane.b32.xlu0 %v3425, 123
    %v3434 = vpop.permute.xlu0 %3433
    %3435 = vrot.lane.b32.xlu0 %v3428, 123
    %v3436 = vpop.permute.xlu0 %3435
    %3437 = vrot.lane.b32.xlu0 %v3430, 123
    %v3438 = vpop.permute.xlu0 %3437
    %v3443 = vadd.f32 %v3403, %v3432
    %v3444 = vadd.f32 %v3404, %v3434
    %v3445 = vadd.f32 %v3405, %v3436
    %v3446 = vadd.f32 %v3406, %v3438
    %s3447 = sld [smem:[#allocation4 + $0x59]]
    %v3448 = vstv %s3447
    %v3449 = vmul.f32 %v3448, %v1989
    %v3450 = vmul.f32 %v3448, %v1990
    %v3451 = vmul.f32 %v3448, %v1991
    %v3452 = vmul.f32 %v3448, %v1992
    %v3453 = vmul.f32 %v3448, %v1993
    %v3454 = vmul.f32 %v3448, %v1994
    %v3461 = vrot.slane %v3449, 5
    %v3462 = vrot.slane %v3450, 5
    %v3463 = vsel %vm341, %v3461, %v3462
    %v3464 = vrot.slane %v3451, 5
    %v3465 = vsel %vm341, %v3462, %v3464
    %v3466 = vrot.slane %v3452, 5
    %v3467 = vrot.slane %v3453, 5
    %v3468 = vsel %vm341, %v3466, %v3467
    %v3469 = vrot.slane %v3454, 5
    %v3470 = vsel %vm341, %v3467, %v3469
    %3471 = vrot.lane.b32.xlu0 %v3463, 123
    %v3472 = vpop.permute.xlu0 %3471
    %3473 = vrot.lane.b32.xlu0 %v3465, 123
    %v3474 = vpop.permute.xlu0 %3473
    %3475 = vrot.lane.b32.xlu0 %v3468, 123
    %v3476 = vpop.permute.xlu0 %3475
    %3477 = vrot.lane.b32.xlu0 %v3470, 123
    %v3478 = vpop.permute.xlu0 %3477
    %v3483 = vadd.f32 %v3443, %v3472
    %v3484 = vadd.f32 %v3444, %v3474
    %v3485 = vadd.f32 %v3445, %v3476
    %v3486 = vadd.f32 %v3446, %v3478
    %s3487 = sld [smem:[#allocation4 + $0x60]]
    %v3488 = vstv %s3487
    %v3489 = vmul.f32 %v3488, %v1989
    %v3490 = vmul.f32 %v3488, %v1990
    %v3491 = vmul.f32 %v3488, %v1991
    %v3492 = vmul.f32 %v3488, %v1992
    %v3493 = vmul.f32 %v3488, %v1993
    %v3494 = vmul.f32 %v3488, %v1994
    %v3501 = vrot.slane %v3489, 6
    %v3502 = vrot.slane %v3490, 6
    %v3503 = vsel %vm374, %v3501, %v3502
    %v3504 = vrot.slane %v3491, 6
    %v3505 = vsel %vm374, %v3502, %v3504
    %v3506 = vrot.slane %v3492, 6
    %v3507 = vrot.slane %v3493, 6
    %v3508 = vsel %vm374, %v3506, %v3507
    %v3509 = vrot.slane %v3494, 6
    %v3510 = vsel %vm374, %v3507, %v3509
    %3511 = vrot.lane.b32.xlu0 %v3503, 123
    %v3512 = vpop.permute.xlu0 %3511
    %3513 = vrot.lane.b32.xlu0 %v3505, 123
    %v3514 = vpop.permute.xlu0 %3513
    %3515 = vrot.lane.b32.xlu0 %v3508, 123
    %v3516 = vpop.permute.xlu0 %3515
    %3517 = vrot.lane.b32.xlu0 %v3510, 123
    %v3518 = vpop.permute.xlu0 %3517
    %v3523 = vadd.f32 %v3483, %v3512
    %v3524 = vadd.f32 %v3484, %v3514
    %v3525 = vadd.f32 %v3485, %v3516
    %v3526 = vadd.f32 %v3486, %v3518
    %s3527 = sld [smem:[#allocation4 + $0x37]]
    %v3528 = vstv %s3527
    %v3529 = vmul.f32 %v3528, %v1989
    %v3530 = vmul.f32 %v3528, %v1990
    %v3531 = vmul.f32 %v3528, %v1992
    %v3532 = vmul.f32 %v3528, %v1993
    %3537 = vrot.lane.b32.xlu0 %v3529, 122
    %v3538 = vpop.permute.xlu0 %3537
    %3539 = vrot.lane.b32.xlu0 %v3530, 122
    %v3540 = vpop.permute.xlu0 %3539
    %3541 = vrot.lane.b32.xlu0 %v3531, 122
    %v3542 = vpop.permute.xlu0 %3541
    %3543 = vrot.lane.b32.xlu0 %v3532, 122
    %v3544 = vpop.permute.xlu0 %3543
    %v3549 = vadd.f32 %v3523, %v3538
    %v3550 = vadd.f32 %v3524, %v3540
    %v3551 = vadd.f32 %v3525, %v3542
    %v3552 = vadd.f32 %v3526, %v3544
    %s3553 = sld [smem:[#allocation4 + $0x3e]]
    %v3554 = vstv %s3553
    %v3555 = vmul.f32 %v3554, %v1989
    %v3556 = vmul.f32 %v3554, %v1990
    %v3557 = vmul.f32 %v3554, %v1991
    %v3558 = vmul.f32 %v3554, %v1992
    %v3559 = vmul.f32 %v3554, %v1993
    %v3560 = vmul.f32 %v3554, %v1994
    %v3567 = vrot.slane %v3555, 1
    %v3568 = vrot.slane %v3556, 1
    %v3569 = vsel %vm209, %v3567, %v3568
    %v3570 = vrot.slane %v3557, 1
    %v3571 = vsel %vm209, %v3568, %v3570
    %v3572 = vrot.slane %v3558, 1
    %v3573 = vrot.slane %v3559, 1
    %v3574 = vsel %vm209, %v3572, %v3573
    %v3575 = vrot.slane %v3560, 1
    %v3576 = vsel %vm209, %v3573, %v3575
    %3577 = vrot.lane.b32.xlu0 %v3569, 122
    %v3578 = vpop.permute.xlu0 %3577
    %3579 = vrot.lane.b32.xlu0 %v3571, 122
    %v3580 = vpop.permute.xlu0 %3579
    %3581 = vrot.lane.b32.xlu0 %v3574, 122
    %v3582 = vpop.permute.xlu0 %3581
    %3583 = vrot.lane.b32.xlu0 %v3576, 122
    %v3584 = vpop.permute.xlu0 %3583
    %v3589 = vadd.f32 %v3549, %v3578
    %v3590 = vadd.f32 %v3550, %v3580
    %v3591 = vadd.f32 %v3551, %v3582
    %v3592 = vadd.f32 %v3552, %v3584
    %s3593 = sld [smem:[#allocation4 + $0x45]]
    %v3594 = vstv %s3593
    %v3595 = vmul.f32 %v3594, %v1989
    %v3596 = vmul.f32 %v3594, %v1990
    %v3597 = vmul.f32 %v3594, %v1991
    %v3598 = vmul.f32 %v3594, %v1992
    %v3599 = vmul.f32 %v3594, %v1993
    %v3600 = vmul.f32 %v3594, %v1994
    %v3607 = vrot.slane %v3595, 2
    %v3608 = vrot.slane %v3596, 2
    %v3609 = vsel %vm242, %v3607, %v3608
    %v3610 = vrot.slane %v3597, 2
    %v3611 = vsel %vm242, %v3608, %v3610
    %v3612 = vrot.slane %v3598, 2
    %v3613 = vrot.slane %v3599, 2
    %v3614 = vsel %vm242, %v3612, %v3613
    %v3615 = vrot.slane %v3600, 2
    %v3616 = vsel %vm242, %v3613, %v3615
    %3617 = vrot.lane.b32.xlu0 %v3609, 122
    %v3618 = vpop.permute.xlu0 %3617
    %3619 = vrot.lane.b32.xlu0 %v3611, 122
    %v3620 = vpop.permute.xlu0 %3619
    %3621 = vrot.lane.b32.xlu0 %v3614, 122
    %v3622 = vpop.permute.xlu0 %3621
    %3623 = vrot.lane.b32.xlu0 %v3616, 122
    %v3624 = vpop.permute.xlu0 %3623
    %v3629 = vadd.f32 %v3589, %v3618
    %v3630 = vadd.f32 %v3590, %v3620
    %v3631 = vadd.f32 %v3591, %v3622
    %v3632 = vadd.f32 %v3592, %v3624
    %s3633 = sld [smem:[#allocation4 + $0x4c]]
    %v3634 = vstv %s3633
    %v3635 = vmul.f32 %v3634, %v1989
    %v3636 = vmul.f32 %v3634, %v1990
    %v3637 = vmul.f32 %v3634, %v1991
    %v3638 = vmul.f32 %v3634, %v1992
    %v3639 = vmul.f32 %v3634, %v1993
    %v3640 = vmul.f32 %v3634, %v1994
    %v3647 = vrot.slane %v3635, 3
    %v3648 = vrot.slane %v3636, 3
    %v3649 = vsel %vm275, %v3647, %v3648
    %v3650 = vrot.slane %v3637, 3
    %v3651 = vsel %vm275, %v3648, %v3650
    %v3652 = vrot.slane %v3638, 3
    %v3653 = vrot.slane %v3639, 3
    %v3654 = vsel %vm275, %v3652, %v3653
    %v3655 = vrot.slane %v3640, 3
    %v3656 = vsel %vm275, %v3653, %v3655
    %3657 = vrot.lane.b32.xlu0 %v3649, 122
    %v3658 = vpop.permute.xlu0 %3657
    %3659 = vrot.lane.b32.xlu0 %v3651, 122
    %v3660 = vpop.permute.xlu0 %3659
    %3661 = vrot.lane.b32.xlu0 %v3654, 122
    %v3662 = vpop.permute.xlu0 %3661
    %3663 = vrot.lane.b32.xlu0 %v3656, 122
    %v3664 = vpop.permute.xlu0 %3663
    %v3669 = vadd.f32 %v3629, %v3658
    %v3670 = vadd.f32 %v3630, %v3660
    %v3671 = vadd.f32 %v3631, %v3662
    %v3672 = vadd.f32 %v3632, %v3664
    %s3673 = sld [smem:[#allocation4 + $0x53]]
    %v3674 = vstv %s3673
    %v3675 = vmul.f32 %v3674, %v1989
    %v3676 = vmul.f32 %v3674, %v1990
    %v3677 = vmul.f32 %v3674, %v1991
    %v3678 = vmul.f32 %v3674, %v1992
    %v3679 = vmul.f32 %v3674, %v1993
    %v3680 = vmul.f32 %v3674, %v1994
    %v3687 = vrot.slane %v3675, 4
    %v3688 = vrot.slane %v3676, 4
    %v3689 = vsel %vm308, %v3687, %v3688
    %v3690 = vrot.slane %v3677, 4
    %v3691 = vsel %vm308, %v3688, %v3690
    %v3692 = vrot.slane %v3678, 4
    %v3693 = vrot.slane %v3679, 4
    %v3694 = vsel %vm308, %v3692, %v3693
    %v3695 = vrot.slane %v3680, 4
    %v3696 = vsel %vm308, %v3693, %v3695
    %3697 = vrot.lane.b32.xlu0 %v3689, 122
    %v3698 = vpop.permute.xlu0 %3697
    %3699 = vrot.lane.b32.xlu0 %v3691, 122
    %v3700 = vpop.permute.xlu0 %3699
    %3701 = vrot.lane.b32.xlu0 %v3694, 122
    %v3702 = vpop.permute.xlu0 %3701
    %3703 = vrot.lane.b32.xlu0 %v3696, 122
    %v3704 = vpop.permute.xlu0 %3703
    %v3709 = vadd.f32 %v3669, %v3698
    %v3710 = vadd.f32 %v3670, %v3700
    %v3711 = vadd.f32 %v3671, %v3702
    %v3712 = vadd.f32 %v3672, %v3704
    %s3713 = sld [smem:[#allocation4 + $0x5a]]
    %v3714 = vstv %s3713
    %v3715 = vmul.f32 %v3714, %v1989
    %v3716 = vmul.f32 %v3714, %v1990
    %v3717 = vmul.f32 %v3714, %v1991
    %v3718 = vmul.f32 %v3714, %v1992
    %v3719 = vmul.f32 %v3714, %v1993
    %v3720 = vmul.f32 %v3714, %v1994
    %v3727 = vrot.slane %v3715, 5
    %v3728 = vrot.slane %v3716, 5
    %v3729 = vsel %vm341, %v3727, %v3728
    %v3730 = vrot.slane %v3717, 5
    %v3731 = vsel %vm341, %v3728, %v3730
    %v3732 = vrot.slane %v3718, 5
    %v3733 = vrot.slane %v3719, 5
    %v3734 = vsel %vm341, %v3732, %v3733
    %v3735 = vrot.slane %v3720, 5
    %v3736 = vsel %vm341, %v3733, %v3735
    %3737 = vrot.lane.b32.xlu0 %v3729, 122
    %v3738 = vpop.permute.xlu0 %3737
    %3739 = vrot.lane.b32.xlu0 %v3731, 122
    %v3740 = vpop.permute.xlu0 %3739
    %3741 = vrot.lane.b32.xlu0 %v3734, 122
    %v3742 = vpop.permute.xlu0 %3741
    %3743 = vrot.lane.b32.xlu0 %v3736, 122
    %v3744 = vpop.permute.xlu0 %3743
    %v3749 = vadd.f32 %v3709, %v3738
    %v3750 = vadd.f32 %v3710, %v3740
    %v3751 = vadd.f32 %v3711, %v3742
    %v3752 = vadd.f32 %v3712, %v3744
    %s3753 = sld [smem:[#allocation4 + $0x61]]
    %v3754 = vstv %s3753
    %v3755 = vmul.f32 %v3754, %v1989
    %v3756 = vmul.f32 %v3754, %v1990
    %v3757 = vmul.f32 %v3754, %v1991
    %v3758 = vmul.f32 %v3754, %v1992
    %v3759 = vmul.f32 %v3754, %v1993
    %v3760 = vmul.f32 %v3754, %v1994
    %v3767 = vrot.slane %v3755, 6
    %v3768 = vrot.slane %v3756, 6
    %v3769 = vsel %vm374, %v3767, %v3768
    %v3770 = vrot.slane %v3757, 6
    %v3771 = vsel %vm374, %v3768, %v3770
    %v3772 = vrot.slane %v3758, 6
    %v3773 = vrot.slane %v3759, 6
    %v3774 = vsel %vm374, %v3772, %v3773
    %v3775 = vrot.slane %v3760, 6
    %v3776 = vsel %vm374, %v3773, %v3775
    %3777 = vrot.lane.b32.xlu0 %v3769, 122
    %v3778 = vpop.permute.xlu0 %3777
    %3779 = vrot.lane.b32.xlu0 %v3771, 122
    %v3780 = vpop.permute.xlu0 %3779
    %3781 = vrot.lane.b32.xlu0 %v3774, 122
    %v3782 = vpop.permute.xlu0 %3781
    %3783 = vrot.lane.b32.xlu0 %v3776, 122
    %v3784 = vpop.permute.xlu0 %3783
    %v3789 = vadd.f32 %v3749, %v3778
    %v3790 = vadd.f32 %v3750, %v3780
    %v3791 = vadd.f32 %v3751, %v3782
    %v3792 = vadd.f32 %v3752, %v3784
    %v3793 = vxor.u32 %v3789, 2147483648
    %v3794 = vxor.u32 %v3790, 2147483648
    %v3795 = vxor.u32 %v3791, 2147483648
    %v3796 = vxor.u32 %v3792, 2147483648
    %v3797 = vmul.f32 %v3793, 1.442695
    %v3798 = vpow.pop %v3797
    %v3799 = vmul.f32 %v3794, 1.442695
    %v3800 = vpow.pop %v3799
    %v3801 = vmul.f32 %v3795, 1.442695
    %v3802 = vpow.pop %v3801
    %v3803 = vmul.f32 %v3796, 1.442695
    %v3804 = vpow.pop %v3803
    %v3805 = vadd.f32 %v3798, 1.0
    %v3806 = vadd.f32 %v3800, 1.0
    %v3807 = vadd.f32 %v3802, 1.0
    %v3808 = vadd.f32 %v3804, 1.0
    %v3809 = vrcp.pop %v3805
    %v3810 = vmul.f32 1.0, %v3809
    %v3811 = vrcp.pop %v3806
    %v3812 = vmul.f32 1.0, %v3811
    %v3813 = vrcp.pop %v3807
    %v3814 = vmul.f32 1.0, %v3813
    %v3815 = vrcp.pop %v3808
    %v3816 = vmul.f32 1.0, %v3815
    %3817 = vst.msk [vmem:[#allocation9] sm:$0xff] %vm59, %v3810
    %3818 = vst.msk [vmem:[#allocation9 + $0x8] sm:$0xff] %vm59, %v3812
    %3819 = vst.msk [vmem:[#allocation9 + $0x10] sm:$0xff] %vm59, %v3814
    %3820 = vst.msk [vmem:[#allocation9 + $0x18] sm:$0xff] %vm59, %v3816
    // Predicated region
    $region22: #{tpu_custom_call.1} parent=1 // pred_check
      _
    $region23: #{tpu_custom_call.1} parent=1 // pred_check_branch
      %3822 = sbr.rel (0) target = $region25
    $region24: #{tpu_custom_call.1} parent=1 // pred_region
      %s3824 = ssub.s32 512, 512
      %3825 = vsyncadd [#allocation6], %s3824
      %s3826 = sshll.u32 [#allocation9], 4
      %s3827 = int_to_ptr.vmem [resolvable:$true] %s3826
      %3832 = dma.vmem_to_hbm [thread:$0]  %s3827, 512, %s3, [#allocation6], 128, 128, 8
    $region25: #{tpu_custom_call.1} parent=1 // pred_fallthru
      _
    // Predicated region
    $region26: #{tpu_custom_call.1} parent=1 // pred_check
      _
    $region27: #{tpu_custom_call.1} parent=1 // pred_check_branch
      %3834 = sbr.rel (0) target = $region29
    $region28: #{tpu_custom_call.1} parent=1 // pred_region
      %3835 = dma.done [#allocation6], 512
    $region29: #{tpu_custom_call.1} parent=1 // pred_fallthru
      _
    %3836 = vsyncpa [#allocation5], 1
    %3837 = vsyncpa [#allocation6], 1
    %3838 = vsyncpa [#allocation7], 1

</llo_original>
